<compile_context>
chip_gen: v6e
topology: v6e:2x2x1
jax: 0.10.0
libtpu: 0.0.40
codegen_flags: <defaults>
</compile_context>

<pallas_src>
import functools
import inspect

import jax
import jax.numpy as jnp
from jax.experimental import pallas as pl
from jax.experimental.pallas import tpu as pltpu


def _round_up(x, m):
    return (x + m - 1) // m * m


def _cdiv(a, b):
    return -(-a // b)


# Static capability check for BlockSpec(pipeline_mode=...). No runtime
# try/except around the pallas_call itself.
try:
    _HAS_PIPELINE_MODE = hasattr(pl, "Buffered") and (
        "pipeline_mode" in inspect.signature(pl.BlockSpec).parameters)
except (TypeError, ValueError):  # signature introspection failed
    _HAS_PIPELINE_MODE = False


def mlp_resnet_block_kernel(x_ref, g_ref, beta_ref, w1_ref, b1_ref,
                            w2_ref, b2_ref, o_ref, *, eps):
    """One row-tile of the MLP ResNet block; weights resident in VMEM."""
    x = x_ref[...].astype(jnp.float32)            # (TM, F)

    # --- LayerNorm over the feature (lane) axis, one-pass statistics ---
    mean = jnp.mean(x, axis=-1, keepdims=True)
    mean_sq = jnp.mean(x * x, axis=-1, keepdims=True)
    var = mean_sq - mean * mean                   # biased variance (PyTorch LN)
    xn = (x - mean) * jax.lax.rsqrt(var + eps)
    xn = xn * g_ref[...] + beta_ref[...]          # (1,F) broadcasts over rows

    # --- dense1: MXU (bf16 operands by default), f32 accumulation ---
    h = jnp.dot(xn.astype(w1_ref.dtype), w1_ref[...],
                preferred_element_type=jnp.float32)
    h = h + b1_ref[...]

    # --- activation: SiLU (swish) in f32, cast for dense2 fused into the same
    #     elementwise pass over the largest intermediate ---
    h = (h * jax.nn.sigmoid(h)).astype(w2_ref.dtype)

    # --- dense2: MXU, f32 accumulation ---
    y = jnp.dot(h, w2_ref[...], preferred_element_type=jnp.float32)
    y = y + b2_ref[...]

    # --- residual add: re-read the input tile (cheap vld) instead of keeping an
    #     f32 copy live across both matmuls ---
    o_ref[...] = (x_ref[...].astype(jnp.float32) + y).astype(o_ref.dtype)


def _const_spec(shape, single_buffer):
    """BlockSpec for an operand whose block index is constant across the grid.

    When `single_buffer` is True (large resident weights + supported JAX),
    request 1-deep buffering so the pipeline does not pointlessly double-buffer
    never-changing weights (matters on v7x's 64 MiB VMEM at large F).
    """
    idx = lambda i: (0,) * len(shape)
    if single_buffer:
        return pl.BlockSpec(shape, idx, pipeline_mode=pl.Buffered(1))
    return pl.BlockSpec(shape, idx)


def _choose_tile_m(N):
    """Pick a row tile: multiple of 8, <= 512 rows, even step count >= 2, and
    dividing N exactly when possible (avoids a host-side pad copy). An even
    step count keeps both v7x TensorCores busy under dimension_semantics
    ("parallel",); on v5e/v6e only the (small) step count matters."""
    if N <= 8:
        return max(N, 1)                      # single full-extent block
    for steps in (2, 4, 8, 16, 32, 64, 128, 256, 512):
        if N % steps == 0 and (N // steps) % 8 == 0 and (N // steps) <= 512:
            return N // steps
    # Ragged N: fixed tile, last block padded on the host.
    # TODO(synk): a masked last tile would avoid the pad copy for ragged N.
    return min(512, _round_up(_cdiv(N, 2), 8))


def mlp_resnet_block(x, gamma, beta, w1, b1, w2, b2, *, eps=1e-6, tile_m=None,
                     matmul_dtype=jnp.bfloat16, donate_x=False):
    """x: (N, F); w1: (F, 4F); w2: (4F, F); gamma/beta/b1/b2 are 1-D.

    Output dtype == x.dtype (pass bf16 activations to halve HBM traffic).
    matmul_dtype=jnp.float32 gives an f32-parity path vs PyTorch nn.Linear.
    """
    N, F = x.shape
    Fw, H = w1.shape
    assert Fw == F and w2.shape == (H, F)
    assert F % 128 == 0, "features must be lane-dense (multiple of 128)"
    # TODO(synk): for F not a multiple of 128 a padded-feature variant (with
    # LayerNorm stats over the true F) would be needed to avoid masked stores.

    if tile_m is None:
        tile_m = _choose_tile_m(N)
    else:
        tile_m = max(8, _round_up(min(tile_m, _round_up(N, 8)), 8))

    N_pad = _round_up(N, tile_m)
    x_in = x if N_pad == N else jnp.pad(x, ((0, N_pad - N), (0, 0)))
    grid = (N_pad // tile_m,)

    # Parameters: f32 for the VPU path (LN scale/shift, biases); weights in
    # matmul_dtype (bf16 default: halves weight DMA bytes and VMEM residency).
    gamma2 = gamma.reshape(1, F).astype(jnp.float32)
    beta2 = beta.reshape(1, F).astype(jnp.float32)
    b1_2 = b1.reshape(1, H).astype(jnp.float32)
    b2_2 = b2.reshape(1, F).astype(jnp.float32)
    w1m = w1.astype(matmul_dtype)
    w2m = w2.astype(matmul_dtype)

    kernel = functools.partial(mlp_resnet_block_kernel, eps=eps)

    act_bytes = jnp.dtype(x.dtype).itemsize
    wbytes = jnp.dtype(matmul_dtype).itemsize
    weight_bytes = 2 * F * H * wbytes

    # Single-buffer resident weights only when they are actually big (the v7x
    # 64 MiB VMEM cliff, e.g. F>=1536); at small F it buys nothing.
    single_buffer = _HAS_PIPELINE_MODE and weight_bytes > (4 << 20)
    w_bufs = 1 if single_buffer else 2

    # VMEM footprint: double-buffered activation tiles, weight buffers, small
    # params, f32 working set (normalized tile + hidden activation).
    vmem_bytes = (
        2 * 2 * tile_m * F * act_bytes      # x / out tiles, double-buffered
        + w_bufs * weight_bytes             # w1, w2
        + 2 * (3 * F + H) * 4               # gamma, beta, b1, b2
        + tile_m * (H + F) * 4              # f32 working set
    )
    vmem_limit = int(min(vmem_bytes + (8 << 20), 64 << 20))

    cost = pl.CostEstimate(
        flops=4 * N_pad * F * H,                       # two matmuls
        transcendentals=N_pad * H,                     # sigmoid in SiLU
        bytes_accessed=(2 * N_pad * F * act_bytes      # x read + out write
                        + weight_bytes + (3 * F + H) * 4),
    )

    call_kwargs = {}
    if donate_x:
        # Safe: each grid step reads its x tile before the same tile is written.
        call_kwargs["input_output_aliases"] = {0: 0}

    out = pl.pallas_call(
        kernel,
        out_shape=jax.ShapeDtypeStruct((N_pad, F), x.dtype),
        grid_spec=pltpu.PrefetchScalarGridSpec(
            num_scalar_prefetch=0,
            grid=grid,
            in_specs=[
                pl.BlockSpec((tile_m, F), lambda i: (i, 0)),     # x row tile
                _const_spec((1, F), single_buffer),              # gamma
                _const_spec((1, F), single_buffer),              # beta
                _const_spec((F, H), single_buffer),              # w1
                _const_spec((1, H), single_buffer),              # b1
                _const_spec((H, F), single_buffer),              # w2
                _const_spec((1, F), single_buffer),              # b2
            ],
            out_specs=pl.BlockSpec((tile_m, F), lambda i: (i, 0)),
        ),
        compiler_params=pltpu.CompilerParams(
            dimension_semantics=("parallel",),
            vmem_limit_bytes=vmem_limit,
        ),
        cost_estimate=cost,
        **call_kwargs,
    )(x_in, gamma2, beta2, w1m, b1_2, w2m, b2_2)

    return out if N_pad == N else out[:N]


def reference_jax(x, gamma, beta, w1, b1, w2, b2, eps=1e-6,
                  matmul_dtype=jnp.float32):
    """Pure-JAX reference mirroring the kernel numerics (f32 LN/SiLU/residual,
    matmuls in matmul_dtype with f32 accumulation)."""
    xf = x.astype(jnp.float32)
    mean = jnp.mean(xf, axis=-1, keepdims=True)
    var = jnp.mean((xf - mean) ** 2, axis=-1, keepdims=True)
    xn = (xf - mean) * jax.lax.rsqrt(var + eps) * gamma + beta
    h = jnp.dot(xn.astype(matmul_dtype), w1.astype(matmul_dtype),
                preferred_element_type=jnp.float32) + b1
    h = h * jax.nn.sigmoid(h)
    y = jnp.dot(h.astype(matmul_dtype), w2.astype(matmul_dtype),
                preferred_element_type=jnp.float32) + b2
    return (xf + y).astype(x.dtype)


if __name__ == "__main__":
    # MLPResNetBlock(features=128, activation=SiLU, use_layer_norm=True),
    # hidden = 4*features = 512. N = batch*tokens = 1024 rows: default tiling
    # picks tile_m=512 -> 2 grid steps (even count for v7x's 2 TensorCores,
    # >=2 steps so DMA of step i+1 overlaps compute of step i).
    features = 128
    hidden = 4 * features
    N = 1024

    key = jax.random.PRNGKey(0)
    kx, kg, kb, kw1, kb1, kw2, kb2 = jax.random.split(key, 7)

    x_f32 = jax.random.normal(kx, (N, features), dtype=jnp.float32)

    # Deterministic synthetic parameters (same shapes as the PyTorch module;
    # nn.Linear weights would be transposed to (in, out) like these).
    gamma = 1.0 + 0.01 * jax.random.normal(kg, (features,), dtype=jnp.float32)
    beta = 0.01 * jax.random.normal(kb, (features,), dtype=jnp.float32)
    w1 = jax.random.normal(kw1, (features, hidden), dtype=jnp.float32) / jnp.sqrt(features)
    b1 = 0.01 * jax.random.normal(kb1, (hidden,), dtype=jnp.float32)
    w2 = jax.random.normal(kw2, (hidden, features), dtype=jnp.float32) / jnp.sqrt(hidden)
    b2 = 0.01 * jax.random.normal(kb2, (features,), dtype=jnp.float32)

    # --- Fast path: bf16 activation I/O + bf16 MXU weights, f32 accumulation ---
    x_bf16 = x_f32.astype(jnp.bfloat16)
    out_fast = mlp_resnet_block(x_bf16, gamma, beta, w1, b1, w2, b2,
                                matmul_dtype=jnp.bfloat16)
    out_fast = jax.block_until_ready(out_fast)
    assert out_fast.shape == (N, features) and out_fast.dtype == jnp.bfloat16
    ref_fast = reference_jax(x_bf16, gamma, beta, w1, b1, w2, b2,
                             matmul_dtype=jnp.bfloat16)
    err_fast = float(jnp.max(jnp.abs(out_fast.astype(jnp.float32)
                                     - ref_fast.astype(jnp.float32))))
    assert jnp.allclose(out_fast.astype(jnp.float32), ref_fast.astype(jnp.float32),
                        rtol=2e-2, atol=2e-2), f"bf16-path mismatch: {err_fast}"

    # --- f32 parity path (matches PyTorch's f32 nn.Linear numerics) ---
    out_f32 = mlp_resnet_block(x_f32, gamma, beta, w1, b1, w2, b2,
                               matmul_dtype=jnp.float32)
    out_f32 = jax.block_until_ready(out_f32)
    ref_f32 = reference_jax(x_f32, gamma, beta, w1, b1, w2, b2,
                            matmul_dtype=jnp.float32)
    err_f32 = float(jnp.max(jnp.abs(out_f32 - ref_f32)))
    assert jnp.allclose(out_f32, ref_f32, rtol=1e-2, atol=1e-2), \
        f"f32-path mismatch: {err_f32}"

    print("KERNEL_OK")
</pallas_src>

<mosaic_0001>
module attributes {stable_mosaic.version = 11 : i64} {
  func.func @mlp_resnet_block_kernel(%arg0: i32, %arg1: memref<512x128xbf16, #tpu.memory_space<vmem>>, %arg2: memref<1x128xf32, #tpu.memory_space<vmem>>, %arg3: memref<1x128xf32, #tpu.memory_space<vmem>>, %arg4: memref<128x512xbf16, #tpu.memory_space<vmem>>, %arg5: memref<1x512xf32, #tpu.memory_space<vmem>>, %arg6: memref<512x128xbf16, #tpu.memory_space<vmem>>, %arg7: memref<1x128xf32, #tpu.memory_space<vmem>>, %arg8: memref<512x128xbf16, #tpu.memory_space<vmem>>) attributes {dimension_semantics = [#tpu.dimension_semantics<parallel>], iteration_bounds = array<i64: 2>, scalar_prefetch = 0 : i64, scratch_operands = 0 : i64, tpu.core_type = #tpu.core_type<tc>, window_params = [{transform_indices = @transform_0, window_bounds = array<i64: 512, 128>}, {pipeline_mode = #tpu.pipeline_mode<synchronous>, transform_indices = @transform_1, window_bounds = array<i64: 1, 128>}, {pipeline_mode = #tpu.pipeline_mode<synchronous>, transform_indices = @transform_2, window_bounds = array<i64: 1, 128>}, {pipeline_mode = #tpu.pipeline_mode<synchronous>, transform_indices = @transform_3, window_bounds = array<i64: 128, 512>}, {pipeline_mode = #tpu.pipeline_mode<synchronous>, transform_indices = @transform_4, window_bounds = array<i64: 1, 512>}, {pipeline_mode = #tpu.pipeline_mode<synchronous>, transform_indices = @transform_5, window_bounds = array<i64: 512, 128>}, {pipeline_mode = #tpu.pipeline_mode<synchronous>, transform_indices = @transform_6, window_bounds = array<i64: 1, 128>}, {transform_indices = @transform_7, window_bounds = array<i64: 512, 128>}]} {
    %c0 = arith.constant 0 : index
    %c0_0 = arith.constant 0 : index
    %0 = vector.load %arg1[%c0, %c0_0] : memref<512x128xbf16, #tpu.memory_space<vmem>>, vector<512x128xbf16>
    %1 = arith.extf %0 : vector<512x128xbf16> to vector<512x128xf32>
    %cst = arith.constant dense<0.000000e+00> : vector<512xf32>
    %2 = vector.multi_reduction <add>, %1, %cst [1] : vector<512x128xf32> to vector<512xf32>
    %3 = vector.shape_cast %2 : vector<512xf32> to vector<512x1xf32>
    %cst_1 = arith.constant 1.280000e+02 : f32
    %4 = vector.broadcast %cst_1 : f32 to vector<512x1xf32>
    %5 = arith.divf %3, %4 : vector<512x1xf32>
    %6 = arith.mulf %1, %1 : vector<512x128xf32>
    %cst_2 = arith.constant dense<0.000000e+00> : vector<512xf32>
    %7 = vector.multi_reduction <add>, %6, %cst_2 [1] : vector<512x128xf32> to vector<512xf32>
    %8 = vector.shape_cast %7 : vector<512xf32> to vector<512x1xf32>
    %cst_3 = arith.constant 1.280000e+02 : f32
    %9 = vector.broadcast %cst_3 : f32 to vector<512x1xf32>
    %10 = arith.divf %8, %9 : vector<512x1xf32>
    %11 = arith.mulf %5, %5 : vector<512x1xf32>
    %12 = arith.subf %10, %11 : vector<512x1xf32>
    %13 = vector.broadcast %5 : vector<512x1xf32> to vector<512x128xf32>
    %14 = arith.subf %1, %13 : vector<512x128xf32>
    %cst_4 = arith.constant 9.99999997E-7 : f32
    %15 = vector.broadcast %cst_4 : f32 to vector<512x1xf32>
    %16 = arith.addf %12, %15 : vector<512x1xf32>
    %17 = math.rsqrt %16 : vector<512x1xf32>
    %18 = vector.broadcast %17 : vector<512x1xf32> to vector<512x128xf32>
    %19 = arith.mulf %14, %18 : vector<512x128xf32>
    %c0_5 = arith.constant 0 : index
    %c0_6 = arith.constant 0 : index
    %20 = vector.load %arg2[%c0_5, %c0_6] : memref<1x128xf32, #tpu.memory_space<vmem>>, vector<1x128xf32>
    %21 = vector.broadcast %20 : vector<1x128xf32> to vector<512x128xf32>
    %22 = arith.mulf %19, %21 : vector<512x128xf32>
    %c0_7 = arith.constant 0 : index
    %c0_8 = arith.constant 0 : index
    %23 = vector.load %arg3[%c0_7, %c0_8] : memref<1x128xf32, #tpu.memory_space<vmem>>, vector<1x128xf32>
    %24 = vector.broadcast %23 : vector<1x128xf32> to vector<512x128xf32>
    %25 = arith.addf %22, %24 : vector<512x128xf32>
    %26 = arith.truncf %25 : vector<512x128xf32> to vector<512x128xbf16>
    %c0_9 = arith.constant 0 : index
    %c0_10 = arith.constant 0 : index
    %27 = vector.load %arg4[%c0_9, %c0_10] : memref<128x512xbf16, #tpu.memory_space<vmem>>, vector<128x512xbf16>
    %cst_11 = arith.constant dense<0.000000e+00> : vector<512x512xf32>
    %28 = tpu.matmul %26, %27, %cst_11 {dimension_numbers = #tpu.dot_dimension_numbers<[1], [0], [0], [1], [0, 0, 1, 1], [], []>} : vector<512x128xbf16>, vector<128x512xbf16>, vector<512x512xf32> -> vector<512x512xf32>
    %c0_12 = arith.constant 0 : index
    %c0_13 = arith.constant 0 : index
    %29 = vector.load %arg5[%c0_12, %c0_13] : memref<1x512xf32, #tpu.memory_space<vmem>>, vector<1x512xf32>
    %30 = vector.broadcast %29 : vector<1x512xf32> to vector<512x512xf32>
    %31 = arith.addf %28, %30 : vector<512x512xf32>
    %32 = arith.negf %31 : vector<512x512xf32>
    %33 = math.exp %32 : vector<512x512xf32>
    %cst_14 = arith.constant 1.000000e+00 : f32
    %34 = vector.broadcast %cst_14 : f32 to vector<512x512xf32>
    %35 = arith.addf %34, %33 : vector<512x512xf32>
    %36 = arith.divf %34, %35 : vector<512x512xf32>
    %37 = arith.mulf %31, %36 : vector<512x512xf32>
    %38 = arith.truncf %37 : vector<512x512xf32> to vector<512x512xbf16>
    %c0_15 = arith.constant 0 : index
    %c0_16 = arith.constant 0 : index
    %39 = vector.load %arg6[%c0_15, %c0_16] : memref<512x128xbf16, #tpu.memory_space<vmem>>, vector<512x128xbf16>
    %cst_17 = arith.constant dense<0.000000e+00> : vector<512x128xf32>
    %40 = tpu.matmul %38, %39, %cst_17 {dimension_numbers = #tpu.dot_dimension_numbers<[1], [0], [0], [1], [0, 0, 1, 1], [], []>} : vector<512x512xbf16>, vector<512x128xbf16>, vector<512x128xf32> -> vector<512x128xf32>
    %c0_18 = arith.constant 0 : index
    %c0_19 = arith.constant 0 : index
    %41 = vector.load %arg7[%c0_18, %c0_19] : memref<1x128xf32, #tpu.memory_space<vmem>>, vector<1x128xf32>
    %42 = vector.broadcast %41 : vector<1x128xf32> to vector<512x128xf32>
    %43 = arith.addf %40, %42 : vector<512x128xf32>
    %c0_20 = arith.constant 0 : index
    %c0_21 = arith.constant 0 : index
    %44 = vector.load %arg1[%c0_20, %c0_21] : memref<512x128xbf16, #tpu.memory_space<vmem>>, vector<512x128xbf16>
    %45 = arith.extf %44 : vector<512x128xbf16> to vector<512x128xf32>
    %46 = arith.addf %45, %43 : vector<512x128xf32>
    %47 = arith.truncf %46 : vector<512x128xf32> to vector<512x128xbf16>
    %c0_22 = arith.constant 0 : index
    %c0_23 = arith.constant 0 : index
    %48 = vector.load %arg8[%c0_22, %c0_23] : memref<512x128xbf16, #tpu.memory_space<vmem>>, vector<512x128xbf16>
    tpu.vector_store %arg8[%c0_22, %c0_23], %47 {strides = array<i32>} : memref<512x128xbf16, #tpu.memory_space<vmem>>, vector<512x128xbf16>,
    return
  }
  func.func @transform_0(%arg0: i32) -> (i32, i32) {
    %c0_i32 = arith.constant 0 : i32
    %c0_i32_0 = arith.constant 0 : i32
    return %arg0, %c0_i32 : i32, i32
  }
  func.func @transform_1(%arg0: i32) -> (i32, i32) {
    %c0_i32 = arith.constant 0 : i32
    %c0_i32_0 = arith.constant 0 : i32
    %c0_i32_1 = arith.constant 0 : i32
    return %c0_i32, %c0_i32_0 : i32, i32
  }
  func.func @transform_2(%arg0: i32) -> (i32, i32) {
    %c0_i32 = arith.constant 0 : i32
    %c0_i32_0 = arith.constant 0 : i32
    %c0_i32_1 = arith.constant 0 : i32
    return %c0_i32, %c0_i32_0 : i32, i32
  }
  func.func @transform_3(%arg0: i32) -> (i32, i32) {
    %c0_i32 = arith.constant 0 : i32
    %c0_i32_0 = arith.constant 0 : i32
    %c0_i32_1 = arith.constant 0 : i32
    return %c0_i32, %c0_i32_0 : i32, i32
  }
  func.func @transform_4(%arg0: i32) -> (i32, i32) {
    %c0_i32 = arith.constant 0 : i32
    %c0_i32_0 = arith.constant 0 : i32
    %c0_i32_1 = arith.constant 0 : i32
    return %c0_i32, %c0_i32_0 : i32, i32
  }
  func.func @transform_5(%arg0: i32) -> (i32, i32) {
    %c0_i32 = arith.constant 0 : i32
    %c0_i32_0 = arith.constant 0 : i32
    %c0_i32_1 = arith.constant 0 : i32
    return %c0_i32, %c0_i32_0 : i32, i32
  }
  func.func @transform_6(%arg0: i32) -> (i32, i32) {
    %c0_i32 = arith.constant 0 : i32
    %c0_i32_0 = arith.constant 0 : i32
    %c0_i32_1 = arith.constant 0 : i32
    return %c0_i32, %c0_i32_0 : i32, i32
  }
  func.func @transform_7(%arg0: i32) -> (i32, i32) {
    %c0_i32 = arith.constant 0 : i32
    %c0_i32_0 = arith.constant 0 : i32
    return %arg0, %c0_i32 : i32, i32
  }
}

</mosaic_0001>

<llo_original>
// kernel: tpu_custom_call.1
$region0: #{tpu_custom_call.1}
  #allocation0 [shape = 'u32[]', space=smem, size = 0x4, offset = 0x4, fixed_abs, tag = 'smem constant byte address 0x4 - core index']
  #allocation1 [shape = 'u32[144,128]{1,0:T(1,128)}', space=vmem, size = 0x12000, scoped, tag = 'internal scratch']
  %s0 = inlined_call_operand.hbm [shape: bf16[1024,128], index: 0, kind: input, shape index: {}]
  %s1 = inlined_call_operand.vmem [shape: f32[1,128], index: 1, kind: input, shape index: {}]
  %s2 = inlined_call_operand.vmem [shape: f32[1,128], index: 2, kind: input, shape index: {}]
  %s3 = inlined_call_operand.hbm [shape: bf16[128,512], index: 3, kind: input, shape index: {}]
  %s4 = inlined_call_operand.vmem [shape: f32[1,512], index: 4, kind: input, shape index: {}]
  %s5 = inlined_call_operand.hbm [shape: bf16[512,128], index: 5, kind: input, shape index: {}]
  %s6 = inlined_call_operand.vmem [shape: f32[1,128], index: 6, kind: input, shape index: {}]
  %s7 = inlined_call_operand.hbm [shape: bf16[1024,128], index: 7, kind: output, shape index: {}]
  %s8 = sld [smem:[#allocation0]]
  $region73: #{tpu_custom_call.1} parent=0
    _
  %s10 = ssub.s32 1, %s8
  %s11 = scalar_select 0, %s10, %s8
  $region1: #{tpu_custom_call.1} parent=0
    #allocation2 [shape = 'u8[262144]{0}', space=vmem, size = 0x40000, scoped, tag = 'input window, operand 0']
    #allocation3 [shape = 's32[2]{0}', space=sflag, size = 0x8, scoped, tag = 'scoped memory for tpu_custom_call.1']
    #allocation4 [shape = 's32[2]{0}', space=sflag, size = 0x8, scoped, tag = 'scoped memory for tpu_custom_call.1']
    #allocation5 [shape = 'u8[131072]{0}', space=vmem, size = 0x20000, scoped, tag = 'input window, operand 3, single buffered']
    #allocation6 [shape = 's32[1]{0}', space=sflag, size = 0x4, scoped, tag = 'scoped memory for tpu_custom_call.1']
    #allocation7 [shape = 'u8[131072]{0}', space=vmem, size = 0x20000, scoped, tag = 'input window, operand 5, single buffered']
    #allocation8 [shape = 'u8[262144]{0}', space=vmem, size = 0x40000, scoped, tag = 'output window, operand 0']
    %12 = vsyncpa [#allocation3], 0
    %s13 = scalar_lea.sflag [#allocation3], 1
    %14 = vsyncpa %s13, 0
    %15 = vsyncpa [#allocation6], 0
    %16 = vsyncpa [#allocation4], 0
    %s17 = scalar_lea.sflag [#allocation4], 1
    %18 = vsyncpa %s17, 0
    loop: start=0, step=1, limit=4
    $region2: #{tpu_custom_call.1} parent=1 // loop_pre_header
      _
    $region3: #{tpu_custom_call.1} parent=1 // loop_header
      %s20 = sphi 0, %s24
      %p21 = scmp.ge.s32.totalorder %s20, 4
      %s30 = sphi 0, %s32
      %s33 = sphi 0, %s30
      %s34 = sphi 0, %s33
      %s50 = sphi 0, %s34
      %s54 = sphi 0, %s54
      %s56 = sphi 0, %s54
      %s57 = sphi 0, %s56
      %s71 = sphi 0, %s57
      %s75 = sphi 0, %s75
      %s77 = sphi 0, %s75
      %s78 = sphi 0, %s77
      %s92 = sphi 0, %s78
      %s96 = sphi 0, %s96
      %s98 = sphi 0, %s96
      %s99 = sphi 0, %s98
      %s113 = sphi 0, %s99
      %s117 = sphi 0, %s117
      %s119 = sphi 0, %s117
      %s120 = sphi 0, %s119
      %s134 = sphi 0, %s120
      %s138 = sphi 0, %s138
      %s140 = sphi 0, %s138
      %s141 = sphi 0, %s140
      %s155 = sphi 0, %s141
      %s159 = sphi 0, %s159
      %s161 = sphi 0, %s159
      %s162 = sphi 0, %s161
      %s176 = sphi 0, %s162
      %s182 = sphi 0, %s184
      %s185 = sphi 0, %s182
      %s186 = sphi 0, %s185
      %s202 = sphi 0, %s186
    $region4: #{tpu_custom_call.1} parent=1 // loop_header_branch
      %23 = sbr.rel (%p21) target = $region8
    $region5: #{tpu_custom_call.1} parent=1 // loop_body
      %s25 = ssub.s32 %s20, 1
      %s26 = ssub.s32 %s20, 2
      %s27 = sadd.s32 %s20, 1
      %s28 = ssub.s32 %s20, %s27
      %p29 = scmp.eq.s32.totalorder %s28, 0
      %s31 = sadd.s32 %s30, 1
      %s32 = scalar_select %p29, %s30, %s31
      %p35 = pneg %p29
      %p36 = scmp.eq.s32.totalorder %s20, 1
      %p37 = por %p35, %p36
      %p38 = scmp.ne.s32.totalorder %s30, %s33
      %p39 = scmp.eq.s32.totalorder %s20, 0
      %p40 = por %p38, %p39
      %p41 = scmp.ne.s32.totalorder %s30, %s33
      %p42 = scmp.eq.s32.totalorder %s25, 1
      %p43 = por %p41, %p42
      %p44 = scmp.ne.s32.totalorder %s33, %s34
      %p45 = scmp.eq.s32.totalorder %s25, 0
      %p46 = por %p44, %p45
      %p47 = scmp.ne.s32.totalorder %s33, %s34
      %p48 = scmp.eq.s32.totalorder %s26, 1
      %p49 = por %p47, %p48
      %p51 = scmp.ne.s32.totalorder %s34, %s50
      %p52 = scmp.eq.s32.totalorder %s26, 0
      %p53 = por %p51, %p52
      %s55 = sadd.s32 %s54, 1
      %p58 = scmp.eq.s32.totalorder %s20, 1
      %p59 = scmp.ne.s32.totalorder %s54, %s56
      %p60 = scmp.eq.s32.totalorder %s20, 0
      %p61 = por %p59, %p60
      %p62 = scmp.ne.s32.totalorder %s54, %s56
      %p63 = scmp.eq.s32.totalorder %s25, 1
      %p64 = por %p62, %p63
      %p65 = scmp.ne.s32.totalorder %s56, %s57
      %p66 = scmp.eq.s32.totalorder %s25, 0
      %p67 = por %p65, %p66
      %p68 = scmp.ne.s32.totalorder %s56, %s57
      %p69 = scmp.eq.s32.totalorder %s26, 1
      %p70 = por %p68, %p69
      %p72 = scmp.ne.s32.totalorder %s57, %s71
      %p73 = scmp.eq.s32.totalorder %s26, 0
      %p74 = por %p72, %p73
      %s76 = sadd.s32 %s75, 1
      %p79 = scmp.eq.s32.totalorder %s20, 1
      %p80 = scmp.ne.s32.totalorder %s75, %s77
      %p81 = scmp.eq.s32.totalorder %s20, 0
      %p82 = por %p80, %p81
      %p83 = scmp.ne.s32.totalorder %s75, %s77
      %p84 = scmp.eq.s32.totalorder %s25, 1
      %p85 = por %p83, %p84
      %p86 = scmp.ne.s32.totalorder %s77, %s78
      %p87 = scmp.eq.s32.totalorder %s25, 0
      %p88 = por %p86, %p87
      %p89 = scmp.ne.s32.totalorder %s77, %s78
      %p90 = scmp.eq.s32.totalorder %s26, 1
      %p91 = por %p89, %p90
      %p93 = scmp.ne.s32.totalorder %s78, %s92
      %p94 = scmp.eq.s32.totalorder %s26, 0
      %p95 = por %p93, %p94
      %s97 = sadd.s32 %s96, 1
      %p100 = scmp.eq.s32.totalorder %s20, 1
      %p101 = scmp.ne.s32.totalorder %s96, %s98
      %p102 = scmp.eq.s32.totalorder %s20, 0
      %p103 = por %p101, %p102
      %p104 = scmp.ne.s32.totalorder %s96, %s98
      %p105 = scmp.eq.s32.totalorder %s25, 1
      %p106 = por %p104, %p105
      %p107 = scmp.ne.s32.totalorder %s98, %s99
      %p108 = scmp.eq.s32.totalorder %s25, 0
      %p109 = por %p107, %p108
      %p110 = scmp.ne.s32.totalorder %s98, %s99
      %p111 = scmp.eq.s32.totalorder %s26, 1
      %p112 = por %p110, %p111
      %p114 = scmp.ne.s32.totalorder %s99, %s113
      %p115 = scmp.eq.s32.totalorder %s26, 0
      %p116 = por %p114, %p115
      %s118 = sadd.s32 %s117, 1
      %p121 = scmp.eq.s32.totalorder %s20, 1
      %p122 = scmp.ne.s32.totalorder %s117, %s119
      %p123 = scmp.eq.s32.totalorder %s20, 0
      %p124 = por %p122, %p123
      %p125 = scmp.ne.s32.totalorder %s117, %s119
      %p126 = scmp.eq.s32.totalorder %s25, 1
      %p127 = por %p125, %p126
      %p128 = scmp.ne.s32.totalorder %s119, %s120
      %p129 = scmp.eq.s32.totalorder %s25, 0
      %p130 = por %p128, %p129
      %p131 = scmp.ne.s32.totalorder %s119, %s120
      %p132 = scmp.eq.s32.totalorder %s26, 1
      %p133 = por %p131, %p132
      %p135 = scmp.ne.s32.totalorder %s120, %s134
      %p136 = scmp.eq.s32.totalorder %s26, 0
      %p137 = por %p135, %p136
      %s139 = sadd.s32 %s138, 1
      %p142 = scmp.eq.s32.totalorder %s20, 1
      %p143 = scmp.ne.s32.totalorder %s138, %s140
      %p144 = scmp.eq.s32.totalorder %s20, 0
      %p145 = por %p143, %p144
      %p146 = scmp.ne.s32.totalorder %s138, %s140
      %p147 = scmp.eq.s32.totalorder %s25, 1
      %p148 = por %p146, %p147
      %p149 = scmp.ne.s32.totalorder %s140, %s141
      %p150 = scmp.eq.s32.totalorder %s25, 0
      %p151 = por %p149, %p150
      %p152 = scmp.ne.s32.totalorder %s140, %s141
      %p153 = scmp.eq.s32.totalorder %s26, 1
      %p154 = por %p152, %p153
      %p156 = scmp.ne.s32.totalorder %s141, %s155
      %p157 = scmp.eq.s32.totalorder %s26, 0
      %p158 = por %p156, %p157
      %s160 = sadd.s32 %s159, 1
      %p163 = scmp.eq.s32.totalorder %s20, 1
      %p164 = scmp.ne.s32.totalorder %s159, %s161
      %p165 = scmp.eq.s32.totalorder %s20, 0
      %p166 = por %p164, %p165
      %p167 = scmp.ne.s32.totalorder %s159, %s161
      %p168 = scmp.eq.s32.totalorder %s25, 1
      %p169 = por %p167, %p168
      %p170 = scmp.ne.s32.totalorder %s161, %s162
      %p171 = scmp.eq.s32.totalorder %s25, 0
      %p172 = por %p170, %p171
      %p173 = scmp.ne.s32.totalorder %s161, %s162
      %p174 = scmp.eq.s32.totalorder %s26, 1
      %p175 = por %p173, %p174
      %p177 = scmp.ne.s32.totalorder %s162, %s176
      %p178 = scmp.eq.s32.totalorder %s26, 0
      %p179 = por %p177, %p178
      %s180 = ssub.s32 %s20, %s27
      %p181 = scmp.eq.s32.totalorder %s180, 0
      %s183 = sadd.s32 %s182, 1
      %s184 = scalar_select %p181, %s182, %s183
      %p187 = pneg %p181
      %p188 = scmp.eq.s32.totalorder %s20, 1
      %p189 = por %p187, %p188
      %p190 = scmp.ne.s32.totalorder %s182, %s185
      %p191 = scmp.eq.s32.totalorder %s20, 0
      %p192 = por %p190, %p191
      %p193 = scmp.ne.s32.totalorder %s182, %s185
      %p194 = scmp.eq.s32.totalorder %s25, 1
      %p195 = por %p193, %p194
      %p196 = scmp.ne.s32.totalorder %s185, %s186
      %p197 = scmp.eq.s32.totalorder %s25, 0
      %p198 = por %p196, %p197
      %p199 = scmp.ne.s32.totalorder %s185, %s186
      %p200 = scmp.eq.s32.totalorder %s26, 1
      %p201 = por %p199, %p200
      %p203 = scmp.ne.s32.totalorder %s186, %s202
      %p204 = scmp.eq.s32.totalorder %s26, 0
      %p205 = por %p203, %p204
      %p206 = scmp.le.s32.totalorder 1, %s20
      %p207 = scmp.lt.s32.totalorder %s20, 3
      %p208 = pnand %p206, %p207
      %p209 = pneg %p208
      // Predicated region
      $region9: #{tpu_custom_call.1} parent=5 // pred_check
        _
      $region10: #{tpu_custom_call.1} parent=5 // pred_check_branch
        %211 = sbr.rel (%p208) target = $region12
      $region11: #{tpu_custom_call.1} parent=5 // pred_region
        %s212 = ssub.s32 %s20, 1
        // Predicated region
        $region13: #{tpu_custom_call.1} parent=11 // pred_check
          %p213 = pneg %p67
        $region14: #{tpu_custom_call.1} parent=11 // pred_check_branch
          %215 = sbr.rel (%p213) target = $region16
        $region15: #{tpu_custom_call.1} parent=11 // pred_region
          _
        $region16: #{tpu_custom_call.1} parent=11 // pred_fallthru
          _
        // Predicated region
        $region17: #{tpu_custom_call.1} parent=11 // pred_check
          %p216 = pneg %p88
        $region18: #{tpu_custom_call.1} parent=11 // pred_check_branch
          %218 = sbr.rel (%p216) target = $region20
        $region19: #{tpu_custom_call.1} parent=11 // pred_region
          _
        $region20: #{tpu_custom_call.1} parent=11 // pred_fallthru
          _
        // Predicated region
        $region21: #{tpu_custom_call.1} parent=11 // pred_check
          %p219 = pneg %p109
        $region22: #{tpu_custom_call.1} parent=11 // pred_check_branch
          %221 = sbr.rel (%p219) target = $region24
        $region23: #{tpu_custom_call.1} parent=11 // pred_region
          %s223 = ssub.s32 4096, 4096
          %224 = vsyncadd [#allocation6], %s223
          %s225 = sshll.u32 [#allocation5], 4
          %s226 = int_to_ptr.vmem [resolvable:$true] %s225
          %231 = dma.hbm_to_vmem [thread:$0]  %s3, 4096, %s226, [#allocation6], 256, 256, 16
        $region24: #{tpu_custom_call.1} parent=11 // pred_fallthru
          _
        // Predicated region
        $region25: #{tpu_custom_call.1} parent=11 // pred_check
          %p232 = pneg %p130
        $region26: #{tpu_custom_call.1} parent=11 // pred_check_branch
          %234 = sbr.rel (%p232) target = $region28
        $region27: #{tpu_custom_call.1} parent=11 // pred_region
          _
        $region28: #{tpu_custom_call.1} parent=11 // pred_fallthru
          _
        // Predicated region
        $region29: #{tpu_custom_call.1} parent=11 // pred_check
          %p235 = pneg %p151
        $region30: #{tpu_custom_call.1} parent=11 // pred_check_branch
          %237 = sbr.rel (%p235) target = $region32
        $region31: #{tpu_custom_call.1} parent=11 // pred_region
          %s239 = ssub.s32 4096, 4096
          %240 = vsyncadd [#allocation6], %s239
          %s241 = sshll.u32 [#allocation7], 4
          %s242 = int_to_ptr.vmem [resolvable:$true] %s241
          %247 = dma.hbm_to_vmem [thread:$0]  %s5, 4096, %s242, [#allocation6], 64, 64, 4
        $region32: #{tpu_custom_call.1} parent=11 // pred_fallthru
          _
        // Predicated region
        $region33: #{tpu_custom_call.1} parent=11 // pred_check
          %p248 = pneg %p172
        $region34: #{tpu_custom_call.1} parent=11 // pred_check_branch
          %250 = sbr.rel (%p248) target = $region36
        $region35: #{tpu_custom_call.1} parent=11 // pred_region
          _
        $region36: #{tpu_custom_call.1} parent=11 // pred_fallthru
          _
      $region12: #{tpu_custom_call.1} parent=5 // pred_fallthru
        _
      %p251 = scmp.lt.s32.totalorder %s20, 2
      // Predicated region
      $region37: #{tpu_custom_call.1} parent=5 // pred_check
        %p252 = pneg %p251
      $region38: #{tpu_custom_call.1} parent=5 // pred_check_branch
        %254 = sbr.rel (%p252) target = $region40
      $region39: #{tpu_custom_call.1} parent=5 // pred_region
        // Predicated region
        $region41: #{tpu_custom_call.1} parent=39 // pred_check
          %p255 = pneg %p40
        $region42: #{tpu_custom_call.1} parent=39 // pred_check_branch
          %257 = sbr.rel (%p255) target = $region44
        $region43: #{tpu_custom_call.1} parent=39 // pred_region
          %s258 = sand.u32 %s30, 1
          %s259 = scalar_lea.sflag [#allocation3], %s258
          %s260 = sand.u32 %s30, 1
          %s261 = smul.addr %s260, 256
          %s262 = scalar_lea.vmem [#allocation2], %s261
          %s263 = smul.u32 64, %s20
          %s265 = ssub.s32 4096, 4096
          %266 = vsyncadd %s259, %s265
          %s267 = smul.addr %s263, 64
          %s268 = scalar_lea.hbm %s0, %s267
          %s269 = sshll.u32 %s262, 4
          %s270 = int_to_ptr.vmem [resolvable:$true] %s269
          %275 = dma.hbm_to_vmem [thread:$0]  %s268, 4096, %s270, %s259, 64, 64, 4
        $region44: #{tpu_custom_call.1} parent=39 // pred_fallthru
          _
      $region40: #{tpu_custom_call.1} parent=5 // pred_fallthru
        _
      %p276 = scmp.le.s32.totalorder 1, %s20
      %p277 = scmp.lt.s32.totalorder %s20, 3
      %p278 = pnand %p276, %p277
      %p279 = pneg %p278
      // Predicated region
      $region45: #{tpu_custom_call.1} parent=5 // pred_check
        _
      $region46: #{tpu_custom_call.1} parent=5 // pred_check_branch
        %281 = sbr.rel (%p278) target = $region48
      $region47: #{tpu_custom_call.1} parent=5 // pred_region
        %s282 = ssub.s32 %s20, 1
        %s283 = sand.u32 %s33, 1
        %s284 = scalar_lea.sflag [#allocation3], %s283
        %s285 = sand.u32 %s33, 1
        %s286 = smul.addr %s285, 256
        %s287 = scalar_lea.vmem [#allocation2], %s286
        // Predicated region
        $region49: #{tpu_custom_call.1} parent=47 // pred_check
          %p288 = pneg %p46
        $region50: #{tpu_custom_call.1} parent=47 // pred_check_branch
          %290 = sbr.rel (%p288) target = $region52
        $region51: #{tpu_custom_call.1} parent=47 // pred_region
          %291 = dma.done %s284, 4096
        $region52: #{tpu_custom_call.1} parent=47 // pred_fallthru
          _
        // Predicated region
        $region53: #{tpu_custom_call.1} parent=47 // pred_check
          %p292 = pneg %p109
        $region54: #{tpu_custom_call.1} parent=47 // pred_check_branch
          %294 = sbr.rel (%p292) target = $region56
        $region55: #{tpu_custom_call.1} parent=47 // pred_region
          %295 = dma.done [#allocation6], 4096
        $region56: #{tpu_custom_call.1} parent=47 // pred_fallthru
          _
        // Predicated region
        $region57: #{tpu_custom_call.1} parent=47 // pred_check
          %p296 = pneg %p151
        $region58: #{tpu_custom_call.1} parent=47 // pred_check_branch
          %298 = sbr.rel (%p296) target = $region60
        $region59: #{tpu_custom_call.1} parent=47 // pred_region
          %299 = dma.done [#allocation6], 4096
        $region60: #{tpu_custom_call.1} parent=47 // pred_fallthru
          _
        %s300 = sand.u32 %s33, 1
        %s301 = scalar_lea.sflag [#allocation3], %s300
        %s302 = sand.u32 %s33, 1
        %s303 = smul.addr %s302, 256
        %s304 = scalar_lea.vmem [#allocation2], %s303
        %p305 = pneg %p46
        %p306 = pneg %p43
        %p307 = pneg %p67
        %p308 = pneg %p64
        %p309 = pneg %p88
        %p310 = pneg %p85
        %p311 = pneg %p109
        %p312 = pneg %p106
        %p313 = pneg %p130
        %p314 = pneg %p127
        %p315 = pneg %p151
        %p316 = pneg %p148
        %p317 = pneg %p172
        %p318 = pneg %p169
        %p319 = pneg %p198
        %p320 = pneg %p195
        %s321 = sand.u32 %s185, 1
        %s322 = scalar_lea.sflag [#allocation4], %s321
        %s323 = sand.u32 %s185, 1
        %s324 = smul.addr %s323, 256
        %s325 = scalar_lea.vmem [#allocation8], %s324
        %s326 = smul.u32 64, %s25
        %s327 = smul.u32 64, %s25
        %v329 = vld [vmem:[%s287] sm:$0xf]
        %v330 = vld [vmem:[%s287 + $0x4] sm:$0xf]
        %v331 = vld [vmem:[%s287 + $0x8] sm:$0xf]
        %v332 = vld [vmem:[%s287 + $0xc] sm:$0xf]
        %v333 = vld [vmem:[%s287 + $0x10] sm:$0xf]
        %v334 = vld [vmem:[%s287 + $0x14] sm:$0xf]
        %v335 = vld [vmem:[%s287 + $0x18] sm:$0xf]
        %v336 = vld [vmem:[%s287 + $0x1c] sm:$0xf]
        %v337 = vld [vmem:[%s287 + $0x20] sm:$0xf]
        %v338 = vld [vmem:[%s287 + $0x24] sm:$0xf]
        %v339 = vld [vmem:[%s287 + $0x28] sm:$0xf]
        %v340 = vld [vmem:[%s287 + $0x2c] sm:$0xf]
        %v341 = vld [vmem:[%s287 + $0x30] sm:$0xf]
        %v342 = vld [vmem:[%s287 + $0x34] sm:$0xf]
        %v343 = vld [vmem:[%s287 + $0x38] sm:$0xf]
        %v344 = vld [vmem:[%s287 + $0x3c] sm:$0xf]
        %v345 = vld [vmem:[%s287 + $0x40] sm:$0xf]
        %v346 = vld [vmem:[%s287 + $0x44] sm:$0xf]
        %v347 = vld [vmem:[%s287 + $0x48] sm:$0xf]
        %v348 = vld [vmem:[%s287 + $0x4c] sm:$0xf]
        %v349 = vld [vmem:[%s287 + $0x50] sm:$0xf]
        %v350 = vld [vmem:[%s287 + $0x54] sm:$0xf]
        %v351 = vld [vmem:[%s287 + $0x58] sm:$0xf]
        %v352 = vld [vmem:[%s287 + $0x5c] sm:$0xf]
        %v353 = vld [vmem:[%s287 + $0x60] sm:$0xf]
        %v354 = vld [vmem:[%s287 + $0x64] sm:$0xf]
        %v355 = vld [vmem:[%s287 + $0x68] sm:$0xf]
        %v356 = vld [vmem:[%s287 + $0x6c] sm:$0xf]
        %v357 = vld [vmem:[%s287 + $0x70] sm:$0xf]
        %v358 = vld [vmem:[%s287 + $0x74] sm:$0xf]
        %v359 = vld [vmem:[%s287 + $0x78] sm:$0xf]
        %v360 = vld [vmem:[%s287 + $0x7c] sm:$0xf]
        %v361 = vld [vmem:[%s287 + $0x80] sm:$0xf]
        %v362 = vld [vmem:[%s287 + $0x84] sm:$0xf]
        %v363 = vld [vmem:[%s287 + $0x88] sm:$0xf]
        %v364 = vld [vmem:[%s287 + $0x8c] sm:$0xf]
        %v365 = vld [vmem:[%s287 + $0x90] sm:$0xf]
        %v366 = vld [vmem:[%s287 + $0x94] sm:$0xf]
        %v367 = vld [vmem:[%s287 + $0x98] sm:$0xf]
        %v368 = vld [vmem:[%s287 + $0x9c] sm:$0xf]
        %v369 = vld [vmem:[%s287 + $0xa0] sm:$0xf]
        %v370 = vld [vmem:[%s287 + $0xa4] sm:$0xf]
        %v371 = vld [vmem:[%s287 + $0xa8] sm:$0xf]
        %v372 = vld [vmem:[%s287 + $0xac] sm:$0xf]
        %v373 = vld [vmem:[%s287 + $0xb0] sm:$0xf]
        %v374 = vld [vmem:[%s287 + $0xb4] sm:$0xf]
        %v375 = vld [vmem:[%s287 + $0xb8] sm:$0xf]
        %v376 = vld [vmem:[%s287 + $0xbc] sm:$0xf]
        %v377 = vld [vmem:[%s287 + $0xc0] sm:$0xf]
        %v378 = vld [vmem:[%s287 + $0xc4] sm:$0xf]
        %v379 = vld [vmem:[%s287 + $0xc8] sm:$0xf]
        %v380 = vld [vmem:[%s287 + $0xcc] sm:$0xf]
        %v381 = vld [vmem:[%s287 + $0xd0] sm:$0xf]
        %v382 = vld [vmem:[%s287 + $0xd4] sm:$0xf]
        %v383 = vld [vmem:[%s287 + $0xd8] sm:$0xf]
        %v384 = vld [vmem:[%s287 + $0xdc] sm:$0xf]
        %v385 = vld [vmem:[%s287 + $0xe0] sm:$0xf]
        %v386 = vld [vmem:[%s287 + $0xe4] sm:$0xf]
        %v387 = vld [vmem:[%s287 + $0xe8] sm:$0xf]
        %v388 = vld [vmem:[%s287 + $0xec] sm:$0xf]
        %v389 = vld [vmem:[%s287 + $0xf0] sm:$0xf]
        %v390 = vld [vmem:[%s287 + $0xf4] sm:$0xf]
        %v391 = vld [vmem:[%s287 + $0xf8] sm:$0xf]
        %v392 = vld [vmem:[%s287 + $0xfc] sm:$0xf]
        %v393 = vunpack.c.l.bf16 %v329
        %v394 = vunpack.c.l.bf16 %v330
        %v395 = vunpack.c.l.bf16 %v331
        %v396 = vunpack.c.l.bf16 %v332
        %v397 = vunpack.c.l.bf16 %v333
        %v398 = vunpack.c.l.bf16 %v334
        %v399 = vunpack.c.l.bf16 %v335
        %v400 = vunpack.c.l.bf16 %v336
        %v401 = vunpack.c.l.bf16 %v337
        %v402 = vunpack.c.l.bf16 %v338
        %v403 = vunpack.c.l.bf16 %v339
        %v404 = vunpack.c.l.bf16 %v340
        %v405 = vunpack.c.l.bf16 %v341
        %v406 = vunpack.c.l.bf16 %v342
        %v407 = vunpack.c.l.bf16 %v343
        %v408 = vunpack.c.l.bf16 %v344
        %v409 = vunpack.c.l.bf16 %v345
        %v410 = vunpack.c.l.bf16 %v346
        %v411 = vunpack.c.l.bf16 %v347
        %v412 = vunpack.c.l.bf16 %v348
        %v413 = vunpack.c.l.bf16 %v349
        %v414 = vunpack.c.l.bf16 %v350
        %v415 = vunpack.c.l.bf16 %v351
        %v416 = vunpack.c.l.bf16 %v352
        %v417 = vunpack.c.l.bf16 %v353
        %v418 = vunpack.c.l.bf16 %v354
        %v419 = vunpack.c.l.bf16 %v355
        %v420 = vunpack.c.l.bf16 %v356
        %v421 = vunpack.c.l.bf16 %v357
        %v422 = vunpack.c.l.bf16 %v358
        %v423 = vunpack.c.l.bf16 %v359
        %v424 = vunpack.c.l.bf16 %v360
        %v425 = vunpack.c.l.bf16 %v361
        %v426 = vunpack.c.l.bf16 %v362
        %v427 = vunpack.c.l.bf16 %v363
        %v428 = vunpack.c.l.bf16 %v364
        %v429 = vunpack.c.l.bf16 %v365
        %v430 = vunpack.c.l.bf16 %v366
        %v431 = vunpack.c.l.bf16 %v367
        %v432 = vunpack.c.l.bf16 %v368
        %v433 = vunpack.c.l.bf16 %v369
        %v434 = vunpack.c.l.bf16 %v370
        %v435 = vunpack.c.l.bf16 %v371
        %v436 = vunpack.c.l.bf16 %v372
        %v437 = vunpack.c.l.bf16 %v373
        %v438 = vunpack.c.l.bf16 %v374
        %v439 = vunpack.c.l.bf16 %v375
        %v440 = vunpack.c.l.bf16 %v376
        %v441 = vunpack.c.l.bf16 %v377
        %v442 = vunpack.c.l.bf16 %v378
        %v443 = vunpack.c.l.bf16 %v379
        %v444 = vunpack.c.l.bf16 %v380
        %v445 = vunpack.c.l.bf16 %v381
        %v446 = vunpack.c.l.bf16 %v382
        %v447 = vunpack.c.l.bf16 %v383
        %v448 = vunpack.c.l.bf16 %v384
        %v449 = vunpack.c.l.bf16 %v385
        %v450 = vunpack.c.l.bf16 %v386
        %v451 = vunpack.c.l.bf16 %v387
        %v452 = vunpack.c.l.bf16 %v388
        %v453 = vunpack.c.l.bf16 %v389
        %v454 = vunpack.c.l.bf16 %v390
        %v455 = vunpack.c.l.bf16 %v391
        %v456 = vunpack.c.l.bf16 %v392
        %457 = vadd.xlane.f32.xlu0 %v393
        %v458 = vpop.xlane.xlu0 %457
        %459 = vadd.xlane.f32.xlu0 %v394
        %v460 = vpop.xlane.xlu0 %459
        %461 = vadd.xlane.f32.xlu0 %v395
        %v462 = vpop.xlane.xlu0 %461
        %463 = vadd.xlane.f32.xlu0 %v396
        %v464 = vpop.xlane.xlu0 %463
        %465 = vadd.xlane.f32.xlu0 %v397
        %v466 = vpop.xlane.xlu0 %465
        %467 = vadd.xlane.f32.xlu0 %v398
        %v468 = vpop.xlane.xlu0 %467
        %469 = vadd.xlane.f32.xlu0 %v399
        %v470 = vpop.xlane.xlu0 %469
        %471 = vadd.xlane.f32.xlu0 %v400
        %v472 = vpop.xlane.xlu0 %471
        %473 = vadd.xlane.f32.xlu0 %v401
        %v474 = vpop.xlane.xlu0 %473
        %475 = vadd.xlane.f32.xlu0 %v402
        %v476 = vpop.xlane.xlu0 %475
        %477 = vadd.xlane.f32.xlu0 %v403
        %v478 = vpop.xlane.xlu0 %477
        %479 = vadd.xlane.f32.xlu0 %v404
        %v480 = vpop.xlane.xlu0 %479
        %481 = vadd.xlane.f32.xlu0 %v405
        %v482 = vpop.xlane.xlu0 %481
        %483 = vadd.xlane.f32.xlu0 %v406
        %v484 = vpop.xlane.xlu0 %483
        %485 = vadd.xlane.f32.xlu0 %v407
        %v486 = vpop.xlane.xlu0 %485
        %487 = vadd.xlane.f32.xlu0 %v408
        %v488 = vpop.xlane.xlu0 %487
        %489 = vadd.xlane.f32.xlu0 %v409
        %v490 = vpop.xlane.xlu0 %489
        %491 = vadd.xlane.f32.xlu0 %v410
        %v492 = vpop.xlane.xlu0 %491
        %493 = vadd.xlane.f32.xlu0 %v411
        %v494 = vpop.xlane.xlu0 %493
        %495 = vadd.xlane.f32.xlu0 %v412
        %v496 = vpop.xlane.xlu0 %495
        %497 = vadd.xlane.f32.xlu0 %v413
        %v498 = vpop.xlane.xlu0 %497
        %499 = vadd.xlane.f32.xlu0 %v414
        %v500 = vpop.xlane.xlu0 %499
        %501 = vadd.xlane.f32.xlu0 %v415
        %v502 = vpop.xlane.xlu0 %501
        %503 = vadd.xlane.f32.xlu0 %v416
        %v504 = vpop.xlane.xlu0 %503
        %505 = vadd.xlane.f32.xlu0 %v417
        %v506 = vpop.xlane.xlu0 %505
        %507 = vadd.xlane.f32.xlu0 %v418
        %v508 = vpop.xlane.xlu0 %507
        %509 = vadd.xlane.f32.xlu0 %v419
        %v510 = vpop.xlane.xlu0 %509
        %511 = vadd.xlane.f32.xlu0 %v420
        %v512 = vpop.xlane.xlu0 %511
        %513 = vadd.xlane.f32.xlu0 %v421
        %v514 = vpop.xlane.xlu0 %513
        %515 = vadd.xlane.f32.xlu0 %v422
        %v516 = vpop.xlane.xlu0 %515
        %517 = vadd.xlane.f32.xlu0 %v423
        %v518 = vpop.xlane.xlu0 %517
        %519 = vadd.xlane.f32.xlu0 %v424
        %v520 = vpop.xlane.xlu0 %519
        %521 = vadd.xlane.f32.xlu0 %v425
        %v522 = vpop.xlane.xlu0 %521
        %523 = vadd.xlane.f32.xlu0 %v426
        %v524 = vpop.xlane.xlu0 %523
        %525 = vadd.xlane.f32.xlu0 %v427
        %v526 = vpop.xlane.xlu0 %525
        %527 = vadd.xlane.f32.xlu0 %v428
        %v528 = vpop.xlane.xlu0 %527
        %529 = vadd.xlane.f32.xlu0 %v429
        %v530 = vpop.xlane.xlu0 %529
        %531 = vadd.xlane.f32.xlu0 %v430
        %v532 = vpop.xlane.xlu0 %531
        %533 = vadd.xlane.f32.xlu0 %v431
        %v534 = vpop.xlane.xlu0 %533
        %535 = vadd.xlane.f32.xlu0 %v432
        %v536 = vpop.xlane.xlu0 %535
        %537 = vadd.xlane.f32.xlu0 %v433
        %v538 = vpop.xlane.xlu0 %537
        %539 = vadd.xlane.f32.xlu0 %v434
        %v540 = vpop.xlane.xlu0 %539
        %541 = vadd.xlane.f32.xlu0 %v435
        %v542 = vpop.xlane.xlu0 %541
        %543 = vadd.xlane.f32.xlu0 %v436
        %v544 = vpop.xlane.xlu0 %543
        %545 = vadd.xlane.f32.xlu0 %v437
        %v546 = vpop.xlane.xlu0 %545
        %547 = vadd.xlane.f32.xlu0 %v438
        %v548 = vpop.xlane.xlu0 %547
        %549 = vadd.xlane.f32.xlu0 %v439
        %v550 = vpop.xlane.xlu0 %549
        %551 = vadd.xlane.f32.xlu0 %v440
        %v552 = vpop.xlane.xlu0 %551
        %553 = vadd.xlane.f32.xlu0 %v441
        %v554 = vpop.xlane.xlu0 %553
        %555 = vadd.xlane.f32.xlu0 %v442
        %v556 = vpop.xlane.xlu0 %555
        %557 = vadd.xlane.f32.xlu0 %v443
        %v558 = vpop.xlane.xlu0 %557
        %559 = vadd.xlane.f32.xlu0 %v444
        %v560 = vpop.xlane.xlu0 %559
        %561 = vadd.xlane.f32.xlu0 %v445
        %v562 = vpop.xlane.xlu0 %561
        %563 = vadd.xlane.f32.xlu0 %v446
        %v564 = vpop.xlane.xlu0 %563
        %565 = vadd.xlane.f32.xlu0 %v447
        %v566 = vpop.xlane.xlu0 %565
        %567 = vadd.xlane.f32.xlu0 %v448
        %v568 = vpop.xlane.xlu0 %567
        %569 = vadd.xlane.f32.xlu0 %v449
        %v570 = vpop.xlane.xlu0 %569
        %571 = vadd.xlane.f32.xlu0 %v450
        %v572 = vpop.xlane.xlu0 %571
        %573 = vadd.xlane.f32.xlu0 %v451
        %v574 = vpop.xlane.xlu0 %573
        %575 = vadd.xlane.f32.xlu0 %v452
        %v576 = vpop.xlane.xlu0 %575
        %577 = vadd.xlane.f32.xlu0 %v453
        %v578 = vpop.xlane.xlu0 %577
        %579 = vadd.xlane.f32.xlu0 %v454
        %v580 = vpop.xlane.xlu0 %579
        %581 = vadd.xlane.f32.xlu0 %v455
        %v582 = vpop.xlane.xlu0 %581
        %583 = vadd.xlane.f32.xlu0 %v456
        %v584 = vpop.xlane.xlu0 %583
        %v585 = vrcp.pop 128.0
        %v586 = vmul.f32 %v458, %v585
        %v587 = vmul.f32 %v460, %v585
        %v588 = vmul.f32 %v462, %v585
        %v589 = vmul.f32 %v464, %v585
        %v590 = vmul.f32 %v466, %v585
        %v591 = vmul.f32 %v468, %v585
        %v592 = vmul.f32 %v470, %v585
        %v593 = vmul.f32 %v472, %v585
        %v594 = vmul.f32 %v474, %v585
        %v595 = vmul.f32 %v476, %v585
        %v596 = vmul.f32 %v478, %v585
        %v597 = vmul.f32 %v480, %v585
        %v598 = vmul.f32 %v482, %v585
        %v599 = vmul.f32 %v484, %v585
        %v600 = vmul.f32 %v486, %v585
        %v601 = vmul.f32 %v488, %v585
        %v602 = vmul.f32 %v490, %v585
        %v603 = vmul.f32 %v492, %v585
        %v604 = vmul.f32 %v494, %v585
        %v605 = vmul.f32 %v496, %v585
        %v606 = vmul.f32 %v498, %v585
        %v607 = vmul.f32 %v500, %v585
        %v608 = vmul.f32 %v502, %v585
        %v609 = vmul.f32 %v504, %v585
        %v610 = vmul.f32 %v506, %v585
        %v611 = vmul.f32 %v508, %v585
        %v612 = vmul.f32 %v510, %v585
        %v613 = vmul.f32 %v512, %v585
        %v614 = vmul.f32 %v514, %v585
        %v615 = vmul.f32 %v516, %v585
        %v616 = vmul.f32 %v518, %v585
        %v617 = vmul.f32 %v520, %v585
        %v618 = vmul.f32 %v522, %v585
        %v619 = vmul.f32 %v524, %v585
        %v620 = vmul.f32 %v526, %v585
        %v621 = vmul.f32 %v528, %v585
        %v622 = vmul.f32 %v530, %v585
        %v623 = vmul.f32 %v532, %v585
        %v624 = vmul.f32 %v534, %v585
        %v625 = vmul.f32 %v536, %v585
        %v626 = vmul.f32 %v538, %v585
        %v627 = vmul.f32 %v540, %v585
        %v628 = vmul.f32 %v542, %v585
        %v629 = vmul.f32 %v544, %v585
        %v630 = vmul.f32 %v546, %v585
        %v631 = vmul.f32 %v548, %v585
        %v632 = vmul.f32 %v550, %v585
        %v633 = vmul.f32 %v552, %v585
        %v634 = vmul.f32 %v554, %v585
        %v635 = vmul.f32 %v556, %v585
        %v636 = vmul.f32 %v558, %v585
        %v637 = vmul.f32 %v560, %v585
        %v638 = vmul.f32 %v562, %v585
        %v639 = vmul.f32 %v564, %v585
        %v640 = vmul.f32 %v566, %v585
        %v641 = vmul.f32 %v568, %v585
        %v642 = vmul.f32 %v570, %v585
        %v643 = vmul.f32 %v572, %v585
        %v644 = vmul.f32 %v574, %v585
        %v645 = vmul.f32 %v576, %v585
        %v646 = vmul.f32 %v578, %v585
        %v647 = vmul.f32 %v580, %v585
        %v648 = vmul.f32 %v582, %v585
        %v649 = vmul.f32 %v584, %v585
        %v650 = vmul.f32 %v393, %v393
        %v651 = vmul.f32 %v394, %v394
        %v652 = vmul.f32 %v395, %v395
        %v653 = vmul.f32 %v396, %v396
        %v654 = vmul.f32 %v397, %v397
        %v655 = vmul.f32 %v398, %v398
        %v656 = vmul.f32 %v399, %v399
        %v657 = vmul.f32 %v400, %v400
        %v658 = vmul.f32 %v401, %v401
        %v659 = vmul.f32 %v402, %v402
        %v660 = vmul.f32 %v403, %v403
        %v661 = vmul.f32 %v404, %v404
        %v662 = vmul.f32 %v405, %v405
        %v663 = vmul.f32 %v406, %v406
        %v664 = vmul.f32 %v407, %v407
        %v665 = vmul.f32 %v408, %v408
        %v666 = vmul.f32 %v409, %v409
        %v667 = vmul.f32 %v410, %v410
        %v668 = vmul.f32 %v411, %v411
        %v669 = vmul.f32 %v412, %v412
        %v670 = vmul.f32 %v413, %v413
        %v671 = vmul.f32 %v414, %v414
        %v672 = vmul.f32 %v415, %v415
        %v673 = vmul.f32 %v416, %v416
        %v674 = vmul.f32 %v417, %v417
        %v675 = vmul.f32 %v418, %v418
        %v676 = vmul.f32 %v419, %v419
        %v677 = vmul.f32 %v420, %v420
        %v678 = vmul.f32 %v421, %v421
        %v679 = vmul.f32 %v422, %v422
        %v680 = vmul.f32 %v423, %v423
        %v681 = vmul.f32 %v424, %v424
        %v682 = vmul.f32 %v425, %v425
        %v683 = vmul.f32 %v426, %v426
        %v684 = vmul.f32 %v427, %v427
        %v685 = vmul.f32 %v428, %v428
        %v686 = vmul.f32 %v429, %v429
        %v687 = vmul.f32 %v430, %v430
        %v688 = vmul.f32 %v431, %v431
        %v689 = vmul.f32 %v432, %v432
        %v690 = vmul.f32 %v433, %v433
        %v691 = vmul.f32 %v434, %v434
        %v692 = vmul.f32 %v435, %v435
        %v693 = vmul.f32 %v436, %v436
        %v694 = vmul.f32 %v437, %v437
        %v695 = vmul.f32 %v438, %v438
        %v696 = vmul.f32 %v439, %v439
        %v697 = vmul.f32 %v440, %v440
        %v698 = vmul.f32 %v441, %v441
        %v699 = vmul.f32 %v442, %v442
        %v700 = vmul.f32 %v443, %v443
        %v701 = vmul.f32 %v444, %v444
        %v702 = vmul.f32 %v445, %v445
        %v703 = vmul.f32 %v446, %v446
        %v704 = vmul.f32 %v447, %v447
        %v705 = vmul.f32 %v448, %v448
        %v706 = vmul.f32 %v449, %v449
        %v707 = vmul.f32 %v450, %v450
        %v708 = vmul.f32 %v451, %v451
        %v709 = vmul.f32 %v452, %v452
        %v710 = vmul.f32 %v453, %v453
        %v711 = vmul.f32 %v454, %v454
        %v712 = vmul.f32 %v455, %v455
        %v713 = vmul.f32 %v456, %v456
        %714 = vadd.xlane.f32.xlu0 %v650
        %v715 = vpop.xlane.xlu0 %714
        %716 = vadd.xlane.f32.xlu0 %v651
        %v717 = vpop.xlane.xlu0 %716
        %718 = vadd.xlane.f32.xlu0 %v652
        %v719 = vpop.xlane.xlu0 %718
        %720 = vadd.xlane.f32.xlu0 %v653
        %v721 = vpop.xlane.xlu0 %720
        %722 = vadd.xlane.f32.xlu0 %v654
        %v723 = vpop.xlane.xlu0 %722
        %724 = vadd.xlane.f32.xlu0 %v655
        %v725 = vpop.xlane.xlu0 %724
        %726 = vadd.xlane.f32.xlu0 %v656
        %v727 = vpop.xlane.xlu0 %726
        %728 = vadd.xlane.f32.xlu0 %v657
        %v729 = vpop.xlane.xlu0 %728
        %730 = vadd.xlane.f32.xlu0 %v658
        %v731 = vpop.xlane.xlu0 %730
        %732 = vadd.xlane.f32.xlu0 %v659
        %v733 = vpop.xlane.xlu0 %732
        %734 = vadd.xlane.f32.xlu0 %v660
        %v735 = vpop.xlane.xlu0 %734
        %736 = vadd.xlane.f32.xlu0 %v661
        %v737 = vpop.xlane.xlu0 %736
        %738 = vadd.xlane.f32.xlu0 %v662
        %v739 = vpop.xlane.xlu0 %738
        %740 = vadd.xlane.f32.xlu0 %v663
        %v741 = vpop.xlane.xlu0 %740
        %742 = vadd.xlane.f32.xlu0 %v664
        %v743 = vpop.xlane.xlu0 %742
        %744 = vadd.xlane.f32.xlu0 %v665
        %v745 = vpop.xlane.xlu0 %744
        %746 = vadd.xlane.f32.xlu0 %v666
        %v747 = vpop.xlane.xlu0 %746
        %748 = vadd.xlane.f32.xlu0 %v667
        %v749 = vpop.xlane.xlu0 %748
        %750 = vadd.xlane.f32.xlu0 %v668
        %v751 = vpop.xlane.xlu0 %750
        %752 = vadd.xlane.f32.xlu0 %v669
        %v753 = vpop.xlane.xlu0 %752
        %754 = vadd.xlane.f32.xlu0 %v670
        %v755 = vpop.xlane.xlu0 %754
        %756 = vadd.xlane.f32.xlu0 %v671
        %v757 = vpop.xlane.xlu0 %756
        %758 = vadd.xlane.f32.xlu0 %v672
        %v759 = vpop.xlane.xlu0 %758
        %760 = vadd.xlane.f32.xlu0 %v673
        %v761 = vpop.xlane.xlu0 %760
        %762 = vadd.xlane.f32.xlu0 %v674
        %v763 = vpop.xlane.xlu0 %762
        %764 = vadd.xlane.f32.xlu0 %v675
        %v765 = vpop.xlane.xlu0 %764
        %766 = vadd.xlane.f32.xlu0 %v676
        %v767 = vpop.xlane.xlu0 %766
        %768 = vadd.xlane.f32.xlu0 %v677
        %v769 = vpop.xlane.xlu0 %768
        %770 = vadd.xlane.f32.xlu0 %v678
        %v771 = vpop.xlane.xlu0 %770
        %772 = vadd.xlane.f32.xlu0 %v679
        %v773 = vpop.xlane.xlu0 %772
        %774 = vadd.xlane.f32.xlu0 %v680
        %v775 = vpop.xlane.xlu0 %774
        %776 = vadd.xlane.f32.xlu0 %v681
        %v777 = vpop.xlane.xlu0 %776
        %778 = vadd.xlane.f32.xlu0 %v682
        %v779 = vpop.xlane.xlu0 %778
        %780 = vadd.xlane.f32.xlu0 %v683
        %v781 = vpop.xlane.xlu0 %780
        %782 = vadd.xlane.f32.xlu0 %v684
        %v783 = vpop.xlane.xlu0 %782
        %784 = vadd.xlane.f32.xlu0 %v685
        %v785 = vpop.xlane.xlu0 %784
        %786 = vadd.xlane.f32.xlu0 %v686
        %v787 = vpop.xlane.xlu0 %786
        %788 = vadd.xlane.f32.xlu0 %v687
        %v789 = vpop.xlane.xlu0 %788
        %790 = vadd.xlane.f32.xlu0 %v688
        %v791 = vpop.xlane.xlu0 %790
        %792 = vadd.xlane.f32.xlu0 %v689
        %v793 = vpop.xlane.xlu0 %792
        %794 = vadd.xlane.f32.xlu0 %v690
        %v795 = vpop.xlane.xlu0 %794
        %796 = vadd.xlane.f32.xlu0 %v691
        %v797 = vpop.xlane.xlu0 %796
        %798 = vadd.xlane.f32.xlu0 %v692
        %v799 = vpop.xlane.xlu0 %798
        %800 = vadd.xlane.f32.xlu0 %v693
        %v801 = vpop.xlane.xlu0 %800
        %802 = vadd.xlane.f32.xlu0 %v694
        %v803 = vpop.xlane.xlu0 %802
        %804 = vadd.xlane.f32.xlu0 %v695
        %v805 = vpop.xlane.xlu0 %804
        %806 = vadd.xlane.f32.xlu0 %v696
        %v807 = vpop.xlane.xlu0 %806
        %808 = vadd.xlane.f32.xlu0 %v697
        %v809 = vpop.xlane.xlu0 %808
        %810 = vadd.xlane.f32.xlu0 %v698
        %v811 = vpop.xlane.xlu0 %810
        %812 = vadd.xlane.f32.xlu0 %v699
        %v813 = vpop.xlane.xlu0 %812
        %814 = vadd.xlane.f32.xlu0 %v700
        %v815 = vpop.xlane.xlu0 %814
        %816 = vadd.xlane.f32.xlu0 %v701
        %v817 = vpop.xlane.xlu0 %816
        %818 = vadd.xlane.f32.xlu0 %v702
        %v819 = vpop.xlane.xlu0 %818
        %820 = vadd.xlane.f32.xlu0 %v703
        %v821 = vpop.xlane.xlu0 %820
        %822 = vadd.xlane.f32.xlu0 %v704
        %v823 = vpop.xlane.xlu0 %822
        %824 = vadd.xlane.f32.xlu0 %v705
        %v825 = vpop.xlane.xlu0 %824
        %826 = vadd.xlane.f32.xlu0 %v706
        %v827 = vpop.xlane.xlu0 %826
        %828 = vadd.xlane.f32.xlu0 %v707
        %v829 = vpop.xlane.xlu0 %828
        %830 = vadd.xlane.f32.xlu0 %v708
        %v831 = vpop.xlane.xlu0 %830
        %832 = vadd.xlane.f32.xlu0 %v709
        %v833 = vpop.xlane.xlu0 %832
        %834 = vadd.xlane.f32.xlu0 %v710
        %v835 = vpop.xlane.xlu0 %834
        %836 = vadd.xlane.f32.xlu0 %v711
        %v837 = vpop.xlane.xlu0 %836
        %838 = vadd.xlane.f32.xlu0 %v712
        %v839 = vpop.xlane.xlu0 %838
        %840 = vadd.xlane.f32.xlu0 %v713
        %v841 = vpop.xlane.xlu0 %840
        %v842 = vmul.f32 %v715, %v585
        %v843 = vmul.f32 %v717, %v585
        %v844 = vmul.f32 %v719, %v585
        %v845 = vmul.f32 %v721, %v585
        %v846 = vmul.f32 %v723, %v585
        %v847 = vmul.f32 %v725, %v585
        %v848 = vmul.f32 %v727, %v585
        %v849 = vmul.f32 %v729, %v585
        %v850 = vmul.f32 %v731, %v585
        %v851 = vmul.f32 %v733, %v585
        %v852 = vmul.f32 %v735, %v585
        %v853 = vmul.f32 %v737, %v585
        %v854 = vmul.f32 %v739, %v585
        %v855 = vmul.f32 %v741, %v585
        %v856 = vmul.f32 %v743, %v585
        %v857 = vmul.f32 %v745, %v585
        %v858 = vmul.f32 %v747, %v585
        %v859 = vmul.f32 %v749, %v585
        %v860 = vmul.f32 %v751, %v585
        %v861 = vmul.f32 %v753, %v585
        %v862 = vmul.f32 %v755, %v585
        %v863 = vmul.f32 %v757, %v585
        %v864 = vmul.f32 %v759, %v585
        %v865 = vmul.f32 %v761, %v585
        %v866 = vmul.f32 %v763, %v585
        %v867 = vmul.f32 %v765, %v585
        %v868 = vmul.f32 %v767, %v585
        %v869 = vmul.f32 %v769, %v585
        %v870 = vmul.f32 %v771, %v585
        %v871 = vmul.f32 %v773, %v585
        %v872 = vmul.f32 %v775, %v585
        %v873 = vmul.f32 %v777, %v585
        %v874 = vmul.f32 %v779, %v585
        %v875 = vmul.f32 %v781, %v585
        %v876 = vmul.f32 %v783, %v585
        %v877 = vmul.f32 %v785, %v585
        %v878 = vmul.f32 %v787, %v585
        %v879 = vmul.f32 %v789, %v585
        %v880 = vmul.f32 %v791, %v585
        %v881 = vmul.f32 %v793, %v585
        %v882 = vmul.f32 %v795, %v585
        %v883 = vmul.f32 %v797, %v585
        %v884 = vmul.f32 %v799, %v585
        %v885 = vmul.f32 %v801, %v585
        %v886 = vmul.f32 %v803, %v585
        %v887 = vmul.f32 %v805, %v585
        %v888 = vmul.f32 %v807, %v585
        %v889 = vmul.f32 %v809, %v585
        %v890 = vmul.f32 %v811, %v585
        %v891 = vmul.f32 %v813, %v585
        %v892 = vmul.f32 %v815, %v585
        %v893 = vmul.f32 %v817, %v585
        %v894 = vmul.f32 %v819, %v585
        %v895 = vmul.f32 %v821, %v585
        %v896 = vmul.f32 %v823, %v585
        %v897 = vmul.f32 %v825, %v585
        %v898 = vmul.f32 %v827, %v585
        %v899 = vmul.f32 %v829, %v585
        %v900 = vmul.f32 %v831, %v585
        %v901 = vmul.f32 %v833, %v585
        %v902 = vmul.f32 %v835, %v585
        %v903 = vmul.f32 %v837, %v585
        %v904 = vmul.f32 %v839, %v585
        %v905 = vmul.f32 %v841, %v585
        %v906 = vmul.f32 %v586, %v586
        %v907 = vmul.f32 %v587, %v587
        %v908 = vmul.f32 %v588, %v588
        %v909 = vmul.f32 %v589, %v589
        %v910 = vmul.f32 %v590, %v590
        %v911 = vmul.f32 %v591, %v591
        %v912 = vmul.f32 %v592, %v592
        %v913 = vmul.f32 %v593, %v593
        %v914 = vmul.f32 %v594, %v594
        %v915 = vmul.f32 %v595, %v595
        %v916 = vmul.f32 %v596, %v596
        %v917 = vmul.f32 %v597, %v597
        %v918 = vmul.f32 %v598, %v598
        %v919 = vmul.f32 %v599, %v599
        %v920 = vmul.f32 %v600, %v600
        %v921 = vmul.f32 %v601, %v601
        %v922 = vmul.f32 %v602, %v602
        %v923 = vmul.f32 %v603, %v603
        %v924 = vmul.f32 %v604, %v604
        %v925 = vmul.f32 %v605, %v605
        %v926 = vmul.f32 %v606, %v606
        %v927 = vmul.f32 %v607, %v607
        %v928 = vmul.f32 %v608, %v608
        %v929 = vmul.f32 %v609, %v609
        %v930 = vmul.f32 %v610, %v610
        %v931 = vmul.f32 %v611, %v611
        %v932 = vmul.f32 %v612, %v612
        %v933 = vmul.f32 %v613, %v613
        %v934 = vmul.f32 %v614, %v614
        %v935 = vmul.f32 %v615, %v615
        %v936 = vmul.f32 %v616, %v616
        %v937 = vmul.f32 %v617, %v617
        %v938 = vmul.f32 %v618, %v618
        %v939 = vmul.f32 %v619, %v619
        %v940 = vmul.f32 %v620, %v620
        %v941 = vmul.f32 %v621, %v621
        %v942 = vmul.f32 %v622, %v622
        %v943 = vmul.f32 %v623, %v623
        %v944 = vmul.f32 %v624, %v624
        %v945 = vmul.f32 %v625, %v625
        %v946 = vmul.f32 %v626, %v626
        %v947 = vmul.f32 %v627, %v627
        %v948 = vmul.f32 %v628, %v628
        %v949 = vmul.f32 %v629, %v629
        %v950 = vmul.f32 %v630, %v630
        %v951 = vmul.f32 %v631, %v631
        %v952 = vmul.f32 %v632, %v632
        %v953 = vmul.f32 %v633, %v633
        %v954 = vmul.f32 %v634, %v634
        %v955 = vmul.f32 %v635, %v635
        %v956 = vmul.f32 %v636, %v636
        %v957 = vmul.f32 %v637, %v637
        %v958 = vmul.f32 %v638, %v638
        %v959 = vmul.f32 %v639, %v639
        %v960 = vmul.f32 %v640, %v640
        %v961 = vmul.f32 %v641, %v641
        %v962 = vmul.f32 %v642, %v642
        %v963 = vmul.f32 %v643, %v643
        %v964 = vmul.f32 %v644, %v644
        %v965 = vmul.f32 %v645, %v645
        %v966 = vmul.f32 %v646, %v646
        %v967 = vmul.f32 %v647, %v647
        %v968 = vmul.f32 %v648, %v648
        %v969 = vmul.f32 %v649, %v649
        %v970 = vsub.f32 %v842, %v906
        %v971 = vsub.f32 %v843, %v907
        %v972 = vsub.f32 %v844, %v908
        %v973 = vsub.f32 %v845, %v909
        %v974 = vsub.f32 %v846, %v910
        %v975 = vsub.f32 %v847, %v911
        %v976 = vsub.f32 %v848, %v912
        %v977 = vsub.f32 %v849, %v913
        %v978 = vsub.f32 %v850, %v914
        %v979 = vsub.f32 %v851, %v915
        %v980 = vsub.f32 %v852, %v916
        %v981 = vsub.f32 %v853, %v917
        %v982 = vsub.f32 %v854, %v918
        %v983 = vsub.f32 %v855, %v919
        %v984 = vsub.f32 %v856, %v920
        %v985 = vsub.f32 %v857, %v921
        %v986 = vsub.f32 %v858, %v922
        %v987 = vsub.f32 %v859, %v923
        %v988 = vsub.f32 %v860, %v924
        %v989 = vsub.f32 %v861, %v925
        %v990 = vsub.f32 %v862, %v926
        %v991 = vsub.f32 %v863, %v927
        %v992 = vsub.f32 %v864, %v928
        %v993 = vsub.f32 %v865, %v929
        %v994 = vsub.f32 %v866, %v930
        %v995 = vsub.f32 %v867, %v931
        %v996 = vsub.f32 %v868, %v932
        %v997 = vsub.f32 %v869, %v933
        %v998 = vsub.f32 %v870, %v934
        %v999 = vsub.f32 %v871, %v935
        %v1000 = vsub.f32 %v872, %v936
        %v1001 = vsub.f32 %v873, %v937
        %v1002 = vsub.f32 %v874, %v938
        %v1003 = vsub.f32 %v875, %v939
        %v1004 = vsub.f32 %v876, %v940
        %v1005 = vsub.f32 %v877, %v941
        %v1006 = vsub.f32 %v878, %v942
        %v1007 = vsub.f32 %v879, %v943
        %v1008 = vsub.f32 %v880, %v944
        %v1009 = vsub.f32 %v881, %v945
        %v1010 = vsub.f32 %v882, %v946
        %v1011 = vsub.f32 %v883, %v947
        %v1012 = vsub.f32 %v884, %v948
        %v1013 = vsub.f32 %v885, %v949
        %v1014 = vsub.f32 %v886, %v950
        %v1015 = vsub.f32 %v887, %v951
        %v1016 = vsub.f32 %v888, %v952
        %v1017 = vsub.f32 %v889, %v953
        %v1018 = vsub.f32 %v890, %v954
        %v1019 = vsub.f32 %v891, %v955
        %v1020 = vsub.f32 %v892, %v956
        %v1021 = vsub.f32 %v893, %v957
        %v1022 = vsub.f32 %v894, %v958
        %v1023 = vsub.f32 %v895, %v959
        %v1024 = vsub.f32 %v896, %v960
        %v1025 = vsub.f32 %v897, %v961
        %v1026 = vsub.f32 %v898, %v962
        %v1027 = vsub.f32 %v899, %v963
        %v1028 = vsub.f32 %v900, %v964
        %v1029 = vsub.f32 %v901, %v965
        %v1030 = vsub.f32 %v902, %v966
        %v1031 = vsub.f32 %v903, %v967
        %v1032 = vsub.f32 %v904, %v968
        %v1033 = vsub.f32 %v905, %v969
        %v1034 = vsub.f32 %v393, %v586
        %v1035 = vsub.f32 %v394, %v587
        %v1036 = vsub.f32 %v395, %v588
        %v1037 = vsub.f32 %v396, %v589
        %v1038 = vsub.f32 %v397, %v590
        %v1039 = vsub.f32 %v398, %v591
        %v1040 = vsub.f32 %v399, %v592
        %v1041 = vsub.f32 %v400, %v593
        %v1042 = vsub.f32 %v401, %v594
        %v1043 = vsub.f32 %v402, %v595
        %v1044 = vsub.f32 %v403, %v596
        %v1045 = vsub.f32 %v404, %v597
        %v1046 = vsub.f32 %v405, %v598
        %v1047 = vsub.f32 %v406, %v599
        %v1048 = vsub.f32 %v407, %v600
        %v1049 = vsub.f32 %v408, %v601
        %v1050 = vsub.f32 %v409, %v602
        %v1051 = vsub.f32 %v410, %v603
        %v1052 = vsub.f32 %v411, %v604
        %v1053 = vsub.f32 %v412, %v605
        %v1054 = vsub.f32 %v413, %v606
        %v1055 = vsub.f32 %v414, %v607
        %v1056 = vsub.f32 %v415, %v608
        %v1057 = vsub.f32 %v416, %v609
        %v1058 = vsub.f32 %v417, %v610
        %v1059 = vsub.f32 %v418, %v611
        %v1060 = vsub.f32 %v419, %v612
        %v1061 = vsub.f32 %v420, %v613
        %v1062 = vsub.f32 %v421, %v614
        %v1063 = vsub.f32 %v422, %v615
        %v1064 = vsub.f32 %v423, %v616
        %v1065 = vsub.f32 %v424, %v617
        %v1066 = vsub.f32 %v425, %v618
        %v1067 = vsub.f32 %v426, %v619
        %v1068 = vsub.f32 %v427, %v620
        %v1069 = vsub.f32 %v428, %v621
        %v1070 = vsub.f32 %v429, %v622
        %v1071 = vsub.f32 %v430, %v623
        %v1072 = vsub.f32 %v431, %v624
        %v1073 = vsub.f32 %v432, %v625
        %v1074 = vsub.f32 %v433, %v626
        %v1075 = vsub.f32 %v434, %v627
        %v1076 = vsub.f32 %v435, %v628
        %v1077 = vsub.f32 %v436, %v629
        %v1078 = vsub.f32 %v437, %v630
        %v1079 = vsub.f32 %v438, %v631
        %v1080 = vsub.f32 %v439, %v632
        %v1081 = vsub.f32 %v440, %v633
        %v1082 = vsub.f32 %v441, %v634
        %v1083 = vsub.f32 %v442, %v635
        %v1084 = vsub.f32 %v443, %v636
        %v1085 = vsub.f32 %v444, %v637
        %v1086 = vsub.f32 %v445, %v638
        %v1087 = vsub.f32 %v446, %v639
        %v1088 = vsub.f32 %v447, %v640
        %v1089 = vsub.f32 %v448, %v641
        %v1090 = vsub.f32 %v449, %v642
        %v1091 = vsub.f32 %v450, %v643
        %v1092 = vsub.f32 %v451, %v644
        %v1093 = vsub.f32 %v452, %v645
        %v1094 = vsub.f32 %v453, %v646
        %v1095 = vsub.f32 %v454, %v647
        %v1096 = vsub.f32 %v455, %v648
        %v1097 = vsub.f32 %v456, %v649
        %v1098 = vadd.f32 %v970, 1e-06
        %v1099 = vadd.f32 %v971, 1e-06
        %v1100 = vadd.f32 %v972, 1e-06
        %v1101 = vadd.f32 %v973, 1e-06
        %v1102 = vadd.f32 %v974, 1e-06
        %v1103 = vadd.f32 %v975, 1e-06
        %v1104 = vadd.f32 %v976, 1e-06
        %v1105 = vadd.f32 %v977, 1e-06
        %v1106 = vadd.f32 %v978, 1e-06
        %v1107 = vadd.f32 %v979, 1e-06
        %v1108 = vadd.f32 %v980, 1e-06
        %v1109 = vadd.f32 %v981, 1e-06
        %v1110 = vadd.f32 %v982, 1e-06
        %v1111 = vadd.f32 %v983, 1e-06
        %v1112 = vadd.f32 %v984, 1e-06
        %v1113 = vadd.f32 %v985, 1e-06
        %v1114 = vadd.f32 %v986, 1e-06
        %v1115 = vadd.f32 %v987, 1e-06
        %v1116 = vadd.f32 %v988, 1e-06
        %v1117 = vadd.f32 %v989, 1e-06
        %v1118 = vadd.f32 %v990, 1e-06
        %v1119 = vadd.f32 %v991, 1e-06
        %v1120 = vadd.f32 %v992, 1e-06
        %v1121 = vadd.f32 %v993, 1e-06
        %v1122 = vadd.f32 %v994, 1e-06
        %v1123 = vadd.f32 %v995, 1e-06
        %v1124 = vadd.f32 %v996, 1e-06
        %v1125 = vadd.f32 %v997, 1e-06
        %v1126 = vadd.f32 %v998, 1e-06
        %v1127 = vadd.f32 %v999, 1e-06
        %v1128 = vadd.f32 %v1000, 1e-06
        %v1129 = vadd.f32 %v1001, 1e-06
        %v1130 = vadd.f32 %v1002, 1e-06
        %v1131 = vadd.f32 %v1003, 1e-06
        %v1132 = vadd.f32 %v1004, 1e-06
        %v1133 = vadd.f32 %v1005, 1e-06
        %v1134 = vadd.f32 %v1006, 1e-06
        %v1135 = vadd.f32 %v1007, 1e-06
        %v1136 = vadd.f32 %v1008, 1e-06
        %v1137 = vadd.f32 %v1009, 1e-06
        %v1138 = vadd.f32 %v1010, 1e-06
        %v1139 = vadd.f32 %v1011, 1e-06
        %v1140 = vadd.f32 %v1012, 1e-06
        %v1141 = vadd.f32 %v1013, 1e-06
        %v1142 = vadd.f32 %v1014, 1e-06
        %v1143 = vadd.f32 %v1015, 1e-06
        %v1144 = vadd.f32 %v1016, 1e-06
        %v1145 = vadd.f32 %v1017, 1e-06
        %v1146 = vadd.f32 %v1018, 1e-06
        %v1147 = vadd.f32 %v1019, 1e-06
        %v1148 = vadd.f32 %v1020, 1e-06
        %v1149 = vadd.f32 %v1021, 1e-06
        %v1150 = vadd.f32 %v1022, 1e-06
        %v1151 = vadd.f32 %v1023, 1e-06
        %v1152 = vadd.f32 %v1024, 1e-06
        %v1153 = vadd.f32 %v1025, 1e-06
        %v1154 = vadd.f32 %v1026, 1e-06
        %v1155 = vadd.f32 %v1027, 1e-06
        %v1156 = vadd.f32 %v1028, 1e-06
        %v1157 = vadd.f32 %v1029, 1e-06
        %v1158 = vadd.f32 %v1030, 1e-06
        %v1159 = vadd.f32 %v1031, 1e-06
        %v1160 = vadd.f32 %v1032, 1e-06
        %v1161 = vadd.f32 %v1033, 1e-06
        %v1162 = vrsqrt.pop %v1098
        %v1163 = vrsqrt.pop %v1099
        %v1164 = vrsqrt.pop %v1100
        %v1165 = vrsqrt.pop %v1101
        %v1166 = vrsqrt.pop %v1102
        %v1167 = vrsqrt.pop %v1103
        %v1168 = vrsqrt.pop %v1104
        %v1169 = vrsqrt.pop %v1105
        %v1170 = vrsqrt.pop %v1106
        %v1171 = vrsqrt.pop %v1107
        %v1172 = vrsqrt.pop %v1108
        %v1173 = vrsqrt.pop %v1109
        %v1174 = vrsqrt.pop %v1110
        %v1175 = vrsqrt.pop %v1111
        %v1176 = vrsqrt.pop %v1112
        %v1177 = vrsqrt.pop %v1113
        %v1178 = vrsqrt.pop %v1114
        %v1179 = vrsqrt.pop %v1115
        %v1180 = vrsqrt.pop %v1116
        %v1181 = vrsqrt.pop %v1117
        %v1182 = vrsqrt.pop %v1118
        %v1183 = vrsqrt.pop %v1119
        %v1184 = vrsqrt.pop %v1120
        %v1185 = vrsqrt.pop %v1121
        %v1186 = vrsqrt.pop %v1122
        %v1187 = vrsqrt.pop %v1123
        %v1188 = vrsqrt.pop %v1124
        %v1189 = vrsqrt.pop %v1125
        %v1190 = vrsqrt.pop %v1126
        %v1191 = vrsqrt.pop %v1127
        %v1192 = vrsqrt.pop %v1128
        %v1193 = vrsqrt.pop %v1129
        %v1194 = vrsqrt.pop %v1130
        %v1195 = vrsqrt.pop %v1131
        %v1196 = vrsqrt.pop %v1132
        %v1197 = vrsqrt.pop %v1133
        %v1198 = vrsqrt.pop %v1134
        %v1199 = vrsqrt.pop %v1135
        %v1200 = vrsqrt.pop %v1136
        %v1201 = vrsqrt.pop %v1137
        %v1202 = vrsqrt.pop %v1138
        %v1203 = vrsqrt.pop %v1139
        %v1204 = vrsqrt.pop %v1140
        %v1205 = vrsqrt.pop %v1141
        %v1206 = vrsqrt.pop %v1142
        %v1207 = vrsqrt.pop %v1143
        %v1208 = vrsqrt.pop %v1144
        %v1209 = vrsqrt.pop %v1145
        %v1210 = vrsqrt.pop %v1146
        %v1211 = vrsqrt.pop %v1147
        %v1212 = vrsqrt.pop %v1148
        %v1213 = vrsqrt.pop %v1149
        %v1214 = vrsqrt.pop %v1150
        %v1215 = vrsqrt.pop %v1151
        %v1216 = vrsqrt.pop %v1152
        %v1217 = vrsqrt.pop %v1153
        %v1218 = vrsqrt.pop %v1154
        %v1219 = vrsqrt.pop %v1155
        %v1220 = vrsqrt.pop %v1156
        %v1221 = vrsqrt.pop %v1157
        %v1222 = vrsqrt.pop %v1158
        %v1223 = vrsqrt.pop %v1159
        %v1224 = vrsqrt.pop %v1160
        %v1225 = vrsqrt.pop %v1161
        %v1226 = vmul.f32 %v1034, %v1162
        %v1227 = vmul.f32 %v1035, %v1163
        %v1228 = vmul.f32 %v1036, %v1164
        %v1229 = vmul.f32 %v1037, %v1165
        %v1230 = vmul.f32 %v1038, %v1166
        %v1231 = vmul.f32 %v1039, %v1167
        %v1232 = vmul.f32 %v1040, %v1168
        %v1233 = vmul.f32 %v1041, %v1169
        %v1234 = vmul.f32 %v1042, %v1170
        %v1235 = vmul.f32 %v1043, %v1171
        %v1236 = vmul.f32 %v1044, %v1172
        %v1237 = vmul.f32 %v1045, %v1173
        %v1238 = vmul.f32 %v1046, %v1174
        %v1239 = vmul.f32 %v1047, %v1175
        %v1240 = vmul.f32 %v1048, %v1176
        %v1241 = vmul.f32 %v1049, %v1177
        %v1242 = vmul.f32 %v1050, %v1178
        %v1243 = vmul.f32 %v1051, %v1179
        %v1244 = vmul.f32 %v1052, %v1180
        %v1245 = vmul.f32 %v1053, %v1181
        %v1246 = vmul.f32 %v1054, %v1182
        %v1247 = vmul.f32 %v1055, %v1183
        %v1248 = vmul.f32 %v1056, %v1184
        %v1249 = vmul.f32 %v1057, %v1185
        %v1250 = vmul.f32 %v1058, %v1186
        %v1251 = vmul.f32 %v1059, %v1187
        %v1252 = vmul.f32 %v1060, %v1188
        %v1253 = vmul.f32 %v1061, %v1189
        %v1254 = vmul.f32 %v1062, %v1190
        %v1255 = vmul.f32 %v1063, %v1191
        %v1256 = vmul.f32 %v1064, %v1192
        %v1257 = vmul.f32 %v1065, %v1193
        %v1258 = vmul.f32 %v1066, %v1194
        %v1259 = vmul.f32 %v1067, %v1195
        %v1260 = vmul.f32 %v1068, %v1196
        %v1261 = vmul.f32 %v1069, %v1197
        %v1262 = vmul.f32 %v1070, %v1198
        %v1263 = vmul.f32 %v1071, %v1199
        %v1264 = vmul.f32 %v1072, %v1200
        %v1265 = vmul.f32 %v1073, %v1201
        %v1266 = vmul.f32 %v1074, %v1202
        %v1267 = vmul.f32 %v1075, %v1203
        %v1268 = vmul.f32 %v1076, %v1204
        %v1269 = vmul.f32 %v1077, %v1205
        %v1270 = vmul.f32 %v1078, %v1206
        %v1271 = vmul.f32 %v1079, %v1207
        %v1272 = vmul.f32 %v1080, %v1208
        %v1273 = vmul.f32 %v1081, %v1209
        %v1274 = vmul.f32 %v1082, %v1210
        %v1275 = vmul.f32 %v1083, %v1211
        %v1276 = vmul.f32 %v1084, %v1212
        %v1277 = vmul.f32 %v1085, %v1213
        %v1278 = vmul.f32 %v1086, %v1214
        %v1279 = vmul.f32 %v1087, %v1215
        %v1280 = vmul.f32 %v1088, %v1216
        %v1281 = vmul.f32 %v1089, %v1217
        %v1282 = vmul.f32 %v1090, %v1218
        %v1283 = vmul.f32 %v1091, %v1219
        %v1284 = vmul.f32 %v1092, %v1220
        %v1285 = vmul.f32 %v1093, %v1221
        %v1286 = vmul.f32 %v1094, %v1222
        %v1287 = vmul.f32 %v1095, %v1223
        %v1288 = vmul.f32 %v1096, %v1224
        %v1289 = vmul.f32 %v1097, %v1225
        %v1290 = vld [vmem:[%s1] sm:$0x1]
        %v1292 = vlaneseq
        %v1293 = vshrl.u32 %v1292, 7
        %v1294 = vsub.s32 0, %v1293
        %v1295 = vrot.slane %v1290, %v1294
        %v1297 = vmul.f32 %v1226, %v1295
        %v1298 = vmul.f32 %v1227, %v1295
        %v1299 = vmul.f32 %v1228, %v1295
        %v1300 = vmul.f32 %v1229, %v1295
        %v1301 = vmul.f32 %v1230, %v1295
        %v1302 = vmul.f32 %v1231, %v1295
        %v1303 = vmul.f32 %v1232, %v1295
        %v1304 = vmul.f32 %v1233, %v1295
        %v1305 = vmul.f32 %v1234, %v1295
        %v1306 = vmul.f32 %v1235, %v1295
        %v1307 = vmul.f32 %v1236, %v1295
        %v1308 = vmul.f32 %v1237, %v1295
        %v1309 = vmul.f32 %v1238, %v1295
        %v1310 = vmul.f32 %v1239, %v1295
        %v1311 = vmul.f32 %v1240, %v1295
        %v1312 = vmul.f32 %v1241, %v1295
        %v1313 = vmul.f32 %v1242, %v1295
        %v1314 = vmul.f32 %v1243, %v1295
        %v1315 = vmul.f32 %v1244, %v1295
        %v1316 = vmul.f32 %v1245, %v1295
        %v1317 = vmul.f32 %v1246, %v1295
        %v1318 = vmul.f32 %v1247, %v1295
        %v1319 = vmul.f32 %v1248, %v1295
        %v1320 = vmul.f32 %v1249, %v1295
        %v1321 = vmul.f32 %v1250, %v1295
        %v1322 = vmul.f32 %v1251, %v1295
        %v1323 = vmul.f32 %v1252, %v1295
        %v1324 = vmul.f32 %v1253, %v1295
        %v1325 = vmul.f32 %v1254, %v1295
        %v1326 = vmul.f32 %v1255, %v1295
        %v1327 = vmul.f32 %v1256, %v1295
        %v1328 = vmul.f32 %v1257, %v1295
        %v1329 = vmul.f32 %v1258, %v1295
        %v1330 = vmul.f32 %v1259, %v1295
        %v1331 = vmul.f32 %v1260, %v1295
        %v1332 = vmul.f32 %v1261, %v1295
        %v1333 = vmul.f32 %v1262, %v1295
        %v1334 = vmul.f32 %v1263, %v1295
        %v1335 = vmul.f32 %v1264, %v1295
        %v1336 = vmul.f32 %v1265, %v1295
        %v1337 = vmul.f32 %v1266, %v1295
        %v1338 = vmul.f32 %v1267, %v1295
        %v1339 = vmul.f32 %v1268, %v1295
        %v1340 = vmul.f32 %v1269, %v1295
        %v1341 = vmul.f32 %v1270, %v1295
        %v1342 = vmul.f32 %v1271, %v1295
        %v1343 = vmul.f32 %v1272, %v1295
        %v1344 = vmul.f32 %v1273, %v1295
        %v1345 = vmul.f32 %v1274, %v1295
        %v1346 = vmul.f32 %v1275, %v1295
        %v1347 = vmul.f32 %v1276, %v1295
        %v1348 = vmul.f32 %v1277, %v1295
        %v1349 = vmul.f32 %v1278, %v1295
        %v1350 = vmul.f32 %v1279, %v1295
        %v1351 = vmul.f32 %v1280, %v1295
        %v1352 = vmul.f32 %v1281, %v1295
        %v1353 = vmul.f32 %v1282, %v1295
        %v1354 = vmul.f32 %v1283, %v1295
        %v1355 = vmul.f32 %v1284, %v1295
        %v1356 = vmul.f32 %v1285, %v1295
        %v1357 = vmul.f32 %v1286, %v1295
        %v1358 = vmul.f32 %v1287, %v1295
        %v1359 = vmul.f32 %v1288, %v1295
        %v1360 = vmul.f32 %v1289, %v1295
        %v1361 = vld [vmem:[%s2] sm:$0x1]
        %v1363 = vlaneseq
        %v1364 = vshrl.u32 %v1363, 7
        %v1365 = vsub.s32 0, %v1364
        %v1366 = vrot.slane %v1361, %v1365
        %v1368 = vadd.f32 %v1297, %v1366
        %v1369 = vadd.f32 %v1298, %v1366
        %v1370 = vadd.f32 %v1299, %v1366
        %v1371 = vadd.f32 %v1300, %v1366
        %v1372 = vadd.f32 %v1301, %v1366
        %v1373 = vadd.f32 %v1302, %v1366
        %v1374 = vadd.f32 %v1303, %v1366
        %v1375 = vadd.f32 %v1304, %v1366
        %v1376 = vadd.f32 %v1305, %v1366
        %v1377 = vadd.f32 %v1306, %v1366
        %v1378 = vadd.f32 %v1307, %v1366
        %v1379 = vadd.f32 %v1308, %v1366
        %v1380 = vadd.f32 %v1309, %v1366
        %v1381 = vadd.f32 %v1310, %v1366
        %v1382 = vadd.f32 %v1311, %v1366
        %v1383 = vadd.f32 %v1312, %v1366
        %v1384 = vadd.f32 %v1313, %v1366
        %v1385 = vadd.f32 %v1314, %v1366
        %v1386 = vadd.f32 %v1315, %v1366
        %v1387 = vadd.f32 %v1316, %v1366
        %v1388 = vadd.f32 %v1317, %v1366
        %v1389 = vadd.f32 %v1318, %v1366
        %v1390 = vadd.f32 %v1319, %v1366
        %v1391 = vadd.f32 %v1320, %v1366
        %v1392 = vadd.f32 %v1321, %v1366
        %v1393 = vadd.f32 %v1322, %v1366
        %v1394 = vadd.f32 %v1323, %v1366
        %v1395 = vadd.f32 %v1324, %v1366
        %v1396 = vadd.f32 %v1325, %v1366
        %v1397 = vadd.f32 %v1326, %v1366
        %v1398 = vadd.f32 %v1327, %v1366
        %v1399 = vadd.f32 %v1328, %v1366
        %v1400 = vadd.f32 %v1329, %v1366
        %v1401 = vadd.f32 %v1330, %v1366
        %v1402 = vadd.f32 %v1331, %v1366
        %v1403 = vadd.f32 %v1332, %v1366
        %v1404 = vadd.f32 %v1333, %v1366
        %v1405 = vadd.f32 %v1334, %v1366
        %v1406 = vadd.f32 %v1335, %v1366
        %v1407 = vadd.f32 %v1336, %v1366
        %v1408 = vadd.f32 %v1337, %v1366
        %v1409 = vadd.f32 %v1338, %v1366
        %v1410 = vadd.f32 %v1339, %v1366
        %v1411 = vadd.f32 %v1340, %v1366
        %v1412 = vadd.f32 %v1341, %v1366
        %v1413 = vadd.f32 %v1342, %v1366
        %v1414 = vadd.f32 %v1343, %v1366
        %v1415 = vadd.f32 %v1344, %v1366
        %v1416 = vadd.f32 %v1345, %v1366
        %v1417 = vadd.f32 %v1346, %v1366
        %v1418 = vadd.f32 %v1347, %v1366
        %v1419 = vadd.f32 %v1348, %v1366
        %v1420 = vadd.f32 %v1349, %v1366
        %v1421 = vadd.f32 %v1350, %v1366
        %v1422 = vadd.f32 %v1351, %v1366
        %v1423 = vadd.f32 %v1352, %v1366
        %v1424 = vadd.f32 %v1353, %v1366
        %v1425 = vadd.f32 %v1354, %v1366
        %v1426 = vadd.f32 %v1355, %v1366
        %v1427 = vadd.f32 %v1356, %v1366
        %v1428 = vadd.f32 %v1357, %v1366
        %v1429 = vadd.f32 %v1358, %v1366
        %v1430 = vadd.f32 %v1359, %v1366
        %v1431 = vadd.f32 %v1360, %v1366
        %v1432 = vpack.c.bf16 %v1369, %v1368
        %v1433 = vpack.c.bf16 %v1371, %v1370
        %v1434 = vpack.c.bf16 %v1373, %v1372
        %v1435 = vpack.c.bf16 %v1375, %v1374
        %v1436 = vpack.c.bf16 %v1377, %v1376
        %v1437 = vpack.c.bf16 %v1379, %v1378
        %v1438 = vpack.c.bf16 %v1381, %v1380
        %v1439 = vpack.c.bf16 %v1383, %v1382
        %v1440 = vpack.c.bf16 %v1385, %v1384
        %v1441 = vpack.c.bf16 %v1387, %v1386
        %v1442 = vpack.c.bf16 %v1389, %v1388
        %v1443 = vpack.c.bf16 %v1391, %v1390
        %v1444 = vpack.c.bf16 %v1393, %v1392
        %v1445 = vpack.c.bf16 %v1395, %v1394
        %v1446 = vpack.c.bf16 %v1397, %v1396
        %v1447 = vpack.c.bf16 %v1399, %v1398
        %v1448 = vpack.c.bf16 %v1401, %v1400
        %v1449 = vpack.c.bf16 %v1403, %v1402
        %v1450 = vpack.c.bf16 %v1405, %v1404
        %v1451 = vpack.c.bf16 %v1407, %v1406
        %v1452 = vpack.c.bf16 %v1409, %v1408
        %v1453 = vpack.c.bf16 %v1411, %v1410
        %v1454 = vpack.c.bf16 %v1413, %v1412
        %v1455 = vpack.c.bf16 %v1415, %v1414
        %v1456 = vpack.c.bf16 %v1417, %v1416
        %v1457 = vpack.c.bf16 %v1419, %v1418
        %v1458 = vpack.c.bf16 %v1421, %v1420
        %v1459 = vpack.c.bf16 %v1423, %v1422
        %v1460 = vpack.c.bf16 %v1425, %v1424
        %v1461 = vpack.c.bf16 %v1427, %v1426
        %v1462 = vpack.c.bf16 %v1429, %v1428
        %v1463 = vpack.c.bf16 %v1431, %v1430
        %v1464 = vld [vmem:[#allocation5] sm:$0xff]
        %v1465 = vld [vmem:[#allocation5 + $0x8] sm:$0xff]
        %v1466 = vld [vmem:[#allocation5 + $0x10] sm:$0xff]
        %v1467 = vld [vmem:[#allocation5 + $0x18] sm:$0xff]
        %v1468 = vld [vmem:[#allocation5 + $0x20] sm:$0xff]
        %v1469 = vld [vmem:[#allocation5 + $0x28] sm:$0xff]
        %v1470 = vld [vmem:[#allocation5 + $0x30] sm:$0xff]
        %v1471 = vld [vmem:[#allocation5 + $0x38] sm:$0xff]
        %v1472 = vld [vmem:[#allocation5 + $0x40] sm:$0xff]
        %v1473 = vld [vmem:[#allocation5 + $0x48] sm:$0xff]
        %v1474 = vld [vmem:[#allocation5 + $0x50] sm:$0xff]
        %v1475 = vld [vmem:[#allocation5 + $0x58] sm:$0xff]
        %v1476 = vld [vmem:[#allocation5 + $0x60] sm:$0xff]
        %v1477 = vld [vmem:[#allocation5 + $0x68] sm:$0xff]
        %v1478 = vld [vmem:[#allocation5 + $0x70] sm:$0xff]
        %v1479 = vld [vmem:[#allocation5 + $0x78] sm:$0xff]
        %v1480 = vld [vmem:[#allocation5 + $0x80] sm:$0xff]
        %v1481 = vld [vmem:[#allocation5 + $0x88] sm:$0xff]
        %v1482 = vld [vmem:[#allocation5 + $0x90] sm:$0xff]
        %v1483 = vld [vmem:[#allocation5 + $0x98] sm:$0xff]
        %v1484 = vld [vmem:[#allocation5 + $0xa0] sm:$0xff]
        %v1485 = vld [vmem:[#allocation5 + $0xa8] sm:$0xff]
        %v1486 = vld [vmem:[#allocation5 + $0xb0] sm:$0xff]
        %v1487 = vld [vmem:[#allocation5 + $0xb8] sm:$0xff]
        %v1488 = vld [vmem:[#allocation5 + $0xc0] sm:$0xff]
        %v1489 = vld [vmem:[#allocation5 + $0xc8] sm:$0xff]
        %v1490 = vld [vmem:[#allocation5 + $0xd0] sm:$0xff]
        %v1491 = vld [vmem:[#allocation5 + $0xd8] sm:$0xff]
        %v1492 = vld [vmem:[#allocation5 + $0xe0] sm:$0xff]
        %v1493 = vld [vmem:[#allocation5 + $0xe8] sm:$0xff]
        %v1494 = vld [vmem:[#allocation5 + $0xf0] sm:$0xff]
        %v1495 = vld [vmem:[#allocation5 + $0xf8] sm:$0xff]
        %v1496 = vld [vmem:[%s4] sm:$0xf]
        %v1498 = vlaneseq
        %v1499 = vshrl.u32 %v1498, 7
        %v1500 = vsub.s32 0, %v1499
        %v1501 = vrot.slane %v1496, %v1500
        %v1502 = vlaneseq
        %v1503 = vshrl.u32 %v1502, 7
        %v1504 = vsub.s32 1, %v1503
        %v1505 = vrot.slane %v1496, %v1504
        %v1506 = vlaneseq
        %v1507 = vshrl.u32 %v1506, 7
        %v1508 = vsub.s32 2, %v1507
        %v1509 = vrot.slane %v1496, %v1508
        %v1510 = vlaneseq
        %v1511 = vshrl.u32 %v1510, 7
        %v1512 = vsub.s32 3, %v1511
        %v1513 = vrot.slane %v1496, %v1512
        %v1550 = vunpack.c.l.b16 %v1464
        %v1551 = vunpack.c.h.b16 %v1464
        %v1552 = vunpack.c.l.b16 %v1465
        %v1553 = vunpack.c.h.b16 %v1465
        %v1554 = vunpack.c.l.b16 %v1466
        %v1555 = vunpack.c.h.b16 %v1466
        %v1556 = vunpack.c.l.b16 %v1467
        %v1557 = vunpack.c.h.b16 %v1467
        %v1558 = vunpack.c.l.b16 %v1468
        %v1559 = vunpack.c.h.b16 %v1468
        %v1560 = vunpack.c.l.b16 %v1469
        %v1561 = vunpack.c.h.b16 %v1469
        %v1562 = vunpack.c.l.b16 %v1470
        %v1563 = vunpack.c.h.b16 %v1470
        %v1564 = vunpack.c.l.b16 %v1471
        %v1565 = vunpack.c.h.b16 %v1471
        %v1566 = vunpack.c.l.b16 %v1472
        %v1567 = vunpack.c.h.b16 %v1472
        %v1568 = vunpack.c.l.b16 %v1473
        %v1569 = vunpack.c.h.b16 %v1473
        %v1570 = vunpack.c.l.b16 %v1474
        %v1571 = vunpack.c.h.b16 %v1474
        %v1572 = vunpack.c.l.b16 %v1475
        %v1573 = vunpack.c.h.b16 %v1475
        %v1574 = vunpack.c.l.b16 %v1476
        %v1575 = vunpack.c.h.b16 %v1476
        %v1576 = vunpack.c.l.b16 %v1477
        %v1577 = vunpack.c.h.b16 %v1477
        %v1578 = vunpack.c.l.b16 %v1478
        %v1579 = vunpack.c.h.b16 %v1478
        %v1580 = vunpack.c.l.b16 %v1479
        %v1581 = vunpack.c.h.b16 %v1479
        %v1582 = vunpack.c.l.b16 %v1480
        %v1583 = vunpack.c.h.b16 %v1480
        %v1584 = vunpack.c.l.b16 %v1481
        %v1585 = vunpack.c.h.b16 %v1481
        %v1586 = vunpack.c.l.b16 %v1482
        %v1587 = vunpack.c.h.b16 %v1482
        %v1588 = vunpack.c.l.b16 %v1483
        %v1589 = vunpack.c.h.b16 %v1483
        %v1590 = vunpack.c.l.b16 %v1484
        %v1591 = vunpack.c.h.b16 %v1484
        %v1592 = vunpack.c.l.b16 %v1485
        %v1593 = vunpack.c.h.b16 %v1485
        %v1594 = vunpack.c.l.b16 %v1486
        %v1595 = vunpack.c.h.b16 %v1486
        %v1596 = vunpack.c.l.b16 %v1487
        %v1597 = vunpack.c.h.b16 %v1487
        %v1598 = vunpack.c.l.b16 %v1488
        %v1599 = vunpack.c.h.b16 %v1488
        %v1600 = vunpack.c.l.b16 %v1489
        %v1601 = vunpack.c.h.b16 %v1489
        %v1602 = vunpack.c.l.b16 %v1490
        %v1603 = vunpack.c.h.b16 %v1490
        %v1604 = vunpack.c.l.b16 %v1491
        %v1605 = vunpack.c.h.b16 %v1491
        %v1606 = vunpack.c.l.b16 %v1492
        %v1607 = vunpack.c.h.b16 %v1492
        %v1608 = vunpack.c.l.b16 %v1493
        %v1609 = vunpack.c.h.b16 %v1493
        %v1610 = vunpack.c.l.b16 %v1494
        %v1611 = vunpack.c.h.b16 %v1494
        %v1612 = vunpack.c.l.b16 %v1495
        %v1613 = vunpack.c.h.b16 %v1495
        %v1614 = vpack.c.b16 %v1554, %v1550
        %v1615 = vpack.c.b16 %v1555, %v1551
        %v1616 = vpack.c.b16 %v1556, %v1552
        %v1617 = vpack.c.b16 %v1557, %v1553
        %v1618 = vpack.c.b16 %v1562, %v1558
        %v1619 = vpack.c.b16 %v1563, %v1559
        %v1620 = vpack.c.b16 %v1564, %v1560
        %v1621 = vpack.c.b16 %v1565, %v1561
        %v1622 = vpack.c.b16 %v1570, %v1566
        %v1623 = vpack.c.b16 %v1571, %v1567
        %v1624 = vpack.c.b16 %v1572, %v1568
        %v1625 = vpack.c.b16 %v1573, %v1569
        %v1626 = vpack.c.b16 %v1578, %v1574
        %v1627 = vpack.c.b16 %v1579, %v1575
        %v1628 = vpack.c.b16 %v1580, %v1576
        %v1629 = vpack.c.b16 %v1581, %v1577
        %v1630 = vpack.c.b16 %v1586, %v1582
        %v1631 = vpack.c.b16 %v1587, %v1583
        %v1632 = vpack.c.b16 %v1588, %v1584
        %v1633 = vpack.c.b16 %v1589, %v1585
        %v1634 = vpack.c.b16 %v1594, %v1590
        %v1635 = vpack.c.b16 %v1595, %v1591
        %v1636 = vpack.c.b16 %v1596, %v1592
        %v1637 = vpack.c.b16 %v1597, %v1593
        %v1638 = vpack.c.b16 %v1602, %v1598
        %v1639 = vpack.c.b16 %v1603, %v1599
        %v1640 = vpack.c.b16 %v1604, %v1600
        %v1641 = vpack.c.b16 %v1605, %v1601
        %v1642 = vpack.c.b16 %v1610, %v1606
        %v1643 = vpack.c.b16 %v1611, %v1607
        %v1644 = vpack.c.b16 %v1612, %v1608
        %v1645 = vpack.c.b16 %v1613, %v1609
        %1678 = vmatprep.subr.bf16.mxu0 %v1643
        %1679 = vmatpush1.bf16.msra.mxu0 %v1642
        %1680 = vmatprep.subr.bf16.mxu0 %v1639
        %1681 = vmatpush1.bf16.msra.mxu0 %v1638
        %1682 = vmatprep.subr.bf16.mxu0 %v1635
        %1683 = vmatpush1.bf16.msra.mxu0 %v1634
        %1684 = vmatprep.subr.bf16.mxu0 %v1631
        %1685 = vmatpush1.bf16.msra.mxu0 %v1630
        %1686 = vmatprep.subr.bf16.mxu0 %v1627
        %1687 = vmatpush1.bf16.msra.mxu0 %v1626
        %1688 = vmatprep.subr.bf16.mxu0 %v1623
        %1689 = vmatpush1.bf16.msra.mxu0 %v1622
        %1690 = vmatprep.subr.bf16.mxu0 %v1619
        %1691 = vmatpush1.bf16.msra.mxu0 %v1618
        %1692 = vmatprep.subr.bf16.mxu0 %v1615
        %1693 = vmatpush1.bf16.msra.mxu0 %v1614
        %1694 = vmatprep.subr.bf16.mxu0 0
        %1695 = vmatpush2.bf16.msra.mxu0 0
        %1696 = vmatprep.subr.bf16.mxu0 0
        %1697 = vmatpush2.bf16.msra.mxu0 0
        %1698 = vmatprep.subr.bf16.mxu0 0
        %1699 = vmatpush2.bf16.msra.mxu0 0
        %1700 = vmatprep.subr.bf16.mxu0 0
        %1701 = vmatpush2.bf16.msra.mxu0 0
        %1702 = vmatprep.subr.bf16.mxu0 0
        %1703 = vmatpush2.bf16.msra.mxu0 0
        %1704 = vmatprep.subr.bf16.mxu0 0
        %1705 = vmatpush2.bf16.msra.mxu0 0
        %1706 = vmatprep.subr.bf16.mxu0 0
        %1707 = vmatpush2.bf16.msra.mxu0 0
        %1708 = vmatprep.subr.bf16.mxu0 0
        %1709 = vmatpush2.bf16.msra.mxu0 0
        %1710 = vmatprep.mubr.bf16.mxu0 0
        %1711 = vmatmul.mubr.bf16.gmra.mxu0 %v1432
        %v1712 = vpop.f32.mrf.mxu0
        %v1713 = vadd.f32 %v1501, %v1712
        %v1714 = vpop.f32.mrf.mxu0
        %v1715 = vadd.f32 %v1505, %v1714
        %v1716 = vpop.f32.mrf.mxu0
        %v1717 = vadd.f32 %v1501, %v1716
        %v1718 = vpop.f32.mrf.mxu0
        %v1719 = vadd.f32 %v1505, %v1718
        %1720 = vmatprep.mubr.bf16.mxu0 0
        %1721 = vmatmul.mubr.bf16.gmra.mxu0 %v1433
        %v1722 = vpop.f32.mrf.mxu0
        %v1723 = vadd.f32 %v1501, %v1722
        %v1724 = vpop.f32.mrf.mxu0
        %v1725 = vadd.f32 %v1505, %v1724
        %v1726 = vpop.f32.mrf.mxu0
        %v1727 = vadd.f32 %v1501, %v1726
        %v1728 = vpop.f32.mrf.mxu0
        %v1729 = vadd.f32 %v1505, %v1728
        %1730 = vmatprep.mubr.bf16.mxu0 0
        %1731 = vmatmul.mubr.bf16.gmra.mxu0 %v1434
        %v1732 = vpop.f32.mrf.mxu0
        %v1733 = vadd.f32 %v1501, %v1732
        %v1734 = vpop.f32.mrf.mxu0
        %v1735 = vadd.f32 %v1505, %v1734
        %v1736 = vpop.f32.mrf.mxu0
        %v1737 = vadd.f32 %v1501, %v1736
        %v1738 = vpop.f32.mrf.mxu0
        %v1739 = vadd.f32 %v1505, %v1738
        %1740 = vmatprep.mubr.bf16.mxu0 0
        %1741 = vmatmul.mubr.bf16.gmra.mxu0 %v1435
        %v1742 = vpop.f32.mrf.mxu0
        %v1743 = vadd.f32 %v1501, %v1742
        %v1744 = vpop.f32.mrf.mxu0
        %v1745 = vadd.f32 %v1505, %v1744
        %v1746 = vpop.f32.mrf.mxu0
        %v1747 = vadd.f32 %v1501, %v1746
        %v1748 = vpop.f32.mrf.mxu0
        %v1749 = vadd.f32 %v1505, %v1748
        %1750 = vmatprep.mubr.bf16.mxu0 0
        %1751 = vmatmul.mubr.bf16.gmra.mxu0 %v1436
        %v1752 = vpop.f32.mrf.mxu0
        %v1753 = vadd.f32 %v1501, %v1752
        %v1754 = vpop.f32.mrf.mxu0
        %v1755 = vadd.f32 %v1505, %v1754
        %v1756 = vpop.f32.mrf.mxu0
        %v1757 = vadd.f32 %v1501, %v1756
        %v1758 = vpop.f32.mrf.mxu0
        %v1759 = vadd.f32 %v1505, %v1758
        %1760 = vmatprep.mubr.bf16.mxu0 0
        %1761 = vmatmul.mubr.bf16.gmra.mxu0 %v1437
        %v1762 = vpop.f32.mrf.mxu0
        %v1763 = vadd.f32 %v1501, %v1762
        %v1764 = vpop.f32.mrf.mxu0
        %v1765 = vadd.f32 %v1505, %v1764
        %v1766 = vpop.f32.mrf.mxu0
        %v1767 = vadd.f32 %v1501, %v1766
        %v1768 = vpop.f32.mrf.mxu0
        %v1769 = vadd.f32 %v1505, %v1768
        %1770 = vmatprep.mubr.bf16.mxu0 0
        %1771 = vmatmul.mubr.bf16.gmra.mxu0 %v1438
        %v1772 = vpop.f32.mrf.mxu0
        %v1773 = vadd.f32 %v1501, %v1772
        %v1774 = vpop.f32.mrf.mxu0
        %v1775 = vadd.f32 %v1505, %v1774
        %v1776 = vpop.f32.mrf.mxu0
        %v1777 = vadd.f32 %v1501, %v1776
        %v1778 = vpop.f32.mrf.mxu0
        %v1779 = vadd.f32 %v1505, %v1778
        %1780 = vmatprep.mubr.bf16.mxu0 0
        %1781 = vmatmul.mubr.bf16.gmra.mxu0 %v1439
        %v1782 = vpop.f32.mrf.mxu0
        %v1783 = vadd.f32 %v1501, %v1782
        %v1784 = vpop.f32.mrf.mxu0
        %v1785 = vadd.f32 %v1505, %v1784
        %v1786 = vpop.f32.mrf.mxu0
        %v1787 = vadd.f32 %v1501, %v1786
        %v1788 = vpop.f32.mrf.mxu0
        %v1789 = vadd.f32 %v1505, %v1788
        %1790 = vmatprep.mubr.bf16.mxu0 0
        %1791 = vmatmul.mubr.bf16.gmra.mxu0 %v1440
        %v1792 = vpop.f32.mrf.mxu0
        %v1793 = vadd.f32 %v1501, %v1792
        %v1794 = vpop.f32.mrf.mxu0
        %v1795 = vadd.f32 %v1505, %v1794
        %v1796 = vpop.f32.mrf.mxu0
        %v1797 = vadd.f32 %v1501, %v1796
        %v1798 = vpop.f32.mrf.mxu0
        %v1799 = vadd.f32 %v1505, %v1798
        %1800 = vmatprep.mubr.bf16.mxu0 0
        %1801 = vmatmul.mubr.bf16.gmra.mxu0 %v1441
        %v1802 = vpop.f32.mrf.mxu0
        %v1803 = vadd.f32 %v1501, %v1802
        %v1804 = vpop.f32.mrf.mxu0
        %v1805 = vadd.f32 %v1505, %v1804
        %v1806 = vpop.f32.mrf.mxu0
        %v1807 = vadd.f32 %v1501, %v1806
        %v1808 = vpop.f32.mrf.mxu0
        %v1809 = vadd.f32 %v1505, %v1808
        %1810 = vmatprep.mubr.bf16.mxu0 0
        %1811 = vmatmul.mubr.bf16.gmra.mxu0 %v1442
        %v1812 = vpop.f32.mrf.mxu0
        %v1813 = vadd.f32 %v1501, %v1812
        %v1814 = vpop.f32.mrf.mxu0
        %v1815 = vadd.f32 %v1505, %v1814
        %v1816 = vpop.f32.mrf.mxu0
        %v1817 = vadd.f32 %v1501, %v1816
        %v1818 = vpop.f32.mrf.mxu0
        %v1819 = vadd.f32 %v1505, %v1818
        %1820 = vmatprep.mubr.bf16.mxu0 0
        %1821 = vmatmul.mubr.bf16.gmra.mxu0 %v1443
        %v1822 = vpop.f32.mrf.mxu0
        %v1823 = vadd.f32 %v1501, %v1822
        %v1824 = vpop.f32.mrf.mxu0
        %v1825 = vadd.f32 %v1505, %v1824
        %v1826 = vpop.f32.mrf.mxu0
        %v1827 = vadd.f32 %v1501, %v1826
        %v1828 = vpop.f32.mrf.mxu0
        %v1829 = vadd.f32 %v1505, %v1828
        %1830 = vmatprep.mubr.bf16.mxu0 0
        %1831 = vmatmul.mubr.bf16.gmra.mxu0 %v1444
        %v1832 = vpop.f32.mrf.mxu0
        %v1833 = vadd.f32 %v1501, %v1832
        %v1834 = vpop.f32.mrf.mxu0
        %v1835 = vadd.f32 %v1505, %v1834
        %v1836 = vpop.f32.mrf.mxu0
        %v1837 = vadd.f32 %v1501, %v1836
        %v1838 = vpop.f32.mrf.mxu0
        %v1839 = vadd.f32 %v1505, %v1838
        %1840 = vmatprep.mubr.bf16.mxu0 0
        %1841 = vmatmul.mubr.bf16.gmra.mxu0 %v1445
        %v1842 = vpop.f32.mrf.mxu0
        %v1843 = vadd.f32 %v1501, %v1842
        %v1844 = vpop.f32.mrf.mxu0
        %v1845 = vadd.f32 %v1505, %v1844
        %v1846 = vpop.f32.mrf.mxu0
        %v1847 = vadd.f32 %v1501, %v1846
        %v1848 = vpop.f32.mrf.mxu0
        %v1849 = vadd.f32 %v1505, %v1848
        %1850 = vmatprep.mubr.bf16.mxu0 0
        %1851 = vmatmul.mubr.bf16.gmra.mxu0 %v1446
        %v1852 = vpop.f32.mrf.mxu0
        %v1853 = vadd.f32 %v1501, %v1852
        %v1854 = vpop.f32.mrf.mxu0
        %v1855 = vadd.f32 %v1505, %v1854
        %v1856 = vpop.f32.mrf.mxu0
        %v1857 = vadd.f32 %v1501, %v1856
        %v1858 = vpop.f32.mrf.mxu0
        %v1859 = vadd.f32 %v1505, %v1858
        %1860 = vmatprep.mubr.bf16.mxu0 0
        %1861 = vmatmul.mubr.bf16.gmra.mxu0 %v1447
        %v1862 = vpop.f32.mrf.mxu0
        %v1863 = vadd.f32 %v1501, %v1862
        %v1864 = vpop.f32.mrf.mxu0
        %v1865 = vadd.f32 %v1505, %v1864
        %v1866 = vpop.f32.mrf.mxu0
        %v1867 = vadd.f32 %v1501, %v1866
        %v1868 = vpop.f32.mrf.mxu0
        %v1869 = vadd.f32 %v1505, %v1868
        %1870 = vmatprep.mubr.bf16.mxu0 0
        %1871 = vmatmul.mubr.bf16.gmra.mxu0 %v1448
        %v1872 = vpop.f32.mrf.mxu0
        %v1873 = vadd.f32 %v1501, %v1872
        %v1874 = vpop.f32.mrf.mxu0
        %v1875 = vadd.f32 %v1505, %v1874
        %v1876 = vpop.f32.mrf.mxu0
        %v1877 = vadd.f32 %v1501, %v1876
        %v1878 = vpop.f32.mrf.mxu0
        %v1879 = vadd.f32 %v1505, %v1878
        %1880 = vmatprep.mubr.bf16.mxu0 0
        %1881 = vmatmul.mubr.bf16.gmra.mxu0 %v1449
        %v1882 = vpop.f32.mrf.mxu0
        %v1883 = vadd.f32 %v1501, %v1882
        %v1884 = vpop.f32.mrf.mxu0
        %v1885 = vadd.f32 %v1505, %v1884
        %v1886 = vpop.f32.mrf.mxu0
        %v1887 = vadd.f32 %v1501, %v1886
        %v1888 = vpop.f32.mrf.mxu0
        %v1889 = vadd.f32 %v1505, %v1888
        %1890 = vmatprep.mubr.bf16.mxu0 0
        %1891 = vmatmul.mubr.bf16.gmra.mxu0 %v1450
        %v1892 = vpop.f32.mrf.mxu0
        %v1893 = vadd.f32 %v1501, %v1892
        %v1894 = vpop.f32.mrf.mxu0
        %v1895 = vadd.f32 %v1505, %v1894
        %v1896 = vpop.f32.mrf.mxu0
        %v1897 = vadd.f32 %v1501, %v1896
        %v1898 = vpop.f32.mrf.mxu0
        %v1899 = vadd.f32 %v1505, %v1898
        %1900 = vmatprep.mubr.bf16.mxu0 0
        %1901 = vmatmul.mubr.bf16.gmra.mxu0 %v1451
        %v1902 = vpop.f32.mrf.mxu0
        %v1903 = vadd.f32 %v1501, %v1902
        %v1904 = vpop.f32.mrf.mxu0
        %v1905 = vadd.f32 %v1505, %v1904
        %v1906 = vpop.f32.mrf.mxu0
        %v1907 = vadd.f32 %v1501, %v1906
        %v1908 = vpop.f32.mrf.mxu0
        %v1909 = vadd.f32 %v1505, %v1908
        %1910 = vmatprep.mubr.bf16.mxu0 0
        %1911 = vmatmul.mubr.bf16.gmra.mxu0 %v1452
        %v1912 = vpop.f32.mrf.mxu0
        %v1913 = vadd.f32 %v1501, %v1912
        %v1914 = vpop.f32.mrf.mxu0
        %v1915 = vadd.f32 %v1505, %v1914
        %v1916 = vpop.f32.mrf.mxu0
        %v1917 = vadd.f32 %v1501, %v1916
        %v1918 = vpop.f32.mrf.mxu0
        %v1919 = vadd.f32 %v1505, %v1918
        %1920 = vmatprep.mubr.bf16.mxu0 0
        %1921 = vmatmul.mubr.bf16.gmra.mxu0 %v1453
        %v1922 = vpop.f32.mrf.mxu0
        %v1923 = vadd.f32 %v1501, %v1922
        %v1924 = vpop.f32.mrf.mxu0
        %v1925 = vadd.f32 %v1505, %v1924
        %v1926 = vpop.f32.mrf.mxu0
        %v1927 = vadd.f32 %v1501, %v1926
        %v1928 = vpop.f32.mrf.mxu0
        %v1929 = vadd.f32 %v1505, %v1928
        %1930 = vmatprep.mubr.bf16.mxu0 0
        %1931 = vmatmul.mubr.bf16.gmra.mxu0 %v1454
        %v1932 = vpop.f32.mrf.mxu0
        %v1933 = vadd.f32 %v1501, %v1932
        %v1934 = vpop.f32.mrf.mxu0
        %v1935 = vadd.f32 %v1505, %v1934
        %v1936 = vpop.f32.mrf.mxu0
        %v1937 = vadd.f32 %v1501, %v1936
        %v1938 = vpop.f32.mrf.mxu0
        %v1939 = vadd.f32 %v1505, %v1938
        %1940 = vmatprep.mubr.bf16.mxu0 0
        %1941 = vmatmul.mubr.bf16.gmra.mxu0 %v1455
        %v1942 = vpop.f32.mrf.mxu0
        %v1943 = vadd.f32 %v1501, %v1942
        %v1944 = vpop.f32.mrf.mxu0
        %v1945 = vadd.f32 %v1505, %v1944
        %v1946 = vpop.f32.mrf.mxu0
        %v1947 = vadd.f32 %v1501, %v1946
        %v1948 = vpop.f32.mrf.mxu0
        %v1949 = vadd.f32 %v1505, %v1948
        %1950 = vmatprep.mubr.bf16.mxu0 0
        %1951 = vmatmul.mubr.bf16.gmra.mxu0 %v1456
        %v1952 = vpop.f32.mrf.mxu0
        %v1953 = vadd.f32 %v1501, %v1952
        %v1954 = vpop.f32.mrf.mxu0
        %v1955 = vadd.f32 %v1505, %v1954
        %v1956 = vpop.f32.mrf.mxu0
        %v1957 = vadd.f32 %v1501, %v1956
        %v1958 = vpop.f32.mrf.mxu0
        %v1959 = vadd.f32 %v1505, %v1958
        %1960 = vmatprep.mubr.bf16.mxu0 0
        %1961 = vmatmul.mubr.bf16.gmra.mxu0 %v1457
        %v1962 = vpop.f32.mrf.mxu0
        %v1963 = vadd.f32 %v1501, %v1962
        %v1964 = vpop.f32.mrf.mxu0
        %v1965 = vadd.f32 %v1505, %v1964
        %v1966 = vpop.f32.mrf.mxu0
        %v1967 = vadd.f32 %v1501, %v1966
        %v1968 = vpop.f32.mrf.mxu0
        %v1969 = vadd.f32 %v1505, %v1968
        %1970 = vmatprep.mubr.bf16.mxu0 0
        %1971 = vmatmul.mubr.bf16.gmra.mxu0 %v1458
        %v1972 = vpop.f32.mrf.mxu0
        %v1973 = vadd.f32 %v1501, %v1972
        %v1974 = vpop.f32.mrf.mxu0
        %v1975 = vadd.f32 %v1505, %v1974
        %v1976 = vpop.f32.mrf.mxu0
        %v1977 = vadd.f32 %v1501, %v1976
        %v1978 = vpop.f32.mrf.mxu0
        %v1979 = vadd.f32 %v1505, %v1978
        %1980 = vmatprep.mubr.bf16.mxu0 0
        %1981 = vmatmul.mubr.bf16.gmra.mxu0 %v1459
        %v1982 = vpop.f32.mrf.mxu0
        %v1983 = vadd.f32 %v1501, %v1982
        %v1984 = vpop.f32.mrf.mxu0
        %v1985 = vadd.f32 %v1505, %v1984
        %v1986 = vpop.f32.mrf.mxu0
        %v1987 = vadd.f32 %v1501, %v1986
        %v1988 = vpop.f32.mrf.mxu0
        %v1989 = vadd.f32 %v1505, %v1988
        %1990 = vmatprep.mubr.bf16.mxu0 0
        %1991 = vmatmul.mubr.bf16.gmra.mxu0 %v1460
        %v1992 = vpop.f32.mrf.mxu0
        %v1993 = vadd.f32 %v1501, %v1992
        %v1994 = vpop.f32.mrf.mxu0
        %v1995 = vadd.f32 %v1505, %v1994
        %v1996 = vpop.f32.mrf.mxu0
        %v1997 = vadd.f32 %v1501, %v1996
        %v1998 = vpop.f32.mrf.mxu0
        %v1999 = vadd.f32 %v1505, %v1998
        %2000 = vmatprep.mubr.bf16.mxu0 0
        %2001 = vmatmul.mubr.bf16.gmra.mxu0 %v1461
        %v2002 = vpop.f32.mrf.mxu0
        %v2003 = vadd.f32 %v1501, %v2002
        %v2004 = vpop.f32.mrf.mxu0
        %v2005 = vadd.f32 %v1505, %v2004
        %v2006 = vpop.f32.mrf.mxu0
        %v2007 = vadd.f32 %v1501, %v2006
        %v2008 = vpop.f32.mrf.mxu0
        %v2009 = vadd.f32 %v1505, %v2008
        %2010 = vmatprep.mubr.bf16.mxu0 0
        %2011 = vmatmul.mubr.bf16.gmra.mxu0 %v1462
        %v2012 = vpop.f32.mrf.mxu0
        %v2013 = vadd.f32 %v1501, %v2012
        %v2014 = vpop.f32.mrf.mxu0
        %v2015 = vadd.f32 %v1505, %v2014
        %v2016 = vpop.f32.mrf.mxu0
        %v2017 = vadd.f32 %v1501, %v2016
        %v2018 = vpop.f32.mrf.mxu0
        %v2019 = vadd.f32 %v1505, %v2018
        %2020 = vmatprep.mubr.bf16.mxu0 0
        %2021 = vmatmul.mubr.bf16.gmra.mxu0 %v1463
        %v2022 = vpop.f32.mrf.mxu0
        %v2023 = vadd.f32 %v1501, %v2022
        %v2024 = vpop.f32.mrf.mxu0
        %v2025 = vadd.f32 %v1505, %v2024
        %v2026 = vpop.f32.mrf.mxu0
        %v2027 = vadd.f32 %v1501, %v2026
        %v2028 = vpop.f32.mrf.mxu0
        %v2029 = vadd.f32 %v1505, %v2028
        %2030 = vdwg.mxu0
        %2031 = vmatprep.subr.bf16.mxu0 %v1645
        %2032 = vmatpush1.bf16.msra.mxu0 %v1644
        %2033 = vmatprep.subr.bf16.mxu0 %v1641
        %2034 = vmatpush1.bf16.msra.mxu0 %v1640
        %2035 = vmatprep.subr.bf16.mxu0 %v1637
        %2036 = vmatpush1.bf16.msra.mxu0 %v1636
        %2037 = vmatprep.subr.bf16.mxu0 %v1633
        %2038 = vmatpush1.bf16.msra.mxu0 %v1632
        %2039 = vmatprep.subr.bf16.mxu0 %v1629
        %2040 = vmatpush1.bf16.msra.mxu0 %v1628
        %2041 = vmatprep.subr.bf16.mxu0 %v1625
        %2042 = vmatpush1.bf16.msra.mxu0 %v1624
        %2043 = vmatprep.subr.bf16.mxu0 %v1621
        %2044 = vmatpush1.bf16.msra.mxu0 %v1620
        %2045 = vmatprep.subr.bf16.mxu0 %v1617
        %2046 = vmatpush1.bf16.msra.mxu0 %v1616
        %2047 = vmatprep.subr.bf16.mxu0 0
        %2048 = vmatpush2.bf16.msra.mxu0 0
        %2049 = vmatprep.subr.bf16.mxu0 0
        %2050 = vmatpush2.bf16.msra.mxu0 0
        %2051 = vmatprep.subr.bf16.mxu0 0
        %2052 = vmatpush2.bf16.msra.mxu0 0
        %2053 = vmatprep.subr.bf16.mxu0 0
        %2054 = vmatpush2.bf16.msra.mxu0 0
        %2055 = vmatprep.subr.bf16.mxu0 0
        %2056 = vmatpush2.bf16.msra.mxu0 0
        %2057 = vmatprep.subr.bf16.mxu0 0
        %2058 = vmatpush2.bf16.msra.mxu0 0
        %2059 = vmatprep.subr.bf16.mxu0 0
        %2060 = vmatpush2.bf16.msra.mxu0 0
        %2061 = vmatprep.subr.bf16.mxu0 0
        %2062 = vmatpush2.bf16.msra.mxu0 0
        %2063 = vmatprep.mubr.bf16.mxu0 0
        %2064 = vmatmul.mubr.bf16.gmra.mxu0 %v1432
        %v2065 = vpop.f32.mrf.mxu0
        %v2066 = vadd.f32 %v1509, %v2065
        %v2067 = vpop.f32.mrf.mxu0
        %v2068 = vadd.f32 %v1513, %v2067
        %v2069 = vpop.f32.mrf.mxu0
        %v2070 = vadd.f32 %v1509, %v2069
        %v2071 = vpop.f32.mrf.mxu0
        %v2072 = vadd.f32 %v1513, %v2071
        %2073 = vmatprep.mubr.bf16.mxu0 0
        %2074 = vmatmul.mubr.bf16.gmra.mxu0 %v1433
        %v2075 = vpop.f32.mrf.mxu0
        %v2076 = vadd.f32 %v1509, %v2075
        %v2077 = vpop.f32.mrf.mxu0
        %v2078 = vadd.f32 %v1513, %v2077
        %v2079 = vpop.f32.mrf.mxu0
        %v2080 = vadd.f32 %v1509, %v2079
        %v2081 = vpop.f32.mrf.mxu0
        %v2082 = vadd.f32 %v1513, %v2081
        %2083 = vmatprep.mubr.bf16.mxu0 0
        %2084 = vmatmul.mubr.bf16.gmra.mxu0 %v1434
        %v2085 = vpop.f32.mrf.mxu0
        %v2086 = vadd.f32 %v1509, %v2085
        %v2087 = vpop.f32.mrf.mxu0
        %v2088 = vadd.f32 %v1513, %v2087
        %v2089 = vpop.f32.mrf.mxu0
        %v2090 = vadd.f32 %v1509, %v2089
        %v2091 = vpop.f32.mrf.mxu0
        %v2092 = vadd.f32 %v1513, %v2091
        %2093 = vmatprep.mubr.bf16.mxu0 0
        %2094 = vmatmul.mubr.bf16.gmra.mxu0 %v1435
        %v2095 = vpop.f32.mrf.mxu0
        %v2096 = vadd.f32 %v1509, %v2095
        %v2097 = vpop.f32.mrf.mxu0
        %v2098 = vadd.f32 %v1513, %v2097
        %v2099 = vpop.f32.mrf.mxu0
        %v2100 = vadd.f32 %v1509, %v2099
        %v2101 = vpop.f32.mrf.mxu0
        %v2102 = vadd.f32 %v1513, %v2101
        %2103 = vmatprep.mubr.bf16.mxu0 0
        %2104 = vmatmul.mubr.bf16.gmra.mxu0 %v1436
        %v2105 = vpop.f32.mrf.mxu0
        %v2106 = vadd.f32 %v1509, %v2105
        %v2107 = vpop.f32.mrf.mxu0
        %v2108 = vadd.f32 %v1513, %v2107
        %v2109 = vpop.f32.mrf.mxu0
        %v2110 = vadd.f32 %v1509, %v2109
        %v2111 = vpop.f32.mrf.mxu0
        %v2112 = vadd.f32 %v1513, %v2111
        %2113 = vmatprep.mubr.bf16.mxu0 0
        %2114 = vmatmul.mubr.bf16.gmra.mxu0 %v1437
        %v2115 = vpop.f32.mrf.mxu0
        %v2116 = vadd.f32 %v1509, %v2115
        %v2117 = vpop.f32.mrf.mxu0
        %v2118 = vadd.f32 %v1513, %v2117
        %v2119 = vpop.f32.mrf.mxu0
        %v2120 = vadd.f32 %v1509, %v2119
        %v2121 = vpop.f32.mrf.mxu0
        %v2122 = vadd.f32 %v1513, %v2121
        %2123 = vmatprep.mubr.bf16.mxu0 0
        %2124 = vmatmul.mubr.bf16.gmra.mxu0 %v1438
        %v2125 = vpop.f32.mrf.mxu0
        %v2126 = vadd.f32 %v1509, %v2125
        %v2127 = vpop.f32.mrf.mxu0
        %v2128 = vadd.f32 %v1513, %v2127
        %v2129 = vpop.f32.mrf.mxu0
        %v2130 = vadd.f32 %v1509, %v2129
        %v2131 = vpop.f32.mrf.mxu0
        %v2132 = vadd.f32 %v1513, %v2131
        %2133 = vmatprep.mubr.bf16.mxu0 0
        %2134 = vmatmul.mubr.bf16.gmra.mxu0 %v1439
        %v2135 = vpop.f32.mrf.mxu0
        %v2136 = vadd.f32 %v1509, %v2135
        %v2137 = vpop.f32.mrf.mxu0
        %v2138 = vadd.f32 %v1513, %v2137
        %v2139 = vpop.f32.mrf.mxu0
        %v2140 = vadd.f32 %v1509, %v2139
        %v2141 = vpop.f32.mrf.mxu0
        %v2142 = vadd.f32 %v1513, %v2141
        %2143 = vmatprep.mubr.bf16.mxu0 0
        %2144 = vmatmul.mubr.bf16.gmra.mxu0 %v1440
        %v2145 = vpop.f32.mrf.mxu0
        %v2146 = vadd.f32 %v1509, %v2145
        %v2147 = vpop.f32.mrf.mxu0
        %v2148 = vadd.f32 %v1513, %v2147
        %v2149 = vpop.f32.mrf.mxu0
        %v2150 = vadd.f32 %v1509, %v2149
        %v2151 = vpop.f32.mrf.mxu0
        %v2152 = vadd.f32 %v1513, %v2151
        %2153 = vmatprep.mubr.bf16.mxu0 0
        %2154 = vmatmul.mubr.bf16.gmra.mxu0 %v1441
        %v2155 = vpop.f32.mrf.mxu0
        %v2156 = vadd.f32 %v1509, %v2155
        %v2157 = vpop.f32.mrf.mxu0
        %v2158 = vadd.f32 %v1513, %v2157
        %v2159 = vpop.f32.mrf.mxu0
        %v2160 = vadd.f32 %v1509, %v2159
        %v2161 = vpop.f32.mrf.mxu0
        %v2162 = vadd.f32 %v1513, %v2161
        %2163 = vmatprep.mubr.bf16.mxu0 0
        %2164 = vmatmul.mubr.bf16.gmra.mxu0 %v1442
        %v2165 = vpop.f32.mrf.mxu0
        %v2166 = vadd.f32 %v1509, %v2165
        %v2167 = vpop.f32.mrf.mxu0
        %v2168 = vadd.f32 %v1513, %v2167
        %v2169 = vpop.f32.mrf.mxu0
        %v2170 = vadd.f32 %v1509, %v2169
        %v2171 = vpop.f32.mrf.mxu0
        %v2172 = vadd.f32 %v1513, %v2171
        %2173 = vmatprep.mubr.bf16.mxu0 0
        %2174 = vmatmul.mubr.bf16.gmra.mxu0 %v1443
        %v2175 = vpop.f32.mrf.mxu0
        %v2176 = vadd.f32 %v1509, %v2175
        %v2177 = vpop.f32.mrf.mxu0
        %v2178 = vadd.f32 %v1513, %v2177
        %v2179 = vpop.f32.mrf.mxu0
        %v2180 = vadd.f32 %v1509, %v2179
        %v2181 = vpop.f32.mrf.mxu0
        %v2182 = vadd.f32 %v1513, %v2181
        %2183 = vmatprep.mubr.bf16.mxu0 0
        %2184 = vmatmul.mubr.bf16.gmra.mxu0 %v1444
        %v2185 = vpop.f32.mrf.mxu0
        %v2186 = vadd.f32 %v1509, %v2185
        %v2187 = vpop.f32.mrf.mxu0
        %v2188 = vadd.f32 %v1513, %v2187
        %v2189 = vpop.f32.mrf.mxu0
        %v2190 = vadd.f32 %v1509, %v2189
        %v2191 = vpop.f32.mrf.mxu0
        %v2192 = vadd.f32 %v1513, %v2191
        %2193 = vmatprep.mubr.bf16.mxu0 0
        %2194 = vmatmul.mubr.bf16.gmra.mxu0 %v1445
        %v2195 = vpop.f32.mrf.mxu0
        %v2196 = vadd.f32 %v1509, %v2195
        %v2197 = vpop.f32.mrf.mxu0
        %v2198 = vadd.f32 %v1513, %v2197
        %v2199 = vpop.f32.mrf.mxu0
        %v2200 = vadd.f32 %v1509, %v2199
        %v2201 = vpop.f32.mrf.mxu0
        %v2202 = vadd.f32 %v1513, %v2201
        %2203 = vmatprep.mubr.bf16.mxu0 0
        %2204 = vmatmul.mubr.bf16.gmra.mxu0 %v1446
        %v2205 = vpop.f32.mrf.mxu0
        %v2206 = vadd.f32 %v1509, %v2205
        %v2207 = vpop.f32.mrf.mxu0
        %v2208 = vadd.f32 %v1513, %v2207
        %v2209 = vpop.f32.mrf.mxu0
        %v2210 = vadd.f32 %v1509, %v2209
        %v2211 = vpop.f32.mrf.mxu0
        %v2212 = vadd.f32 %v1513, %v2211
        %2213 = vmatprep.mubr.bf16.mxu0 0
        %2214 = vmatmul.mubr.bf16.gmra.mxu0 %v1447
        %v2215 = vpop.f32.mrf.mxu0
        %v2216 = vadd.f32 %v1509, %v2215
        %v2217 = vpop.f32.mrf.mxu0
        %v2218 = vadd.f32 %v1513, %v2217
        %v2219 = vpop.f32.mrf.mxu0
        %v2220 = vadd.f32 %v1509, %v2219
        %v2221 = vpop.f32.mrf.mxu0
        %v2222 = vadd.f32 %v1513, %v2221
        %2223 = vmatprep.mubr.bf16.mxu0 0
        %2224 = vmatmul.mubr.bf16.gmra.mxu0 %v1448
        %v2225 = vpop.f32.mrf.mxu0
        %v2226 = vadd.f32 %v1509, %v2225
        %v2227 = vpop.f32.mrf.mxu0
        %v2228 = vadd.f32 %v1513, %v2227
        %v2229 = vpop.f32.mrf.mxu0
        %v2230 = vadd.f32 %v1509, %v2229
        %v2231 = vpop.f32.mrf.mxu0
        %v2232 = vadd.f32 %v1513, %v2231
        %2233 = vmatprep.mubr.bf16.mxu0 0
        %2234 = vmatmul.mubr.bf16.gmra.mxu0 %v1449
        %v2235 = vpop.f32.mrf.mxu0
        %v2236 = vadd.f32 %v1509, %v2235
        %v2237 = vpop.f32.mrf.mxu0
        %v2238 = vadd.f32 %v1513, %v2237
        %v2239 = vpop.f32.mrf.mxu0
        %v2240 = vadd.f32 %v1509, %v2239
        %v2241 = vpop.f32.mrf.mxu0
        %v2242 = vadd.f32 %v1513, %v2241
        %2243 = vmatprep.mubr.bf16.mxu0 0
        %2244 = vmatmul.mubr.bf16.gmra.mxu0 %v1450
        %v2245 = vpop.f32.mrf.mxu0
        %v2246 = vadd.f32 %v1509, %v2245
        %v2247 = vpop.f32.mrf.mxu0
        %v2248 = vadd.f32 %v1513, %v2247
        %v2249 = vpop.f32.mrf.mxu0
        %v2250 = vadd.f32 %v1509, %v2249
        %v2251 = vpop.f32.mrf.mxu0
        %v2252 = vadd.f32 %v1513, %v2251
        %2253 = vmatprep.mubr.bf16.mxu0 0
        %2254 = vmatmul.mubr.bf16.gmra.mxu0 %v1451
        %v2255 = vpop.f32.mrf.mxu0
        %v2256 = vadd.f32 %v1509, %v2255
        %v2257 = vpop.f32.mrf.mxu0
        %v2258 = vadd.f32 %v1513, %v2257
        %v2259 = vpop.f32.mrf.mxu0
        %v2260 = vadd.f32 %v1509, %v2259
        %v2261 = vpop.f32.mrf.mxu0
        %v2262 = vadd.f32 %v1513, %v2261
        %2263 = vmatprep.mubr.bf16.mxu0 0
        %2264 = vmatmul.mubr.bf16.gmra.mxu0 %v1452
        %v2265 = vpop.f32.mrf.mxu0
        %v2266 = vadd.f32 %v1509, %v2265
        %v2267 = vpop.f32.mrf.mxu0
        %v2268 = vadd.f32 %v1513, %v2267
        %v2269 = vpop.f32.mrf.mxu0
        %v2270 = vadd.f32 %v1509, %v2269
        %v2271 = vpop.f32.mrf.mxu0
        %v2272 = vadd.f32 %v1513, %v2271
        %2273 = vmatprep.mubr.bf16.mxu0 0
        %2274 = vmatmul.mubr.bf16.gmra.mxu0 %v1453
        %v2275 = vpop.f32.mrf.mxu0
        %v2276 = vadd.f32 %v1509, %v2275
        %v2277 = vpop.f32.mrf.mxu0
        %v2278 = vadd.f32 %v1513, %v2277
        %v2279 = vpop.f32.mrf.mxu0
        %v2280 = vadd.f32 %v1509, %v2279
        %v2281 = vpop.f32.mrf.mxu0
        %v2282 = vadd.f32 %v1513, %v2281
        %2283 = vmatprep.mubr.bf16.mxu0 0
        %2284 = vmatmul.mubr.bf16.gmra.mxu0 %v1454
        %v2285 = vpop.f32.mrf.mxu0
        %v2286 = vadd.f32 %v1509, %v2285
        %v2287 = vpop.f32.mrf.mxu0
        %v2288 = vadd.f32 %v1513, %v2287
        %v2289 = vpop.f32.mrf.mxu0
        %v2290 = vadd.f32 %v1509, %v2289
        %v2291 = vpop.f32.mrf.mxu0
        %v2292 = vadd.f32 %v1513, %v2291
        %2293 = vmatprep.mubr.bf16.mxu0 0
        %2294 = vmatmul.mubr.bf16.gmra.mxu0 %v1455
        %v2295 = vpop.f32.mrf.mxu0
        %v2296 = vadd.f32 %v1509, %v2295
        %v2297 = vpop.f32.mrf.mxu0
        %v2298 = vadd.f32 %v1513, %v2297
        %v2299 = vpop.f32.mrf.mxu0
        %v2300 = vadd.f32 %v1509, %v2299
        %v2301 = vpop.f32.mrf.mxu0
        %v2302 = vadd.f32 %v1513, %v2301
        %2303 = vmatprep.mubr.bf16.mxu0 0
        %2304 = vmatmul.mubr.bf16.gmra.mxu0 %v1456
        %v2305 = vpop.f32.mrf.mxu0
        %v2306 = vadd.f32 %v1509, %v2305
        %v2307 = vpop.f32.mrf.mxu0
        %v2308 = vadd.f32 %v1513, %v2307
        %v2309 = vpop.f32.mrf.mxu0
        %v2310 = vadd.f32 %v1509, %v2309
        %v2311 = vpop.f32.mrf.mxu0
        %v2312 = vadd.f32 %v1513, %v2311
        %2313 = vmatprep.mubr.bf16.mxu0 0
        %2314 = vmatmul.mubr.bf16.gmra.mxu0 %v1457
        %v2315 = vpop.f32.mrf.mxu0
        %v2316 = vadd.f32 %v1509, %v2315
        %v2317 = vpop.f32.mrf.mxu0
        %v2318 = vadd.f32 %v1513, %v2317
        %v2319 = vpop.f32.mrf.mxu0
        %v2320 = vadd.f32 %v1509, %v2319
        %v2321 = vpop.f32.mrf.mxu0
        %v2322 = vadd.f32 %v1513, %v2321
        %2323 = vmatprep.mubr.bf16.mxu0 0
        %2324 = vmatmul.mubr.bf16.gmra.mxu0 %v1458
        %v2325 = vpop.f32.mrf.mxu0
        %v2326 = vadd.f32 %v1509, %v2325
        %v2327 = vpop.f32.mrf.mxu0
        %v2328 = vadd.f32 %v1513, %v2327
        %v2329 = vpop.f32.mrf.mxu0
        %v2330 = vadd.f32 %v1509, %v2329
        %v2331 = vpop.f32.mrf.mxu0
        %v2332 = vadd.f32 %v1513, %v2331
        %2333 = vmatprep.mubr.bf16.mxu0 0
        %2334 = vmatmul.mubr.bf16.gmra.mxu0 %v1459
        %v2335 = vpop.f32.mrf.mxu0
        %v2336 = vadd.f32 %v1509, %v2335
        %v2337 = vpop.f32.mrf.mxu0
        %v2338 = vadd.f32 %v1513, %v2337
        %v2339 = vpop.f32.mrf.mxu0
        %v2340 = vadd.f32 %v1509, %v2339
        %v2341 = vpop.f32.mrf.mxu0
        %v2342 = vadd.f32 %v1513, %v2341
        %2343 = vmatprep.mubr.bf16.mxu0 0
        %2344 = vmatmul.mubr.bf16.gmra.mxu0 %v1460
        %v2345 = vpop.f32.mrf.mxu0
        %v2346 = vadd.f32 %v1509, %v2345
        %v2347 = vpop.f32.mrf.mxu0
        %v2348 = vadd.f32 %v1513, %v2347
        %v2349 = vpop.f32.mrf.mxu0
        %v2350 = vadd.f32 %v1509, %v2349
        %v2351 = vpop.f32.mrf.mxu0
        %v2352 = vadd.f32 %v1513, %v2351
        %2353 = vmatprep.mubr.bf16.mxu0 0
        %2354 = vmatmul.mubr.bf16.gmra.mxu0 %v1461
        %v2355 = vpop.f32.mrf.mxu0
        %v2356 = vadd.f32 %v1509, %v2355
        %v2357 = vpop.f32.mrf.mxu0
        %v2358 = vadd.f32 %v1513, %v2357
        %v2359 = vpop.f32.mrf.mxu0
        %v2360 = vadd.f32 %v1509, %v2359
        %v2361 = vpop.f32.mrf.mxu0
        %v2362 = vadd.f32 %v1513, %v2361
        %2363 = vmatprep.mubr.bf16.mxu0 0
        %2364 = vmatmul.mubr.bf16.gmra.mxu0 %v1462
        %v2365 = vpop.f32.mrf.mxu0
        %v2366 = vadd.f32 %v1509, %v2365
        %v2367 = vpop.f32.mrf.mxu0
        %v2368 = vadd.f32 %v1513, %v2367
        %v2369 = vpop.f32.mrf.mxu0
        %v2370 = vadd.f32 %v1509, %v2369
        %v2371 = vpop.f32.mrf.mxu0
        %v2372 = vadd.f32 %v1513, %v2371
        %2373 = vmatprep.mubr.bf16.mxu0 0
        %2374 = vmatmul.mubr.bf16.gmra.mxu0 %v1463
        %v2375 = vpop.f32.mrf.mxu0
        %v2376 = vadd.f32 %v1509, %v2375
        %v2377 = vpop.f32.mrf.mxu0
        %v2378 = vadd.f32 %v1513, %v2377
        %v2379 = vpop.f32.mrf.mxu0
        %v2380 = vadd.f32 %v1509, %v2379
        %v2381 = vpop.f32.mrf.mxu0
        %v2382 = vadd.f32 %v1513, %v2381
        %2383 = vdwg.mxu0
        %v2384 = vxor.u32 %v1713, 2147483648
        %v2385 = vxor.u32 %v1715, 2147483648
        %v2386 = vxor.u32 %v2066, 2147483648
        %v2387 = vxor.u32 %v2068, 2147483648
        %v2388 = vxor.u32 %v1717, 2147483648
        %v2389 = vxor.u32 %v1719, 2147483648
        %v2390 = vxor.u32 %v2070, 2147483648
        %v2391 = vxor.u32 %v2072, 2147483648
        %v2392 = vxor.u32 %v1723, 2147483648
        %v2393 = vxor.u32 %v1725, 2147483648
        %v2394 = vxor.u32 %v2076, 2147483648
        %v2395 = vxor.u32 %v2078, 2147483648
        %v2396 = vxor.u32 %v1727, 2147483648
        %v2397 = vxor.u32 %v1729, 2147483648
        %v2398 = vxor.u32 %v2080, 2147483648
        %v2399 = vxor.u32 %v2082, 2147483648
        %v2400 = vxor.u32 %v1733, 2147483648
        %v2401 = vxor.u32 %v1735, 2147483648
        %v2402 = vxor.u32 %v2086, 2147483648
        %v2403 = vxor.u32 %v2088, 2147483648
        %v2404 = vxor.u32 %v1737, 2147483648
        %v2405 = vxor.u32 %v1739, 2147483648
        %v2406 = vxor.u32 %v2090, 2147483648
        %v2407 = vxor.u32 %v2092, 2147483648
        %v2408 = vxor.u32 %v1743, 2147483648
        %v2409 = vxor.u32 %v1745, 2147483648
        %v2410 = vxor.u32 %v2096, 2147483648
        %v2411 = vxor.u32 %v2098, 2147483648
        %v2412 = vxor.u32 %v1747, 2147483648
        %v2413 = vxor.u32 %v1749, 2147483648
        %v2414 = vxor.u32 %v2100, 2147483648
        %v2415 = vxor.u32 %v2102, 2147483648
        %v2416 = vxor.u32 %v1753, 2147483648
        %v2417 = vxor.u32 %v1755, 2147483648
        %v2418 = vxor.u32 %v2106, 2147483648
        %v2419 = vxor.u32 %v2108, 2147483648
        %v2420 = vxor.u32 %v1757, 2147483648
        %v2421 = vxor.u32 %v1759, 2147483648
        %v2422 = vxor.u32 %v2110, 2147483648
        %v2423 = vxor.u32 %v2112, 2147483648
        %v2424 = vxor.u32 %v1763, 2147483648
        %v2425 = vxor.u32 %v1765, 2147483648
        %v2426 = vxor.u32 %v2116, 2147483648
        %v2427 = vxor.u32 %v2118, 2147483648
        %v2428 = vxor.u32 %v1767, 2147483648
        %v2429 = vxor.u32 %v1769, 2147483648
        %v2430 = vxor.u32 %v2120, 2147483648
        %v2431 = vxor.u32 %v2122, 2147483648
        %v2432 = vxor.u32 %v1773, 2147483648
        %v2433 = vxor.u32 %v1775, 2147483648
        %v2434 = vxor.u32 %v2126, 2147483648
        %v2435 = vxor.u32 %v2128, 2147483648
        %v2436 = vxor.u32 %v1777, 2147483648
        %v2437 = vxor.u32 %v1779, 2147483648
        %v2438 = vxor.u32 %v2130, 2147483648
        %v2439 = vxor.u32 %v2132, 2147483648
        %v2440 = vxor.u32 %v1783, 2147483648
        %v2441 = vxor.u32 %v1785, 2147483648
        %v2442 = vxor.u32 %v2136, 2147483648
        %v2443 = vxor.u32 %v2138, 2147483648
        %v2444 = vxor.u32 %v1787, 2147483648
        %v2445 = vxor.u32 %v1789, 2147483648
        %v2446 = vxor.u32 %v2140, 2147483648
        %v2447 = vxor.u32 %v2142, 2147483648
        %v2448 = vxor.u32 %v1793, 2147483648
        %v2449 = vxor.u32 %v1795, 2147483648
        %v2450 = vxor.u32 %v2146, 2147483648
        %v2451 = vxor.u32 %v2148, 2147483648
        %v2452 = vxor.u32 %v1797, 2147483648
        %v2453 = vxor.u32 %v1799, 2147483648
        %v2454 = vxor.u32 %v2150, 2147483648
        %v2455 = vxor.u32 %v2152, 2147483648
        %v2456 = vxor.u32 %v1803, 2147483648
        %v2457 = vxor.u32 %v1805, 2147483648
        %v2458 = vxor.u32 %v2156, 2147483648
        %v2459 = vxor.u32 %v2158, 2147483648
        %v2460 = vxor.u32 %v1807, 2147483648
        %v2461 = vxor.u32 %v1809, 2147483648
        %v2462 = vxor.u32 %v2160, 2147483648
        %v2463 = vxor.u32 %v2162, 2147483648
        %v2464 = vxor.u32 %v1813, 2147483648
        %v2465 = vxor.u32 %v1815, 2147483648
        %v2466 = vxor.u32 %v2166, 2147483648
        %v2467 = vxor.u32 %v2168, 2147483648
        %v2468 = vxor.u32 %v1817, 2147483648
        %v2469 = vxor.u32 %v1819, 2147483648
        %v2470 = vxor.u32 %v2170, 2147483648
        %v2471 = vxor.u32 %v2172, 2147483648
        %v2472 = vxor.u32 %v1823, 2147483648
        %v2473 = vxor.u32 %v1825, 2147483648
        %v2474 = vxor.u32 %v2176, 2147483648
        %v2475 = vxor.u32 %v2178, 2147483648
        %v2476 = vxor.u32 %v1827, 2147483648
        %v2477 = vxor.u32 %v1829, 2147483648
        %v2478 = vxor.u32 %v2180, 2147483648
        %v2479 = vxor.u32 %v2182, 2147483648
        %v2480 = vxor.u32 %v1833, 2147483648
        %v2481 = vxor.u32 %v1835, 2147483648
        %v2482 = vxor.u32 %v2186, 2147483648
        %v2483 = vxor.u32 %v2188, 2147483648
        %v2484 = vxor.u32 %v1837, 2147483648
        %v2485 = vxor.u32 %v1839, 2147483648
        %v2486 = vxor.u32 %v2190, 2147483648
        %v2487 = vxor.u32 %v2192, 2147483648
        %v2488 = vxor.u32 %v1843, 2147483648
        %v2489 = vxor.u32 %v1845, 2147483648
        %v2490 = vxor.u32 %v2196, 2147483648
        %v2491 = vxor.u32 %v2198, 2147483648
        %v2492 = vxor.u32 %v1847, 2147483648
        %v2493 = vxor.u32 %v1849, 2147483648
        %v2494 = vxor.u32 %v2200, 2147483648
        %v2495 = vxor.u32 %v2202, 2147483648
        %v2496 = vxor.u32 %v1853, 2147483648
        %v2497 = vxor.u32 %v1855, 2147483648
        %v2498 = vxor.u32 %v2206, 2147483648
        %v2499 = vxor.u32 %v2208, 2147483648
        %v2500 = vxor.u32 %v1857, 2147483648
        %v2501 = vxor.u32 %v1859, 2147483648
        %v2502 = vxor.u32 %v2210, 2147483648
        %v2503 = vxor.u32 %v2212, 2147483648
        %v2504 = vxor.u32 %v1863, 2147483648
        %v2505 = vxor.u32 %v1865, 2147483648
        %v2506 = vxor.u32 %v2216, 2147483648
        %v2507 = vxor.u32 %v2218, 2147483648
        %v2508 = vxor.u32 %v1867, 2147483648
        %v2509 = vxor.u32 %v1869, 2147483648
        %v2510 = vxor.u32 %v2220, 2147483648
        %v2511 = vxor.u32 %v2222, 2147483648
        %v2512 = vxor.u32 %v1873, 2147483648
        %v2513 = vxor.u32 %v1875, 2147483648
        %v2514 = vxor.u32 %v2226, 2147483648
        %v2515 = vxor.u32 %v2228, 2147483648
        %v2516 = vxor.u32 %v1877, 2147483648
        %v2517 = vxor.u32 %v1879, 2147483648
        %v2518 = vxor.u32 %v2230, 2147483648
        %v2519 = vxor.u32 %v2232, 2147483648
        %v2520 = vxor.u32 %v1883, 2147483648
        %v2521 = vxor.u32 %v1885, 2147483648
        %v2522 = vxor.u32 %v2236, 2147483648
        %v2523 = vxor.u32 %v2238, 2147483648
        %v2524 = vxor.u32 %v1887, 2147483648
        %v2525 = vxor.u32 %v1889, 2147483648
        %v2526 = vxor.u32 %v2240, 2147483648
        %v2527 = vxor.u32 %v2242, 2147483648
        %v2528 = vxor.u32 %v1893, 2147483648
        %v2529 = vxor.u32 %v1895, 2147483648
        %v2530 = vxor.u32 %v2246, 2147483648
        %v2531 = vxor.u32 %v2248, 2147483648
        %v2532 = vxor.u32 %v1897, 2147483648
        %v2533 = vxor.u32 %v1899, 2147483648
        %v2534 = vxor.u32 %v2250, 2147483648
        %v2535 = vxor.u32 %v2252, 2147483648
        %v2536 = vxor.u32 %v1903, 2147483648
        %v2537 = vxor.u32 %v1905, 2147483648
        %v2538 = vxor.u32 %v2256, 2147483648
        %v2539 = vxor.u32 %v2258, 2147483648
        %v2540 = vxor.u32 %v1907, 2147483648
        %v2541 = vxor.u32 %v1909, 2147483648
        %v2542 = vxor.u32 %v2260, 2147483648
        %v2543 = vxor.u32 %v2262, 2147483648
        %v2544 = vxor.u32 %v1913, 2147483648
        %v2545 = vxor.u32 %v1915, 2147483648
        %v2546 = vxor.u32 %v2266, 2147483648
        %v2547 = vxor.u32 %v2268, 2147483648
        %v2548 = vxor.u32 %v1917, 2147483648
        %v2549 = vxor.u32 %v1919, 2147483648
        %v2550 = vxor.u32 %v2270, 2147483648
        %v2551 = vxor.u32 %v2272, 2147483648
        %v2552 = vxor.u32 %v1923, 2147483648
        %v2553 = vxor.u32 %v1925, 2147483648
        %v2554 = vxor.u32 %v2276, 2147483648
        %v2555 = vxor.u32 %v2278, 2147483648
        %v2556 = vxor.u32 %v1927, 2147483648
        %v2557 = vxor.u32 %v1929, 2147483648
        %v2558 = vxor.u32 %v2280, 2147483648
        %v2559 = vxor.u32 %v2282, 2147483648
        %v2560 = vxor.u32 %v1933, 2147483648
        %v2561 = vxor.u32 %v1935, 2147483648
        %v2562 = vxor.u32 %v2286, 2147483648
        %v2563 = vxor.u32 %v2288, 2147483648
        %v2564 = vxor.u32 %v1937, 2147483648
        %v2565 = vxor.u32 %v1939, 2147483648
        %v2566 = vxor.u32 %v2290, 2147483648
        %v2567 = vxor.u32 %v2292, 2147483648
        %v2568 = vxor.u32 %v1943, 2147483648
        %v2569 = vxor.u32 %v1945, 2147483648
        %v2570 = vxor.u32 %v2296, 2147483648
        %v2571 = vxor.u32 %v2298, 2147483648
        %v2572 = vxor.u32 %v1947, 2147483648
        %v2573 = vxor.u32 %v1949, 2147483648
        %v2574 = vxor.u32 %v2300, 2147483648
        %v2575 = vxor.u32 %v2302, 2147483648
        %v2576 = vxor.u32 %v1953, 2147483648
        %v2577 = vxor.u32 %v1955, 2147483648
        %v2578 = vxor.u32 %v2306, 2147483648
        %v2579 = vxor.u32 %v2308, 2147483648
        %v2580 = vxor.u32 %v1957, 2147483648
        %v2581 = vxor.u32 %v1959, 2147483648
        %v2582 = vxor.u32 %v2310, 2147483648
        %v2583 = vxor.u32 %v2312, 2147483648
        %v2584 = vxor.u32 %v1963, 2147483648
        %v2585 = vxor.u32 %v1965, 2147483648
        %v2586 = vxor.u32 %v2316, 2147483648
        %v2587 = vxor.u32 %v2318, 2147483648
        %v2588 = vxor.u32 %v1967, 2147483648
        %v2589 = vxor.u32 %v1969, 2147483648
        %v2590 = vxor.u32 %v2320, 2147483648
        %v2591 = vxor.u32 %v2322, 2147483648
        %v2592 = vxor.u32 %v1973, 2147483648
        %v2593 = vxor.u32 %v1975, 2147483648
        %v2594 = vxor.u32 %v2326, 2147483648
        %v2595 = vxor.u32 %v2328, 2147483648
        %v2596 = vxor.u32 %v1977, 2147483648
        %v2597 = vxor.u32 %v1979, 2147483648
        %v2598 = vxor.u32 %v2330, 2147483648
        %v2599 = vxor.u32 %v2332, 2147483648
        %v2600 = vxor.u32 %v1983, 2147483648
        %v2601 = vxor.u32 %v1985, 2147483648
        %v2602 = vxor.u32 %v2336, 2147483648
        %v2603 = vxor.u32 %v2338, 2147483648
        %v2604 = vxor.u32 %v1987, 2147483648
        %v2605 = vxor.u32 %v1989, 2147483648
        %v2606 = vxor.u32 %v2340, 2147483648
        %v2607 = vxor.u32 %v2342, 2147483648
        %v2608 = vxor.u32 %v1993, 2147483648
        %v2609 = vxor.u32 %v1995, 2147483648
        %v2610 = vxor.u32 %v2346, 2147483648
        %v2611 = vxor.u32 %v2348, 2147483648
        %v2612 = vxor.u32 %v1997, 2147483648
        %v2613 = vxor.u32 %v1999, 2147483648
        %v2614 = vxor.u32 %v2350, 2147483648
        %v2615 = vxor.u32 %v2352, 2147483648
        %v2616 = vxor.u32 %v2003, 2147483648
        %v2617 = vxor.u32 %v2005, 2147483648
        %v2618 = vxor.u32 %v2356, 2147483648
        %v2619 = vxor.u32 %v2358, 2147483648
        %v2620 = vxor.u32 %v2007, 2147483648
        %v2621 = vxor.u32 %v2009, 2147483648
        %v2622 = vxor.u32 %v2360, 2147483648
        %v2623 = vxor.u32 %v2362, 2147483648
        %v2624 = vxor.u32 %v2013, 2147483648
        %v2625 = vxor.u32 %v2015, 2147483648
        %v2626 = vxor.u32 %v2366, 2147483648
        %v2627 = vxor.u32 %v2368, 2147483648
        %v2628 = vxor.u32 %v2017, 2147483648
        %v2629 = vxor.u32 %v2019, 2147483648
        %v2630 = vxor.u32 %v2370, 2147483648
        %v2631 = vxor.u32 %v2372, 2147483648
        %v2632 = vxor.u32 %v2023, 2147483648
        %v2633 = vxor.u32 %v2025, 2147483648
        %v2634 = vxor.u32 %v2376, 2147483648
        %v2635 = vxor.u32 %v2378, 2147483648
        %v2636 = vxor.u32 %v2027, 2147483648
        %v2637 = vxor.u32 %v2029, 2147483648
        %v2638 = vxor.u32 %v2380, 2147483648
        %v2639 = vxor.u32 %v2382, 2147483648
        %v2640 = vmul.f32 %v2384, 1.442695
        %v2641 = vpow.pop %v2640
        %v2642 = vmul.f32 %v2385, 1.442695
        %v2643 = vpow.pop %v2642
        %v2644 = vmul.f32 %v2386, 1.442695
        %v2645 = vpow.pop %v2644
        %v2646 = vmul.f32 %v2387, 1.442695
        %v2647 = vpow.pop %v2646
        %v2648 = vmul.f32 %v2388, 1.442695
        %v2649 = vpow.pop %v2648
        %v2650 = vmul.f32 %v2389, 1.442695
        %v2651 = vpow.pop %v2650
        %v2652 = vmul.f32 %v2390, 1.442695
        %v2653 = vpow.pop %v2652
        %v2654 = vmul.f32 %v2391, 1.442695
        %v2655 = vpow.pop %v2654
        %v2656 = vmul.f32 %v2392, 1.442695
        %v2657 = vpow.pop %v2656
        %v2658 = vmul.f32 %v2393, 1.442695
        %v2659 = vpow.pop %v2658
        %v2660 = vmul.f32 %v2394, 1.442695
        %v2661 = vpow.pop %v2660
        %v2662 = vmul.f32 %v2395, 1.442695
        %v2663 = vpow.pop %v2662
        %v2664 = vmul.f32 %v2396, 1.442695
        %v2665 = vpow.pop %v2664
        %v2666 = vmul.f32 %v2397, 1.442695
        %v2667 = vpow.pop %v2666
        %v2668 = vmul.f32 %v2398, 1.442695
        %v2669 = vpow.pop %v2668
        %v2670 = vmul.f32 %v2399, 1.442695
        %v2671 = vpow.pop %v2670
        %v2672 = vmul.f32 %v2400, 1.442695
        %v2673 = vpow.pop %v2672
        %v2674 = vmul.f32 %v2401, 1.442695
        %v2675 = vpow.pop %v2674
        %v2676 = vmul.f32 %v2402, 1.442695
        %v2677 = vpow.pop %v2676
        %v2678 = vmul.f32 %v2403, 1.442695
        %v2679 = vpow.pop %v2678
        %v2680 = vmul.f32 %v2404, 1.442695
        %v2681 = vpow.pop %v2680
        %v2682 = vmul.f32 %v2405, 1.442695
        %v2683 = vpow.pop %v2682
        %v2684 = vmul.f32 %v2406, 1.442695
        %v2685 = vpow.pop %v2684
        %v2686 = vmul.f32 %v2407, 1.442695
        %v2687 = vpow.pop %v2686
        %v2688 = vmul.f32 %v2408, 1.442695
        %v2689 = vpow.pop %v2688
        %v2690 = vmul.f32 %v2409, 1.442695
        %v2691 = vpow.pop %v2690
        %v2692 = vmul.f32 %v2410, 1.442695
        %v2693 = vpow.pop %v2692
        %v2694 = vmul.f32 %v2411, 1.442695
        %v2695 = vpow.pop %v2694
        %v2696 = vmul.f32 %v2412, 1.442695
        %v2697 = vpow.pop %v2696
        %v2698 = vmul.f32 %v2413, 1.442695
        %v2699 = vpow.pop %v2698
        %v2700 = vmul.f32 %v2414, 1.442695
        %v2701 = vpow.pop %v2700
        %v2702 = vmul.f32 %v2415, 1.442695
        %v2703 = vpow.pop %v2702
        %v2704 = vmul.f32 %v2416, 1.442695
        %v2705 = vpow.pop %v2704
        %v2706 = vmul.f32 %v2417, 1.442695
        %v2707 = vpow.pop %v2706
        %v2708 = vmul.f32 %v2418, 1.442695
        %v2709 = vpow.pop %v2708
        %v2710 = vmul.f32 %v2419, 1.442695
        %v2711 = vpow.pop %v2710
        %v2712 = vmul.f32 %v2420, 1.442695
        %v2713 = vpow.pop %v2712
        %v2714 = vmul.f32 %v2421, 1.442695
        %v2715 = vpow.pop %v2714
        %v2716 = vmul.f32 %v2422, 1.442695
        %v2717 = vpow.pop %v2716
        %v2718 = vmul.f32 %v2423, 1.442695
        %v2719 = vpow.pop %v2718
        %v2720 = vmul.f32 %v2424, 1.442695
        %v2721 = vpow.pop %v2720
        %v2722 = vmul.f32 %v2425, 1.442695
        %v2723 = vpow.pop %v2722
        %v2724 = vmul.f32 %v2426, 1.442695
        %v2725 = vpow.pop %v2724
        %v2726 = vmul.f32 %v2427, 1.442695
        %v2727 = vpow.pop %v2726
        %v2728 = vmul.f32 %v2428, 1.442695
        %v2729 = vpow.pop %v2728
        %v2730 = vmul.f32 %v2429, 1.442695
        %v2731 = vpow.pop %v2730
        %v2732 = vmul.f32 %v2430, 1.442695
        %v2733 = vpow.pop %v2732
        %v2734 = vmul.f32 %v2431, 1.442695
        %v2735 = vpow.pop %v2734
        %v2736 = vmul.f32 %v2432, 1.442695
        %v2737 = vpow.pop %v2736
        %v2738 = vmul.f32 %v2433, 1.442695
        %v2739 = vpow.pop %v2738
        %v2740 = vmul.f32 %v2434, 1.442695
        %v2741 = vpow.pop %v2740
        %v2742 = vmul.f32 %v2435, 1.442695
        %v2743 = vpow.pop %v2742
        %v2744 = vmul.f32 %v2436, 1.442695
        %v2745 = vpow.pop %v2744
        %v2746 = vmul.f32 %v2437, 1.442695
        %v2747 = vpow.pop %v2746
        %v2748 = vmul.f32 %v2438, 1.442695
        %v2749 = vpow.pop %v2748
        %v2750 = vmul.f32 %v2439, 1.442695
        %v2751 = vpow.pop %v2750
        %v2752 = vmul.f32 %v2440, 1.442695
        %v2753 = vpow.pop %v2752
        %v2754 = vmul.f32 %v2441, 1.442695
        %v2755 = vpow.pop %v2754
        %v2756 = vmul.f32 %v2442, 1.442695
        %v2757 = vpow.pop %v2756
        %v2758 = vmul.f32 %v2443, 1.442695
        %v2759 = vpow.pop %v2758
        %v2760 = vmul.f32 %v2444, 1.442695
        %v2761 = vpow.pop %v2760
        %v2762 = vmul.f32 %v2445, 1.442695
        %v2763 = vpow.pop %v2762
        %v2764 = vmul.f32 %v2446, 1.442695
        %v2765 = vpow.pop %v2764
        %v2766 = vmul.f32 %v2447, 1.442695
        %v2767 = vpow.pop %v2766
        %v2768 = vmul.f32 %v2448, 1.442695
        %v2769 = vpow.pop %v2768
        %v2770 = vmul.f32 %v2449, 1.442695
        %v2771 = vpow.pop %v2770
        %v2772 = vmul.f32 %v2450, 1.442695
        %v2773 = vpow.pop %v2772
        %v2774 = vmul.f32 %v2451, 1.442695
        %v2775 = vpow.pop %v2774
        %v2776 = vmul.f32 %v2452, 1.442695
        %v2777 = vpow.pop %v2776
        %v2778 = vmul.f32 %v2453, 1.442695
        %v2779 = vpow.pop %v2778
        %v2780 = vmul.f32 %v2454, 1.442695
        %v2781 = vpow.pop %v2780
        %v2782 = vmul.f32 %v2455, 1.442695
        %v2783 = vpow.pop %v2782
        %v2784 = vmul.f32 %v2456, 1.442695
        %v2785 = vpow.pop %v2784
        %v2786 = vmul.f32 %v2457, 1.442695
        %v2787 = vpow.pop %v2786
        %v2788 = vmul.f32 %v2458, 1.442695
        %v2789 = vpow.pop %v2788
        %v2790 = vmul.f32 %v2459, 1.442695
        %v2791 = vpow.pop %v2790
        %v2792 = vmul.f32 %v2460, 1.442695
        %v2793 = vpow.pop %v2792
        %v2794 = vmul.f32 %v2461, 1.442695
        %v2795 = vpow.pop %v2794
        %v2796 = vmul.f32 %v2462, 1.442695
        %v2797 = vpow.pop %v2796
        %v2798 = vmul.f32 %v2463, 1.442695
        %v2799 = vpow.pop %v2798
        %v2800 = vmul.f32 %v2464, 1.442695
        %v2801 = vpow.pop %v2800
        %v2802 = vmul.f32 %v2465, 1.442695
        %v2803 = vpow.pop %v2802
        %v2804 = vmul.f32 %v2466, 1.442695
        %v2805 = vpow.pop %v2804
        %v2806 = vmul.f32 %v2467, 1.442695
        %v2807 = vpow.pop %v2806
        %v2808 = vmul.f32 %v2468, 1.442695
        %v2809 = vpow.pop %v2808
        %v2810 = vmul.f32 %v2469, 1.442695
        %v2811 = vpow.pop %v2810
        %v2812 = vmul.f32 %v2470, 1.442695
        %v2813 = vpow.pop %v2812
        %v2814 = vmul.f32 %v2471, 1.442695
        %v2815 = vpow.pop %v2814
        %v2816 = vmul.f32 %v2472, 1.442695
        %v2817 = vpow.pop %v2816
        %v2818 = vmul.f32 %v2473, 1.442695
        %v2819 = vpow.pop %v2818
        %v2820 = vmul.f32 %v2474, 1.442695
        %v2821 = vpow.pop %v2820
        %v2822 = vmul.f32 %v2475, 1.442695
        %v2823 = vpow.pop %v2822
        %v2824 = vmul.f32 %v2476, 1.442695
        %v2825 = vpow.pop %v2824
        %v2826 = vmul.f32 %v2477, 1.442695
        %v2827 = vpow.pop %v2826
        %v2828 = vmul.f32 %v2478, 1.442695
        %v2829 = vpow.pop %v2828
        %v2830 = vmul.f32 %v2479, 1.442695
        %v2831 = vpow.pop %v2830
        %v2832 = vmul.f32 %v2480, 1.442695
        %v2833 = vpow.pop %v2832
        %v2834 = vmul.f32 %v2481, 1.442695
        %v2835 = vpow.pop %v2834
        %v2836 = vmul.f32 %v2482, 1.442695
        %v2837 = vpow.pop %v2836
        %v2838 = vmul.f32 %v2483, 1.442695
        %v2839 = vpow.pop %v2838
        %v2840 = vmul.f32 %v2484, 1.442695
        %v2841 = vpow.pop %v2840
        %v2842 = vmul.f32 %v2485, 1.442695
        %v2843 = vpow.pop %v2842
        %v2844 = vmul.f32 %v2486, 1.442695
        %v2845 = vpow.pop %v2844
        %v2846 = vmul.f32 %v2487, 1.442695
        %v2847 = vpow.pop %v2846
        %v2848 = vmul.f32 %v2488, 1.442695
        %v2849 = vpow.pop %v2848
        %v2850 = vmul.f32 %v2489, 1.442695
        %v2851 = vpow.pop %v2850
        %v2852 = vmul.f32 %v2490, 1.442695
        %v2853 = vpow.pop %v2852
        %v2854 = vmul.f32 %v2491, 1.442695
        %v2855 = vpow.pop %v2854
        %v2856 = vmul.f32 %v2492, 1.442695
        %v2857 = vpow.pop %v2856
        %v2858 = vmul.f32 %v2493, 1.442695
        %v2859 = vpow.pop %v2858
        %v2860 = vmul.f32 %v2494, 1.442695
        %v2861 = vpow.pop %v2860
        %v2862 = vmul.f32 %v2495, 1.442695
        %v2863 = vpow.pop %v2862
        %v2864 = vmul.f32 %v2496, 1.442695
        %v2865 = vpow.pop %v2864
        %v2866 = vmul.f32 %v2497, 1.442695
        %v2867 = vpow.pop %v2866
        %v2868 = vmul.f32 %v2498, 1.442695
        %v2869 = vpow.pop %v2868
        %v2870 = vmul.f32 %v2499, 1.442695
        %v2871 = vpow.pop %v2870
        %v2872 = vmul.f32 %v2500, 1.442695
        %v2873 = vpow.pop %v2872
        %v2874 = vmul.f32 %v2501, 1.442695
        %v2875 = vpow.pop %v2874
        %v2876 = vmul.f32 %v2502, 1.442695
        %v2877 = vpow.pop %v2876
        %v2878 = vmul.f32 %v2503, 1.442695
        %v2879 = vpow.pop %v2878
        %v2880 = vmul.f32 %v2504, 1.442695
        %v2881 = vpow.pop %v2880
        %v2882 = vmul.f32 %v2505, 1.442695
        %v2883 = vpow.pop %v2882
        %v2884 = vmul.f32 %v2506, 1.442695
        %v2885 = vpow.pop %v2884
        %v2886 = vmul.f32 %v2507, 1.442695
        %v2887 = vpow.pop %v2886
        %v2888 = vmul.f32 %v2508, 1.442695
        %v2889 = vpow.pop %v2888
        %v2890 = vmul.f32 %v2509, 1.442695
        %v2891 = vpow.pop %v2890
        %v2892 = vmul.f32 %v2510, 1.442695
        %v2893 = vpow.pop %v2892
        %v2894 = vmul.f32 %v2511, 1.442695
        %v2895 = vpow.pop %v2894
        %v2896 = vmul.f32 %v2512, 1.442695
        %v2897 = vpow.pop %v2896
        %v2898 = vmul.f32 %v2513, 1.442695
        %v2899 = vpow.pop %v2898
        %v2900 = vmul.f32 %v2514, 1.442695
        %v2901 = vpow.pop %v2900
        %v2902 = vmul.f32 %v2515, 1.442695
        %v2903 = vpow.pop %v2902
        %v2904 = vmul.f32 %v2516, 1.442695
        %v2905 = vpow.pop %v2904
        %v2906 = vmul.f32 %v2517, 1.442695
        %v2907 = vpow.pop %v2906
        %v2908 = vmul.f32 %v2518, 1.442695
        %v2909 = vpow.pop %v2908
        %v2910 = vmul.f32 %v2519, 1.442695
        %v2911 = vpow.pop %v2910
        %v2912 = vmul.f32 %v2520, 1.442695
        %v2913 = vpow.pop %v2912
        %v2914 = vmul.f32 %v2521, 1.442695
        %v2915 = vpow.pop %v2914
        %v2916 = vmul.f32 %v2522, 1.442695
        %v2917 = vpow.pop %v2916
        %v2918 = vmul.f32 %v2523, 1.442695
        %v2919 = vpow.pop %v2918
        %v2920 = vmul.f32 %v2524, 1.442695
        %v2921 = vpow.pop %v2920
        %v2922 = vmul.f32 %v2525, 1.442695
        %v2923 = vpow.pop %v2922
        %v2924 = vmul.f32 %v2526, 1.442695
        %v2925 = vpow.pop %v2924
        %v2926 = vmul.f32 %v2527, 1.442695
        %v2927 = vpow.pop %v2926
        %v2928 = vmul.f32 %v2528, 1.442695
        %v2929 = vpow.pop %v2928
        %v2930 = vmul.f32 %v2529, 1.442695
        %v2931 = vpow.pop %v2930
        %v2932 = vmul.f32 %v2530, 1.442695
        %v2933 = vpow.pop %v2932
        %v2934 = vmul.f32 %v2531, 1.442695
        %v2935 = vpow.pop %v2934
        %v2936 = vmul.f32 %v2532, 1.442695
        %v2937 = vpow.pop %v2936
        %v2938 = vmul.f32 %v2533, 1.442695
        %v2939 = vpow.pop %v2938
        %v2940 = vmul.f32 %v2534, 1.442695
        %v2941 = vpow.pop %v2940
        %v2942 = vmul.f32 %v2535, 1.442695
        %v2943 = vpow.pop %v2942
        %v2944 = vmul.f32 %v2536, 1.442695
        %v2945 = vpow.pop %v2944
        %v2946 = vmul.f32 %v2537, 1.442695
        %v2947 = vpow.pop %v2946
        %v2948 = vmul.f32 %v2538, 1.442695
        %v2949 = vpow.pop %v2948
        %v2950 = vmul.f32 %v2539, 1.442695
        %v2951 = vpow.pop %v2950
        %v2952 = vmul.f32 %v2540, 1.442695
        %v2953 = vpow.pop %v2952
        %v2954 = vmul.f32 %v2541, 1.442695
        %v2955 = vpow.pop %v2954
        %v2956 = vmul.f32 %v2542, 1.442695
        %v2957 = vpow.pop %v2956
        %v2958 = vmul.f32 %v2543, 1.442695
        %v2959 = vpow.pop %v2958
        %v2960 = vmul.f32 %v2544, 1.442695
        %v2961 = vpow.pop %v2960
        %v2962 = vmul.f32 %v2545, 1.442695
        %v2963 = vpow.pop %v2962
        %v2964 = vmul.f32 %v2546, 1.442695
        %v2965 = vpow.pop %v2964
        %v2966 = vmul.f32 %v2547, 1.442695
        %v2967 = vpow.pop %v2966
        %v2968 = vmul.f32 %v2548, 1.442695
        %v2969 = vpow.pop %v2968
        %v2970 = vmul.f32 %v2549, 1.442695
        %v2971 = vpow.pop %v2970
        %v2972 = vmul.f32 %v2550, 1.442695
        %v2973 = vpow.pop %v2972
        %v2974 = vmul.f32 %v2551, 1.442695
        %v2975 = vpow.pop %v2974
        %v2976 = vmul.f32 %v2552, 1.442695
        %v2977 = vpow.pop %v2976
        %v2978 = vmul.f32 %v2553, 1.442695
        %v2979 = vpow.pop %v2978
        %v2980 = vmul.f32 %v2554, 1.442695
        %v2981 = vpow.pop %v2980
        %v2982 = vmul.f32 %v2555, 1.442695
        %v2983 = vpow.pop %v2982
        %v2984 = vmul.f32 %v2556, 1.442695
        %v2985 = vpow.pop %v2984
        %v2986 = vmul.f32 %v2557, 1.442695
        %v2987 = vpow.pop %v2986
        %v2988 = vmul.f32 %v2558, 1.442695
        %v2989 = vpow.pop %v2988
        %v2990 = vmul.f32 %v2559, 1.442695
        %v2991 = vpow.pop %v2990
        %v2992 = vmul.f32 %v2560, 1.442695
        %v2993 = vpow.pop %v2992
        %v2994 = vmul.f32 %v2561, 1.442695
        %v2995 = vpow.pop %v2994
        %v2996 = vmul.f32 %v2562, 1.442695
        %v2997 = vpow.pop %v2996
        %v2998 = vmul.f32 %v2563, 1.442695
        %v2999 = vpow.pop %v2998
        %v3000 = vmul.f32 %v2564, 1.442695
        %v3001 = vpow.pop %v3000
        %v3002 = vmul.f32 %v2565, 1.442695
        %v3003 = vpow.pop %v3002
        %v3004 = vmul.f32 %v2566, 1.442695
        %v3005 = vpow.pop %v3004
        %v3006 = vmul.f32 %v2567, 1.442695
        %v3007 = vpow.pop %v3006
        %v3008 = vmul.f32 %v2568, 1.442695
        %v3009 = vpow.pop %v3008
        %v3010 = vmul.f32 %v2569, 1.442695
        %v3011 = vpow.pop %v3010
        %v3012 = vmul.f32 %v2570, 1.442695
        %v3013 = vpow.pop %v3012
        %v3014 = vmul.f32 %v2571, 1.442695
        %v3015 = vpow.pop %v3014
        %v3016 = vmul.f32 %v2572, 1.442695
        %v3017 = vpow.pop %v3016
        %v3018 = vmul.f32 %v2573, 1.442695
        %v3019 = vpow.pop %v3018
        %v3020 = vmul.f32 %v2574, 1.442695
        %v3021 = vpow.pop %v3020
        %v3022 = vmul.f32 %v2575, 1.442695
        %v3023 = vpow.pop %v3022
        %v3024 = vmul.f32 %v2576, 1.442695
        %v3025 = vpow.pop %v3024
        %v3026 = vmul.f32 %v2577, 1.442695
        %v3027 = vpow.pop %v3026
        %v3028 = vmul.f32 %v2578, 1.442695
        %v3029 = vpow.pop %v3028
        %v3030 = vmul.f32 %v2579, 1.442695
        %v3031 = vpow.pop %v3030
        %v3032 = vmul.f32 %v2580, 1.442695
        %v3033 = vpow.pop %v3032
        %v3034 = vmul.f32 %v2581, 1.442695
        %v3035 = vpow.pop %v3034
        %v3036 = vmul.f32 %v2582, 1.442695
        %v3037 = vpow.pop %v3036
        %v3038 = vmul.f32 %v2583, 1.442695
        %v3039 = vpow.pop %v3038
        %v3040 = vmul.f32 %v2584, 1.442695
        %v3041 = vpow.pop %v3040
        %v3042 = vmul.f32 %v2585, 1.442695
        %v3043 = vpow.pop %v3042
        %v3044 = vmul.f32 %v2586, 1.442695
        %v3045 = vpow.pop %v3044
        %v3046 = vmul.f32 %v2587, 1.442695
        %v3047 = vpow.pop %v3046
        %v3048 = vmul.f32 %v2588, 1.442695
        %v3049 = vpow.pop %v3048
        %v3050 = vmul.f32 %v2589, 1.442695
        %v3051 = vpow.pop %v3050
        %v3052 = vmul.f32 %v2590, 1.442695
        %v3053 = vpow.pop %v3052
        %v3054 = vmul.f32 %v2591, 1.442695
        %v3055 = vpow.pop %v3054
        %v3056 = vmul.f32 %v2592, 1.442695
        %v3057 = vpow.pop %v3056
        %v3058 = vmul.f32 %v2593, 1.442695
        %v3059 = vpow.pop %v3058
        %v3060 = vmul.f32 %v2594, 1.442695
        %v3061 = vpow.pop %v3060
        %v3062 = vmul.f32 %v2595, 1.442695
        %v3063 = vpow.pop %v3062
        %v3064 = vmul.f32 %v2596, 1.442695
        %v3065 = vpow.pop %v3064
        %v3066 = vmul.f32 %v2597, 1.442695
        %v3067 = vpow.pop %v3066
        %v3068 = vmul.f32 %v2598, 1.442695
        %v3069 = vpow.pop %v3068
        %v3070 = vmul.f32 %v2599, 1.442695
        %v3071 = vpow.pop %v3070
        %v3072 = vmul.f32 %v2600, 1.442695
        %v3073 = vpow.pop %v3072
        %v3074 = vmul.f32 %v2601, 1.442695
        %v3075 = vpow.pop %v3074
        %v3076 = vmul.f32 %v2602, 1.442695
        %v3077 = vpow.pop %v3076
        %v3078 = vmul.f32 %v2603, 1.442695
        %v3079 = vpow.pop %v3078
        %v3080 = vmul.f32 %v2604, 1.442695
        %v3081 = vpow.pop %v3080
        %v3082 = vmul.f32 %v2605, 1.442695
        %v3083 = vpow.pop %v3082
        %v3084 = vmul.f32 %v2606, 1.442695
        %v3085 = vpow.pop %v3084
        %v3086 = vmul.f32 %v2607, 1.442695
        %v3087 = vpow.pop %v3086
        %v3088 = vmul.f32 %v2608, 1.442695
        %v3089 = vpow.pop %v3088
        %v3090 = vmul.f32 %v2609, 1.442695
        %v3091 = vpow.pop %v3090
        %v3092 = vmul.f32 %v2610, 1.442695
        %v3093 = vpow.pop %v3092
        %v3094 = vmul.f32 %v2611, 1.442695
        %v3095 = vpow.pop %v3094
        %v3096 = vmul.f32 %v2612, 1.442695
        %v3097 = vpow.pop %v3096
        %v3098 = vmul.f32 %v2613, 1.442695
        %v3099 = vpow.pop %v3098
        %v3100 = vmul.f32 %v2614, 1.442695
        %v3101 = vpow.pop %v3100
        %v3102 = vmul.f32 %v2615, 1.442695
        %v3103 = vpow.pop %v3102
        %v3104 = vmul.f32 %v2616, 1.442695
        %v3105 = vpow.pop %v3104
        %v3106 = vmul.f32 %v2617, 1.442695
        %v3107 = vpow.pop %v3106
        %v3108 = vmul.f32 %v2618, 1.442695
        %v3109 = vpow.pop %v3108
        %v3110 = vmul.f32 %v2619, 1.442695
        %v3111 = vpow.pop %v3110
        %v3112 = vmul.f32 %v2620, 1.442695
        %v3113 = vpow.pop %v3112
        %v3114 = vmul.f32 %v2621, 1.442695
        %v3115 = vpow.pop %v3114
        %v3116 = vmul.f32 %v2622, 1.442695
        %v3117 = vpow.pop %v3116
        %v3118 = vmul.f32 %v2623, 1.442695
        %v3119 = vpow.pop %v3118
        %v3120 = vmul.f32 %v2624, 1.442695
        %v3121 = vpow.pop %v3120
        %v3122 = vmul.f32 %v2625, 1.442695
        %v3123 = vpow.pop %v3122
        %v3124 = vmul.f32 %v2626, 1.442695
        %v3125 = vpow.pop %v3124
        %v3126 = vmul.f32 %v2627, 1.442695
        %v3127 = vpow.pop %v3126
        %v3128 = vmul.f32 %v2628, 1.442695
        %v3129 = vpow.pop %v3128
        %v3130 = vmul.f32 %v2629, 1.442695
        %v3131 = vpow.pop %v3130
        %v3132 = vmul.f32 %v2630, 1.442695
        %v3133 = vpow.pop %v3132
        %v3134 = vmul.f32 %v2631, 1.442695
        %v3135 = vpow.pop %v3134
        %v3136 = vmul.f32 %v2632, 1.442695
        %v3137 = vpow.pop %v3136
        %v3138 = vmul.f32 %v2633, 1.442695
        %v3139 = vpow.pop %v3138
        %v3140 = vmul.f32 %v2634, 1.442695
        %v3141 = vpow.pop %v3140
        %v3142 = vmul.f32 %v2635, 1.442695
        %v3143 = vpow.pop %v3142
        %v3144 = vmul.f32 %v2636, 1.442695
        %v3145 = vpow.pop %v3144
        %v3146 = vmul.f32 %v2637, 1.442695
        %v3147 = vpow.pop %v3146
        %v3148 = vmul.f32 %v2638, 1.442695
        %v3149 = vpow.pop %v3148
        %v3150 = vmul.f32 %v2639, 1.442695
        %v3151 = vpow.pop %v3150
        %v3152 = vadd.f32 %v2641, 1.0
        %v3153 = vadd.f32 %v2643, 1.0
        %v3154 = vadd.f32 %v2645, 1.0
        %v3155 = vadd.f32 %v2647, 1.0
        %v3156 = vadd.f32 %v2649, 1.0
        %v3157 = vadd.f32 %v2651, 1.0
        %v3158 = vadd.f32 %v2653, 1.0
        %v3159 = vadd.f32 %v2655, 1.0
        %v3160 = vadd.f32 %v2657, 1.0
        %v3161 = vadd.f32 %v2659, 1.0
        %v3162 = vadd.f32 %v2661, 1.0
        %v3163 = vadd.f32 %v2663, 1.0
        %v3164 = vadd.f32 %v2665, 1.0
        %v3165 = vadd.f32 %v2667, 1.0
        %v3166 = vadd.f32 %v2669, 1.0
        %v3167 = vadd.f32 %v2671, 1.0
        %v3168 = vadd.f32 %v2673, 1.0
        %v3169 = vadd.f32 %v2675, 1.0
        %v3170 = vadd.f32 %v2677, 1.0
        %v3171 = vadd.f32 %v2679, 1.0
        %v3172 = vadd.f32 %v2681, 1.0
        %v3173 = vadd.f32 %v2683, 1.0
        %v3174 = vadd.f32 %v2685, 1.0
        %v3175 = vadd.f32 %v2687, 1.0
        %v3176 = vadd.f32 %v2689, 1.0
        %v3177 = vadd.f32 %v2691, 1.0
        %v3178 = vadd.f32 %v2693, 1.0
        %v3179 = vadd.f32 %v2695, 1.0
        %v3180 = vadd.f32 %v2697, 1.0
        %v3181 = vadd.f32 %v2699, 1.0
        %v3182 = vadd.f32 %v2701, 1.0
        %v3183 = vadd.f32 %v2703, 1.0
        %v3184 = vadd.f32 %v2705, 1.0
        %v3185 = vadd.f32 %v2707, 1.0
        %v3186 = vadd.f32 %v2709, 1.0
        %v3187 = vadd.f32 %v2711, 1.0
        %v3188 = vadd.f32 %v2713, 1.0
        %v3189 = vadd.f32 %v2715, 1.0
        %v3190 = vadd.f32 %v2717, 1.0
        %v3191 = vadd.f32 %v2719, 1.0
        %v3192 = vadd.f32 %v2721, 1.0
        %v3193 = vadd.f32 %v2723, 1.0
        %v3194 = vadd.f32 %v2725, 1.0
        %v3195 = vadd.f32 %v2727, 1.0
        %v3196 = vadd.f32 %v2729, 1.0
        %v3197 = vadd.f32 %v2731, 1.0
        %v3198 = vadd.f32 %v2733, 1.0
        %v3199 = vadd.f32 %v2735, 1.0
        %v3200 = vadd.f32 %v2737, 1.0
        %v3201 = vadd.f32 %v2739, 1.0
        %v3202 = vadd.f32 %v2741, 1.0
        %v3203 = vadd.f32 %v2743, 1.0
        %v3204 = vadd.f32 %v2745, 1.0
        %v3205 = vadd.f32 %v2747, 1.0
        %v3206 = vadd.f32 %v2749, 1.0
        %v3207 = vadd.f32 %v2751, 1.0
        %v3208 = vadd.f32 %v2753, 1.0
        %v3209 = vadd.f32 %v2755, 1.0
        %v3210 = vadd.f32 %v2757, 1.0
        %v3211 = vadd.f32 %v2759, 1.0
        %v3212 = vadd.f32 %v2761, 1.0
        %v3213 = vadd.f32 %v2763, 1.0
        %v3214 = vadd.f32 %v2765, 1.0
        %v3215 = vadd.f32 %v2767, 1.0
        %v3216 = vadd.f32 %v2769, 1.0
        %v3217 = vadd.f32 %v2771, 1.0
        %v3218 = vadd.f32 %v2773, 1.0
        %v3219 = vadd.f32 %v2775, 1.0
        %v3220 = vadd.f32 %v2777, 1.0
        %v3221 = vadd.f32 %v2779, 1.0
        %v3222 = vadd.f32 %v2781, 1.0
        %v3223 = vadd.f32 %v2783, 1.0
        %v3224 = vadd.f32 %v2785, 1.0
        %v3225 = vadd.f32 %v2787, 1.0
        %v3226 = vadd.f32 %v2789, 1.0
        %v3227 = vadd.f32 %v2791, 1.0
        %v3228 = vadd.f32 %v2793, 1.0
        %v3229 = vadd.f32 %v2795, 1.0
        %v3230 = vadd.f32 %v2797, 1.0
        %v3231 = vadd.f32 %v2799, 1.0
        %v3232 = vadd.f32 %v2801, 1.0
        %v3233 = vadd.f32 %v2803, 1.0
        %v3234 = vadd.f32 %v2805, 1.0
        %v3235 = vadd.f32 %v2807, 1.0
        %v3236 = vadd.f32 %v2809, 1.0
        %v3237 = vadd.f32 %v2811, 1.0
        %v3238 = vadd.f32 %v2813, 1.0
        %v3239 = vadd.f32 %v2815, 1.0
        %v3240 = vadd.f32 %v2817, 1.0
        %v3241 = vadd.f32 %v2819, 1.0
        %v3242 = vadd.f32 %v2821, 1.0
        %v3243 = vadd.f32 %v2823, 1.0
        %v3244 = vadd.f32 %v2825, 1.0
        %v3245 = vadd.f32 %v2827, 1.0
        %v3246 = vadd.f32 %v2829, 1.0
        %v3247 = vadd.f32 %v2831, 1.0
        %v3248 = vadd.f32 %v2833, 1.0
        %v3249 = vadd.f32 %v2835, 1.0
        %v3250 = vadd.f32 %v2837, 1.0
        %v3251 = vadd.f32 %v2839, 1.0
        %v3252 = vadd.f32 %v2841, 1.0
        %v3253 = vadd.f32 %v2843, 1.0
        %v3254 = vadd.f32 %v2845, 1.0
        %v3255 = vadd.f32 %v2847, 1.0
        %v3256 = vadd.f32 %v2849, 1.0
        %v3257 = vadd.f32 %v2851, 1.0
        %v3258 = vadd.f32 %v2853, 1.0
        %v3259 = vadd.f32 %v2855, 1.0
        %v3260 = vadd.f32 %v2857, 1.0
        %v3261 = vadd.f32 %v2859, 1.0
        %v3262 = vadd.f32 %v2861, 1.0
        %v3263 = vadd.f32 %v2863, 1.0
        %v3264 = vadd.f32 %v2865, 1.0
        %v3265 = vadd.f32 %v2867, 1.0
        %v3266 = vadd.f32 %v2869, 1.0
        %v3267 = vadd.f32 %v2871, 1.0
        %v3268 = vadd.f32 %v2873, 1.0
        %v3269 = vadd.f32 %v2875, 1.0
        %v3270 = vadd.f32 %v2877, 1.0
        %v3271 = vadd.f32 %v2879, 1.0
        %v3272 = vadd.f32 %v2881, 1.0
        %v3273 = vadd.f32 %v2883, 1.0
        %v3274 = vadd.f32 %v2885, 1.0
        %v3275 = vadd.f32 %v2887, 1.0
        %v3276 = vadd.f32 %v2889, 1.0
        %v3277 = vadd.f32 %v2891, 1.0
        %v3278 = vadd.f32 %v2893, 1.0
        %v3279 = vadd.f32 %v2895, 1.0
        %v3280 = vadd.f32 %v2897, 1.0
        %v3281 = vadd.f32 %v2899, 1.0
        %v3282 = vadd.f32 %v2901, 1.0
        %v3283 = vadd.f32 %v2903, 1.0
        %v3284 = vadd.f32 %v2905, 1.0
        %v3285 = vadd.f32 %v2907, 1.0
        %v3286 = vadd.f32 %v2909, 1.0
        %v3287 = vadd.f32 %v2911, 1.0
        %v3288 = vadd.f32 %v2913, 1.0
        %v3289 = vadd.f32 %v2915, 1.0
        %v3290 = vadd.f32 %v2917, 1.0
        %v3291 = vadd.f32 %v2919, 1.0
        %v3292 = vadd.f32 %v2921, 1.0
        %v3293 = vadd.f32 %v2923, 1.0
        %v3294 = vadd.f32 %v2925, 1.0
        %v3295 = vadd.f32 %v2927, 1.0
        %v3296 = vadd.f32 %v2929, 1.0
        %v3297 = vadd.f32 %v2931, 1.0
        %v3298 = vadd.f32 %v2933, 1.0
        %v3299 = vadd.f32 %v2935, 1.0
        %v3300 = vadd.f32 %v2937, 1.0
        %v3301 = vadd.f32 %v2939, 1.0
        %v3302 = vadd.f32 %v2941, 1.0
        %v3303 = vadd.f32 %v2943, 1.0
        %v3304 = vadd.f32 %v2945, 1.0
        %v3305 = vadd.f32 %v2947, 1.0
        %v3306 = vadd.f32 %v2949, 1.0
        %v3307 = vadd.f32 %v2951, 1.0
        %v3308 = vadd.f32 %v2953, 1.0
        %v3309 = vadd.f32 %v2955, 1.0
        %v3310 = vadd.f32 %v2957, 1.0
        %v3311 = vadd.f32 %v2959, 1.0
        %v3312 = vadd.f32 %v2961, 1.0
        %v3313 = vadd.f32 %v2963, 1.0
        %v3314 = vadd.f32 %v2965, 1.0
        %v3315 = vadd.f32 %v2967, 1.0
        %v3316 = vadd.f32 %v2969, 1.0
        %v3317 = vadd.f32 %v2971, 1.0
        %v3318 = vadd.f32 %v2973, 1.0
        %v3319 = vadd.f32 %v2975, 1.0
        %v3320 = vadd.f32 %v2977, 1.0
        %v3321 = vadd.f32 %v2979, 1.0
        %v3322 = vadd.f32 %v2981, 1.0
        %v3323 = vadd.f32 %v2983, 1.0
        %v3324 = vadd.f32 %v2985, 1.0
        %v3325 = vadd.f32 %v2987, 1.0
        %v3326 = vadd.f32 %v2989, 1.0
        %v3327 = vadd.f32 %v2991, 1.0
        %v3328 = vadd.f32 %v2993, 1.0
        %v3329 = vadd.f32 %v2995, 1.0
        %v3330 = vadd.f32 %v2997, 1.0
        %v3331 = vadd.f32 %v2999, 1.0
        %v3332 = vadd.f32 %v3001, 1.0
        %v3333 = vadd.f32 %v3003, 1.0
        %v3334 = vadd.f32 %v3005, 1.0
        %v3335 = vadd.f32 %v3007, 1.0
        %v3336 = vadd.f32 %v3009, 1.0
        %v3337 = vadd.f32 %v3011, 1.0
        %v3338 = vadd.f32 %v3013, 1.0
        %v3339 = vadd.f32 %v3015, 1.0
        %v3340 = vadd.f32 %v3017, 1.0
        %v3341 = vadd.f32 %v3019, 1.0
        %v3342 = vadd.f32 %v3021, 1.0
        %v3343 = vadd.f32 %v3023, 1.0
        %v3344 = vadd.f32 %v3025, 1.0
        %v3345 = vadd.f32 %v3027, 1.0
        %v3346 = vadd.f32 %v3029, 1.0
        %v3347 = vadd.f32 %v3031, 1.0
        %v3348 = vadd.f32 %v3033, 1.0
        %v3349 = vadd.f32 %v3035, 1.0
        %v3350 = vadd.f32 %v3037, 1.0
        %v3351 = vadd.f32 %v3039, 1.0
        %v3352 = vadd.f32 %v3041, 1.0
        %v3353 = vadd.f32 %v3043, 1.0
        %v3354 = vadd.f32 %v3045, 1.0
        %v3355 = vadd.f32 %v3047, 1.0
        %v3356 = vadd.f32 %v3049, 1.0
        %v3357 = vadd.f32 %v3051, 1.0
        %v3358 = vadd.f32 %v3053, 1.0
        %v3359 = vadd.f32 %v3055, 1.0
        %v3360 = vadd.f32 %v3057, 1.0
        %v3361 = vadd.f32 %v3059, 1.0
        %v3362 = vadd.f32 %v3061, 1.0
        %v3363 = vadd.f32 %v3063, 1.0
        %v3364 = vadd.f32 %v3065, 1.0
        %v3365 = vadd.f32 %v3067, 1.0
        %v3366 = vadd.f32 %v3069, 1.0
        %v3367 = vadd.f32 %v3071, 1.0
        %v3368 = vadd.f32 %v3073, 1.0
        %v3369 = vadd.f32 %v3075, 1.0
        %v3370 = vadd.f32 %v3077, 1.0
        %v3371 = vadd.f32 %v3079, 1.0
        %v3372 = vadd.f32 %v3081, 1.0
        %v3373 = vadd.f32 %v3083, 1.0
        %v3374 = vadd.f32 %v3085, 1.0
        %v3375 = vadd.f32 %v3087, 1.0
        %v3376 = vadd.f32 %v3089, 1.0
        %v3377 = vadd.f32 %v3091, 1.0
        %v3378 = vadd.f32 %v3093, 1.0
        %v3379 = vadd.f32 %v3095, 1.0
        %v3380 = vadd.f32 %v3097, 1.0
        %v3381 = vadd.f32 %v3099, 1.0
        %v3382 = vadd.f32 %v3101, 1.0
        %v3383 = vadd.f32 %v3103, 1.0
        %v3384 = vadd.f32 %v3105, 1.0
        %v3385 = vadd.f32 %v3107, 1.0
        %v3386 = vadd.f32 %v3109, 1.0
        %v3387 = vadd.f32 %v3111, 1.0
        %v3388 = vadd.f32 %v3113, 1.0
        %v3389 = vadd.f32 %v3115, 1.0
        %v3390 = vadd.f32 %v3117, 1.0
        %v3391 = vadd.f32 %v3119, 1.0
        %v3392 = vadd.f32 %v3121, 1.0
        %v3393 = vadd.f32 %v3123, 1.0
        %v3394 = vadd.f32 %v3125, 1.0
        %v3395 = vadd.f32 %v3127, 1.0
        %v3396 = vadd.f32 %v3129, 1.0
        %v3397 = vadd.f32 %v3131, 1.0
        %v3398 = vadd.f32 %v3133, 1.0
        %v3399 = vadd.f32 %v3135, 1.0
        %v3400 = vadd.f32 %v3137, 1.0
        %v3401 = vadd.f32 %v3139, 1.0
        %v3402 = vadd.f32 %v3141, 1.0
        %v3403 = vadd.f32 %v3143, 1.0
        %v3404 = vadd.f32 %v3145, 1.0
        %v3405 = vadd.f32 %v3147, 1.0
        %v3406 = vadd.f32 %v3149, 1.0
        %v3407 = vadd.f32 %v3151, 1.0
        %v3408 = vrcp.pop %v3152
        %v3409 = vmul.f32 1.0, %v3408
        %v3410 = vrcp.pop %v3153
        %v3411 = vmul.f32 1.0, %v3410
        %v3412 = vrcp.pop %v3154
        %v3413 = vmul.f32 1.0, %v3412
        %v3414 = vrcp.pop %v3155
        %v3415 = vmul.f32 1.0, %v3414
        %v3416 = vrcp.pop %v3156
        %v3417 = vmul.f32 1.0, %v3416
        %v3418 = vrcp.pop %v3157
        %v3419 = vmul.f32 1.0, %v3418
        %v3420 = vrcp.pop %v3158
        %v3421 = vmul.f32 1.0, %v3420
        %v3422 = vrcp.pop %v3159
        %v3423 = vmul.f32 1.0, %v3422
        %v3424 = vrcp.pop %v3160
        %v3425 = vmul.f32 1.0, %v3424
        %v3426 = vrcp.pop %v3161
        %v3427 = vmul.f32 1.0, %v3426
        %v3428 = vrcp.pop %v3162
        %v3429 = vmul.f32 1.0, %v3428
        %v3430 = vrcp.pop %v3163
        %v3431 = vmul.f32 1.0, %v3430
        %v3432 = vrcp.pop %v3164
        %v3433 = vmul.f32 1.0, %v3432
        %v3434 = vrcp.pop %v3165
        %v3435 = vmul.f32 1.0, %v3434
        %v3436 = vrcp.pop %v3166
        %v3437 = vmul.f32 1.0, %v3436
        %v3438 = vrcp.pop %v3167
        %v3439 = vmul.f32 1.0, %v3438
        %v3440 = vrcp.pop %v3168
        %v3441 = vmul.f32 1.0, %v3440
        %v3442 = vrcp.pop %v3169
        %v3443 = vmul.f32 1.0, %v3442
        %v3444 = vrcp.pop %v3170
        %v3445 = vmul.f32 1.0, %v3444
        %v3446 = vrcp.pop %v3171
        %v3447 = vmul.f32 1.0, %v3446
        %v3448 = vrcp.pop %v3172
        %v3449 = vmul.f32 1.0, %v3448
        %v3450 = vrcp.pop %v3173
        %v3451 = vmul.f32 1.0, %v3450
        %v3452 = vrcp.pop %v3174
        %v3453 = vmul.f32 1.0, %v3452
        %v3454 = vrcp.pop %v3175
        %v3455 = vmul.f32 1.0, %v3454
        %v3456 = vrcp.pop %v3176
        %v3457 = vmul.f32 1.0, %v3456
        %v3458 = vrcp.pop %v3177
        %v3459 = vmul.f32 1.0, %v3458
        %v3460 = vrcp.pop %v3178
        %v3461 = vmul.f32 1.0, %v3460
        %v3462 = vrcp.pop %v3179
        %v3463 = vmul.f32 1.0, %v3462
        %v3464 = vrcp.pop %v3180
        %v3465 = vmul.f32 1.0, %v3464
        %v3466 = vrcp.pop %v3181
        %v3467 = vmul.f32 1.0, %v3466
        %v3468 = vrcp.pop %v3182
        %v3469 = vmul.f32 1.0, %v3468
        %v3470 = vrcp.pop %v3183
        %v3471 = vmul.f32 1.0, %v3470
        %v3472 = vrcp.pop %v3184
        %v3473 = vmul.f32 1.0, %v3472
        %v3474 = vrcp.pop %v3185
        %v3475 = vmul.f32 1.0, %v3474
        %v3476 = vrcp.pop %v3186
        %v3477 = vmul.f32 1.0, %v3476
        %v3478 = vrcp.pop %v3187
        %v3479 = vmul.f32 1.0, %v3478
        %v3480 = vrcp.pop %v3188
        %v3481 = vmul.f32 1.0, %v3480
        %v3482 = vrcp.pop %v3189
        %v3483 = vmul.f32 1.0, %v3482
        %v3484 = vrcp.pop %v3190
        %v3485 = vmul.f32 1.0, %v3484
        %v3486 = vrcp.pop %v3191
        %v3487 = vmul.f32 1.0, %v3486
        %v3488 = vrcp.pop %v3192
        %v3489 = vmul.f32 1.0, %v3488
        %v3490 = vrcp.pop %v3193
        %v3491 = vmul.f32 1.0, %v3490
        %v3492 = vrcp.pop %v3194
        %v3493 = vmul.f32 1.0, %v3492
        %v3494 = vrcp.pop %v3195
        %v3495 = vmul.f32 1.0, %v3494
        %v3496 = vrcp.pop %v3196
        %v3497 = vmul.f32 1.0, %v3496
        %v3498 = vrcp.pop %v3197
        %v3499 = vmul.f32 1.0, %v3498
        %v3500 = vrcp.pop %v3198
        %v3501 = vmul.f32 1.0, %v3500
        %v3502 = vrcp.pop %v3199
        %v3503 = vmul.f32 1.0, %v3502
        %v3504 = vrcp.pop %v3200
        %v3505 = vmul.f32 1.0, %v3504
        %v3506 = vrcp.pop %v3201
        %v3507 = vmul.f32 1.0, %v3506
        %v3508 = vrcp.pop %v3202
        %v3509 = vmul.f32 1.0, %v3508
        %v3510 = vrcp.pop %v3203
        %v3511 = vmul.f32 1.0, %v3510
        %v3512 = vrcp.pop %v3204
        %v3513 = vmul.f32 1.0, %v3512
        %v3514 = vrcp.pop %v3205
        %v3515 = vmul.f32 1.0, %v3514
        %v3516 = vrcp.pop %v3206
        %v3517 = vmul.f32 1.0, %v3516
        %v3518 = vrcp.pop %v3207
        %v3519 = vmul.f32 1.0, %v3518
        %v3520 = vrcp.pop %v3208
        %v3521 = vmul.f32 1.0, %v3520
        %v3522 = vrcp.pop %v3209
        %v3523 = vmul.f32 1.0, %v3522
        %v3524 = vrcp.pop %v3210
        %v3525 = vmul.f32 1.0, %v3524
        %v3526 = vrcp.pop %v3211
        %v3527 = vmul.f32 1.0, %v3526
        %v3528 = vrcp.pop %v3212
        %v3529 = vmul.f32 1.0, %v3528
        %v3530 = vrcp.pop %v3213
        %v3531 = vmul.f32 1.0, %v3530
        %v3532 = vrcp.pop %v3214
        %v3533 = vmul.f32 1.0, %v3532
        %v3534 = vrcp.pop %v3215
        %v3535 = vmul.f32 1.0, %v3534
        %v3536 = vrcp.pop %v3216
        %v3537 = vmul.f32 1.0, %v3536
        %v3538 = vrcp.pop %v3217
        %v3539 = vmul.f32 1.0, %v3538
        %v3540 = vrcp.pop %v3218
        %v3541 = vmul.f32 1.0, %v3540
        %v3542 = vrcp.pop %v3219
        %v3543 = vmul.f32 1.0, %v3542
        %v3544 = vrcp.pop %v3220
        %v3545 = vmul.f32 1.0, %v3544
        %v3546 = vrcp.pop %v3221
        %v3547 = vmul.f32 1.0, %v3546
        %v3548 = vrcp.pop %v3222
        %v3549 = vmul.f32 1.0, %v3548
        %v3550 = vrcp.pop %v3223
        %v3551 = vmul.f32 1.0, %v3550
        %v3552 = vrcp.pop %v3224
        %v3553 = vmul.f32 1.0, %v3552
        %v3554 = vrcp.pop %v3225
        %v3555 = vmul.f32 1.0, %v3554
        %v3556 = vrcp.pop %v3226
        %v3557 = vmul.f32 1.0, %v3556
        %v3558 = vrcp.pop %v3227
        %v3559 = vmul.f32 1.0, %v3558
        %v3560 = vrcp.pop %v3228
        %v3561 = vmul.f32 1.0, %v3560
        %v3562 = vrcp.pop %v3229
        %v3563 = vmul.f32 1.0, %v3562
        %v3564 = vrcp.pop %v3230
        %v3565 = vmul.f32 1.0, %v3564
        %v3566 = vrcp.pop %v3231
        %v3567 = vmul.f32 1.0, %v3566
        %v3568 = vrcp.pop %v3232
        %v3569 = vmul.f32 1.0, %v3568
        %v3570 = vrcp.pop %v3233
        %v3571 = vmul.f32 1.0, %v3570
        %v3572 = vrcp.pop %v3234
        %v3573 = vmul.f32 1.0, %v3572
        %v3574 = vrcp.pop %v3235
        %v3575 = vmul.f32 1.0, %v3574
        %v3576 = vrcp.pop %v3236
        %v3577 = vmul.f32 1.0, %v3576
        %v3578 = vrcp.pop %v3237
        %v3579 = vmul.f32 1.0, %v3578
        %v3580 = vrcp.pop %v3238
        %v3581 = vmul.f32 1.0, %v3580
        %v3582 = vrcp.pop %v3239
        %v3583 = vmul.f32 1.0, %v3582
        %v3584 = vrcp.pop %v3240
        %v3585 = vmul.f32 1.0, %v3584
        %v3586 = vrcp.pop %v3241
        %v3587 = vmul.f32 1.0, %v3586
        %v3588 = vrcp.pop %v3242
        %v3589 = vmul.f32 1.0, %v3588
        %v3590 = vrcp.pop %v3243
        %v3591 = vmul.f32 1.0, %v3590
        %v3592 = vrcp.pop %v3244
        %v3593 = vmul.f32 1.0, %v3592
        %v3594 = vrcp.pop %v3245
        %v3595 = vmul.f32 1.0, %v3594
        %v3596 = vrcp.pop %v3246
        %v3597 = vmul.f32 1.0, %v3596
        %v3598 = vrcp.pop %v3247
        %v3599 = vmul.f32 1.0, %v3598
        %v3600 = vrcp.pop %v3248
        %v3601 = vmul.f32 1.0, %v3600
        %v3602 = vrcp.pop %v3249
        %v3603 = vmul.f32 1.0, %v3602
        %v3604 = vrcp.pop %v3250
        %v3605 = vmul.f32 1.0, %v3604
        %v3606 = vrcp.pop %v3251
        %v3607 = vmul.f32 1.0, %v3606
        %v3608 = vrcp.pop %v3252
        %v3609 = vmul.f32 1.0, %v3608
        %v3610 = vrcp.pop %v3253
        %v3611 = vmul.f32 1.0, %v3610
        %v3612 = vrcp.pop %v3254
        %v3613 = vmul.f32 1.0, %v3612
        %v3614 = vrcp.pop %v3255
        %v3615 = vmul.f32 1.0, %v3614
        %v3616 = vrcp.pop %v3256
        %v3617 = vmul.f32 1.0, %v3616
        %v3618 = vrcp.pop %v3257
        %v3619 = vmul.f32 1.0, %v3618
        %v3620 = vrcp.pop %v3258
        %v3621 = vmul.f32 1.0, %v3620
        %v3622 = vrcp.pop %v3259
        %v3623 = vmul.f32 1.0, %v3622
        %v3624 = vrcp.pop %v3260
        %v3625 = vmul.f32 1.0, %v3624
        %v3626 = vrcp.pop %v3261
        %v3627 = vmul.f32 1.0, %v3626
        %v3628 = vrcp.pop %v3262
        %v3629 = vmul.f32 1.0, %v3628
        %v3630 = vrcp.pop %v3263
        %v3631 = vmul.f32 1.0, %v3630
        %v3632 = vrcp.pop %v3264
        %v3633 = vmul.f32 1.0, %v3632
        %v3634 = vrcp.pop %v3265
        %v3635 = vmul.f32 1.0, %v3634
        %v3636 = vrcp.pop %v3266
        %v3637 = vmul.f32 1.0, %v3636
        %v3638 = vrcp.pop %v3267
        %v3639 = vmul.f32 1.0, %v3638
        %v3640 = vrcp.pop %v3268
        %v3641 = vmul.f32 1.0, %v3640
        %v3642 = vrcp.pop %v3269
        %v3643 = vmul.f32 1.0, %v3642
        %v3644 = vrcp.pop %v3270
        %v3645 = vmul.f32 1.0, %v3644
        %v3646 = vrcp.pop %v3271
        %v3647 = vmul.f32 1.0, %v3646
        %v3648 = vrcp.pop %v3272
        %v3649 = vmul.f32 1.0, %v3648
        %v3650 = vrcp.pop %v3273
        %v3651 = vmul.f32 1.0, %v3650
        %v3652 = vrcp.pop %v3274
        %v3653 = vmul.f32 1.0, %v3652
        %v3654 = vrcp.pop %v3275
        %v3655 = vmul.f32 1.0, %v3654
        %v3656 = vrcp.pop %v3276
        %v3657 = vmul.f32 1.0, %v3656
        %v3658 = vrcp.pop %v3277
        %v3659 = vmul.f32 1.0, %v3658
        %v3660 = vrcp.pop %v3278
        %v3661 = vmul.f32 1.0, %v3660
        %v3662 = vrcp.pop %v3279
        %v3663 = vmul.f32 1.0, %v3662
        %v3664 = vrcp.pop %v3280
        %v3665 = vmul.f32 1.0, %v3664
        %v3666 = vrcp.pop %v3281
        %v3667 = vmul.f32 1.0, %v3666
        %v3668 = vrcp.pop %v3282
        %v3669 = vmul.f32 1.0, %v3668
        %v3670 = vrcp.pop %v3283
        %v3671 = vmul.f32 1.0, %v3670
        %v3672 = vrcp.pop %v3284
        %v3673 = vmul.f32 1.0, %v3672
        %v3674 = vrcp.pop %v3285
        %v3675 = vmul.f32 1.0, %v3674
        %v3676 = vrcp.pop %v3286
        %v3677 = vmul.f32 1.0, %v3676
        %v3678 = vrcp.pop %v3287
        %v3679 = vmul.f32 1.0, %v3678
        %v3680 = vrcp.pop %v3288
        %v3681 = vmul.f32 1.0, %v3680
        %v3682 = vrcp.pop %v3289
        %v3683 = vmul.f32 1.0, %v3682
        %v3684 = vrcp.pop %v3290
        %v3685 = vmul.f32 1.0, %v3684
        %v3686 = vrcp.pop %v3291
        %v3687 = vmul.f32 1.0, %v3686
        %v3688 = vrcp.pop %v3292
        %v3689 = vmul.f32 1.0, %v3688
        %v3690 = vrcp.pop %v3293
        %v3691 = vmul.f32 1.0, %v3690
        %v3692 = vrcp.pop %v3294
        %v3693 = vmul.f32 1.0, %v3692
        %v3694 = vrcp.pop %v3295
        %v3695 = vmul.f32 1.0, %v3694
        %v3696 = vrcp.pop %v3296
        %v3697 = vmul.f32 1.0, %v3696
        %v3698 = vrcp.pop %v3297
        %v3699 = vmul.f32 1.0, %v3698
        %v3700 = vrcp.pop %v3298
        %v3701 = vmul.f32 1.0, %v3700
        %v3702 = vrcp.pop %v3299
        %v3703 = vmul.f32 1.0, %v3702
        %v3704 = vrcp.pop %v3300
        %v3705 = vmul.f32 1.0, %v3704
        %v3706 = vrcp.pop %v3301
        %v3707 = vmul.f32 1.0, %v3706
        %v3708 = vrcp.pop %v3302
        %v3709 = vmul.f32 1.0, %v3708
        %v3710 = vrcp.pop %v3303
        %v3711 = vmul.f32 1.0, %v3710
        %v3712 = vrcp.pop %v3304
        %v3713 = vmul.f32 1.0, %v3712
        %v3714 = vrcp.pop %v3305
        %v3715 = vmul.f32 1.0, %v3714
        %v3716 = vrcp.pop %v3306
        %v3717 = vmul.f32 1.0, %v3716
        %v3718 = vrcp.pop %v3307
        %v3719 = vmul.f32 1.0, %v3718
        %v3720 = vrcp.pop %v3308
        %v3721 = vmul.f32 1.0, %v3720
        %v3722 = vrcp.pop %v3309
        %v3723 = vmul.f32 1.0, %v3722
        %v3724 = vrcp.pop %v3310
        %v3725 = vmul.f32 1.0, %v3724
        %v3726 = vrcp.pop %v3311
        %v3727 = vmul.f32 1.0, %v3726
        %v3728 = vrcp.pop %v3312
        %v3729 = vmul.f32 1.0, %v3728
        %v3730 = vrcp.pop %v3313
        %v3731 = vmul.f32 1.0, %v3730
        %v3732 = vrcp.pop %v3314
        %v3733 = vmul.f32 1.0, %v3732
        %v3734 = vrcp.pop %v3315
        %v3735 = vmul.f32 1.0, %v3734
        %v3736 = vrcp.pop %v3316
        %v3737 = vmul.f32 1.0, %v3736
        %v3738 = vrcp.pop %v3317
        %v3739 = vmul.f32 1.0, %v3738
        %v3740 = vrcp.pop %v3318
        %v3741 = vmul.f32 1.0, %v3740
        %v3742 = vrcp.pop %v3319
        %v3743 = vmul.f32 1.0, %v3742
        %v3744 = vrcp.pop %v3320
        %v3745 = vmul.f32 1.0, %v3744
        %v3746 = vrcp.pop %v3321
        %v3747 = vmul.f32 1.0, %v3746
        %v3748 = vrcp.pop %v3322
        %v3749 = vmul.f32 1.0, %v3748
        %v3750 = vrcp.pop %v3323
        %v3751 = vmul.f32 1.0, %v3750
        %v3752 = vrcp.pop %v3324
        %v3753 = vmul.f32 1.0, %v3752
        %v3754 = vrcp.pop %v3325
        %v3755 = vmul.f32 1.0, %v3754
        %v3756 = vrcp.pop %v3326
        %v3757 = vmul.f32 1.0, %v3756
        %v3758 = vrcp.pop %v3327
        %v3759 = vmul.f32 1.0, %v3758
        %v3760 = vrcp.pop %v3328
        %v3761 = vmul.f32 1.0, %v3760
        %v3762 = vrcp.pop %v3329
        %v3763 = vmul.f32 1.0, %v3762
        %v3764 = vrcp.pop %v3330
        %v3765 = vmul.f32 1.0, %v3764
        %v3766 = vrcp.pop %v3331
        %v3767 = vmul.f32 1.0, %v3766
        %v3768 = vrcp.pop %v3332
        %v3769 = vmul.f32 1.0, %v3768
        %v3770 = vrcp.pop %v3333
        %v3771 = vmul.f32 1.0, %v3770
        %v3772 = vrcp.pop %v3334
        %v3773 = vmul.f32 1.0, %v3772
        %v3774 = vrcp.pop %v3335
        %v3775 = vmul.f32 1.0, %v3774
        %v3776 = vrcp.pop %v3336
        %v3777 = vmul.f32 1.0, %v3776
        %v3778 = vrcp.pop %v3337
        %v3779 = vmul.f32 1.0, %v3778
        %v3780 = vrcp.pop %v3338
        %v3781 = vmul.f32 1.0, %v3780
        %v3782 = vrcp.pop %v3339
        %v3783 = vmul.f32 1.0, %v3782
        %v3784 = vrcp.pop %v3340
        %v3785 = vmul.f32 1.0, %v3784
        %v3786 = vrcp.pop %v3341
        %v3787 = vmul.f32 1.0, %v3786
        %v3788 = vrcp.pop %v3342
        %v3789 = vmul.f32 1.0, %v3788
        %v3790 = vrcp.pop %v3343
        %v3791 = vmul.f32 1.0, %v3790
        %v3792 = vrcp.pop %v3344
        %v3793 = vmul.f32 1.0, %v3792
        %v3794 = vrcp.pop %v3345
        %v3795 = vmul.f32 1.0, %v3794
        %v3796 = vrcp.pop %v3346
        %v3797 = vmul.f32 1.0, %v3796
        %v3798 = vrcp.pop %v3347
        %v3799 = vmul.f32 1.0, %v3798
        %v3800 = vrcp.pop %v3348
        %v3801 = vmul.f32 1.0, %v3800
        %v3802 = vrcp.pop %v3349
        %v3803 = vmul.f32 1.0, %v3802
        %v3804 = vrcp.pop %v3350
        %v3805 = vmul.f32 1.0, %v3804
        %v3806 = vrcp.pop %v3351
        %v3807 = vmul.f32 1.0, %v3806
        %v3808 = vrcp.pop %v3352
        %v3809 = vmul.f32 1.0, %v3808
        %v3810 = vrcp.pop %v3353
        %v3811 = vmul.f32 1.0, %v3810
        %v3812 = vrcp.pop %v3354
        %v3813 = vmul.f32 1.0, %v3812
        %v3814 = vrcp.pop %v3355
        %v3815 = vmul.f32 1.0, %v3814
        %v3816 = vrcp.pop %v3356
        %v3817 = vmul.f32 1.0, %v3816
        %v3818 = vrcp.pop %v3357
        %v3819 = vmul.f32 1.0, %v3818
        %v3820 = vrcp.pop %v3358
        %v3821 = vmul.f32 1.0, %v3820
        %v3822 = vrcp.pop %v3359
        %v3823 = vmul.f32 1.0, %v3822
        %v3824 = vrcp.pop %v3360
        %v3825 = vmul.f32 1.0, %v3824
        %v3826 = vrcp.pop %v3361
        %v3827 = vmul.f32 1.0, %v3826
        %v3828 = vrcp.pop %v3362
        %v3829 = vmul.f32 1.0, %v3828
        %v3830 = vrcp.pop %v3363
        %v3831 = vmul.f32 1.0, %v3830
        %v3832 = vrcp.pop %v3364
        %v3833 = vmul.f32 1.0, %v3832
        %v3834 = vrcp.pop %v3365
        %v3835 = vmul.f32 1.0, %v3834
        %v3836 = vrcp.pop %v3366
        %v3837 = vmul.f32 1.0, %v3836
        %v3838 = vrcp.pop %v3367
        %v3839 = vmul.f32 1.0, %v3838
        %v3840 = vrcp.pop %v3368
        %v3841 = vmul.f32 1.0, %v3840
        %v3842 = vrcp.pop %v3369
        %v3843 = vmul.f32 1.0, %v3842
        %v3844 = vrcp.pop %v3370
        %v3845 = vmul.f32 1.0, %v3844
        %v3846 = vrcp.pop %v3371
        %v3847 = vmul.f32 1.0, %v3846
        %v3848 = vrcp.pop %v3372
        %v3849 = vmul.f32 1.0, %v3848
        %v3850 = vrcp.pop %v3373
        %v3851 = vmul.f32 1.0, %v3850
        %v3852 = vrcp.pop %v3374
        %v3853 = vmul.f32 1.0, %v3852
        %v3854 = vrcp.pop %v3375
        %v3855 = vmul.f32 1.0, %v3854
        %v3856 = vrcp.pop %v3376
        %v3857 = vmul.f32 1.0, %v3856
        %v3858 = vrcp.pop %v3377
        %v3859 = vmul.f32 1.0, %v3858
        %v3860 = vrcp.pop %v3378
        %v3861 = vmul.f32 1.0, %v3860
        %v3862 = vrcp.pop %v3379
        %v3863 = vmul.f32 1.0, %v3862
        %v3864 = vrcp.pop %v3380
        %v3865 = vmul.f32 1.0, %v3864
        %v3866 = vrcp.pop %v3381
        %v3867 = vmul.f32 1.0, %v3866
        %v3868 = vrcp.pop %v3382
        %v3869 = vmul.f32 1.0, %v3868
        %v3870 = vrcp.pop %v3383
        %v3871 = vmul.f32 1.0, %v3870
        %v3872 = vrcp.pop %v3384
        %v3873 = vmul.f32 1.0, %v3872
        %v3874 = vrcp.pop %v3385
        %v3875 = vmul.f32 1.0, %v3874
        %v3876 = vrcp.pop %v3386
        %v3877 = vmul.f32 1.0, %v3876
        %v3878 = vrcp.pop %v3387
        %v3879 = vmul.f32 1.0, %v3878
        %v3880 = vrcp.pop %v3388
        %v3881 = vmul.f32 1.0, %v3880
        %v3882 = vrcp.pop %v3389
        %v3883 = vmul.f32 1.0, %v3882
        %v3884 = vrcp.pop %v3390
        %v3885 = vmul.f32 1.0, %v3884
        %v3886 = vrcp.pop %v3391
        %v3887 = vmul.f32 1.0, %v3886
        %v3888 = vrcp.pop %v3392
        %v3889 = vmul.f32 1.0, %v3888
        %v3890 = vrcp.pop %v3393
        %v3891 = vmul.f32 1.0, %v3890
        %v3892 = vrcp.pop %v3394
        %v3893 = vmul.f32 1.0, %v3892
        %v3894 = vrcp.pop %v3395
        %v3895 = vmul.f32 1.0, %v3894
        %v3896 = vrcp.pop %v3396
        %v3897 = vmul.f32 1.0, %v3896
        %v3898 = vrcp.pop %v3397
        %v3899 = vmul.f32 1.0, %v3898
        %v3900 = vrcp.pop %v3398
        %v3901 = vmul.f32 1.0, %v3900
        %v3902 = vrcp.pop %v3399
        %v3903 = vmul.f32 1.0, %v3902
        %v3904 = vrcp.pop %v3400
        %v3905 = vmul.f32 1.0, %v3904
        %v3906 = vrcp.pop %v3401
        %v3907 = vmul.f32 1.0, %v3906
        %v3908 = vrcp.pop %v3402
        %v3909 = vmul.f32 1.0, %v3908
        %v3910 = vrcp.pop %v3403
        %v3911 = vmul.f32 1.0, %v3910
        %v3912 = vrcp.pop %v3404
        %v3913 = vmul.f32 1.0, %v3912
        %v3914 = vrcp.pop %v3405
        %v3915 = vmul.f32 1.0, %v3914
        %v3916 = vrcp.pop %v3406
        %v3917 = vmul.f32 1.0, %v3916
        %v3918 = vrcp.pop %v3407
        %v3919 = vmul.f32 1.0, %v3918
        %v3920 = vmul.f32 %v1713, %v3409
        %v3921 = vmul.f32 %v1715, %v3411
        %v3922 = vmul.f32 %v2066, %v3413
        %v3923 = vmul.f32 %v2068, %v3415
        %v3924 = vmul.f32 %v1717, %v3417
        %v3925 = vmul.f32 %v1719, %v3419
        %v3926 = vmul.f32 %v2070, %v3421
        %v3927 = vmul.f32 %v2072, %v3423
        %v3928 = vmul.f32 %v1723, %v3425
        %v3929 = vmul.f32 %v1725, %v3427
        %v3930 = vmul.f32 %v2076, %v3429
        %v3931 = vmul.f32 %v2078, %v3431
        %v3932 = vmul.f32 %v1727, %v3433
        %v3933 = vmul.f32 %v1729, %v3435
        %v3934 = vmul.f32 %v2080, %v3437
        %v3935 = vmul.f32 %v2082, %v3439
        %v3936 = vmul.f32 %v1733, %v3441
        %v3937 = vmul.f32 %v1735, %v3443
        %v3938 = vmul.f32 %v2086, %v3445
        %v3939 = vmul.f32 %v2088, %v3447
        %v3940 = vmul.f32 %v1737, %v3449
        %v3941 = vmul.f32 %v1739, %v3451
        %v3942 = vmul.f32 %v2090, %v3453
        %v3943 = vmul.f32 %v2092, %v3455
        %v3944 = vmul.f32 %v1743, %v3457
        %v3945 = vmul.f32 %v1745, %v3459
        %v3946 = vmul.f32 %v2096, %v3461
        %v3947 = vmul.f32 %v2098, %v3463
        %v3948 = vmul.f32 %v1747, %v3465
        %v3949 = vmul.f32 %v1749, %v3467
        %v3950 = vmul.f32 %v2100, %v3469
        %v3951 = vmul.f32 %v2102, %v3471
        %v3952 = vmul.f32 %v1753, %v3473
        %v3953 = vmul.f32 %v1755, %v3475
        %v3954 = vmul.f32 %v2106, %v3477
        %v3955 = vmul.f32 %v2108, %v3479
        %v3956 = vmul.f32 %v1757, %v3481
        %v3957 = vmul.f32 %v1759, %v3483
        %v3958 = vmul.f32 %v2110, %v3485
        %v3959 = vmul.f32 %v2112, %v3487
        %v3960 = vmul.f32 %v1763, %v3489
        %v3961 = vmul.f32 %v1765, %v3491
        %v3962 = vmul.f32 %v2116, %v3493
        %v3963 = vmul.f32 %v2118, %v3495
        %v3964 = vmul.f32 %v1767, %v3497
        %v3965 = vmul.f32 %v1769, %v3499
        %v3966 = vmul.f32 %v2120, %v3501
        %v3967 = vmul.f32 %v2122, %v3503
        %v3968 = vmul.f32 %v1773, %v3505
        %v3969 = vmul.f32 %v1775, %v3507
        %v3970 = vmul.f32 %v2126, %v3509
        %v3971 = vmul.f32 %v2128, %v3511
        %v3972 = vmul.f32 %v1777, %v3513
        %v3973 = vmul.f32 %v1779, %v3515
        %v3974 = vmul.f32 %v2130, %v3517
        %v3975 = vmul.f32 %v2132, %v3519
        %v3976 = vmul.f32 %v1783, %v3521
        %v3977 = vmul.f32 %v1785, %v3523
        %v3978 = vmul.f32 %v2136, %v3525
        %v3979 = vmul.f32 %v2138, %v3527
        %v3980 = vmul.f32 %v1787, %v3529
        %v3981 = vmul.f32 %v1789, %v3531
        %v3982 = vmul.f32 %v2140, %v3533
        %v3983 = vmul.f32 %v2142, %v3535
        %v3984 = vmul.f32 %v1793, %v3537
        %v3985 = vmul.f32 %v1795, %v3539
        %v3986 = vmul.f32 %v2146, %v3541
        %v3987 = vmul.f32 %v2148, %v3543
        %v3988 = vmul.f32 %v1797, %v3545
        %v3989 = vmul.f32 %v1799, %v3547
        %v3990 = vmul.f32 %v2150, %v3549
        %v3991 = vmul.f32 %v2152, %v3551
        %v3992 = vmul.f32 %v1803, %v3553
        %v3993 = vmul.f32 %v1805, %v3555
        %v3994 = vmul.f32 %v2156, %v3557
        %v3995 = vmul.f32 %v2158, %v3559
        %v3996 = vmul.f32 %v1807, %v3561
        %v3997 = vmul.f32 %v1809, %v3563
        %v3998 = vmul.f32 %v2160, %v3565
        %v3999 = vmul.f32 %v2162, %v3567
        %v4000 = vmul.f32 %v1813, %v3569
        %v4001 = vmul.f32 %v1815, %v3571
        %v4002 = vmul.f32 %v2166, %v3573
        %v4003 = vmul.f32 %v2168, %v3575
        %v4004 = vmul.f32 %v1817, %v3577
        %v4005 = vmul.f32 %v1819, %v3579
        %v4006 = vmul.f32 %v2170, %v3581
        %v4007 = vmul.f32 %v2172, %v3583
        %v4008 = vmul.f32 %v1823, %v3585
        %v4009 = vmul.f32 %v1825, %v3587
        %v4010 = vmul.f32 %v2176, %v3589
        %v4011 = vmul.f32 %v2178, %v3591
        %v4012 = vmul.f32 %v1827, %v3593
        %v4013 = vmul.f32 %v1829, %v3595
        %v4014 = vmul.f32 %v2180, %v3597
        %v4015 = vmul.f32 %v2182, %v3599
        %v4016 = vmul.f32 %v1833, %v3601
        %v4017 = vmul.f32 %v1835, %v3603
        %v4018 = vmul.f32 %v2186, %v3605
        %v4019 = vmul.f32 %v2188, %v3607
        %v4020 = vmul.f32 %v1837, %v3609
        %v4021 = vmul.f32 %v1839, %v3611
        %v4022 = vmul.f32 %v2190, %v3613
        %v4023 = vmul.f32 %v2192, %v3615
        %v4024 = vmul.f32 %v1843, %v3617
        %v4025 = vmul.f32 %v1845, %v3619
        %v4026 = vmul.f32 %v2196, %v3621
        %v4027 = vmul.f32 %v2198, %v3623
        %v4028 = vmul.f32 %v1847, %v3625
        %v4029 = vmul.f32 %v1849, %v3627
        %v4030 = vmul.f32 %v2200, %v3629
        %v4031 = vmul.f32 %v2202, %v3631
        %v4032 = vmul.f32 %v1853, %v3633
        %v4033 = vmul.f32 %v1855, %v3635
        %v4034 = vmul.f32 %v2206, %v3637
        %v4035 = vmul.f32 %v2208, %v3639
        %v4036 = vmul.f32 %v1857, %v3641
        %v4037 = vmul.f32 %v1859, %v3643
        %v4038 = vmul.f32 %v2210, %v3645
        %v4039 = vmul.f32 %v2212, %v3647
        %v4040 = vmul.f32 %v1863, %v3649
        %v4041 = vmul.f32 %v1865, %v3651
        %v4042 = vmul.f32 %v2216, %v3653
        %v4043 = vmul.f32 %v2218, %v3655
        %v4044 = vmul.f32 %v1867, %v3657
        %v4045 = vmul.f32 %v1869, %v3659
        %v4046 = vmul.f32 %v2220, %v3661
        %v4047 = vmul.f32 %v2222, %v3663
        %v4048 = vmul.f32 %v1873, %v3665
        %v4049 = vmul.f32 %v1875, %v3667
        %v4050 = vmul.f32 %v2226, %v3669
        %v4051 = vmul.f32 %v2228, %v3671
        %v4052 = vmul.f32 %v1877, %v3673
        %v4053 = vmul.f32 %v1879, %v3675
        %v4054 = vmul.f32 %v2230, %v3677
        %v4055 = vmul.f32 %v2232, %v3679
        %v4056 = vmul.f32 %v1883, %v3681
        %v4057 = vmul.f32 %v1885, %v3683
        %v4058 = vmul.f32 %v2236, %v3685
        %v4059 = vmul.f32 %v2238, %v3687
        %v4060 = vmul.f32 %v1887, %v3689
        %v4061 = vmul.f32 %v1889, %v3691
        %v4062 = vmul.f32 %v2240, %v3693
        %v4063 = vmul.f32 %v2242, %v3695
        %v4064 = vmul.f32 %v1893, %v3697
        %v4065 = vmul.f32 %v1895, %v3699
        %v4066 = vmul.f32 %v2246, %v3701
        %v4067 = vmul.f32 %v2248, %v3703
        %v4068 = vmul.f32 %v1897, %v3705
        %v4069 = vmul.f32 %v1899, %v3707
        %v4070 = vmul.f32 %v2250, %v3709
        %v4071 = vmul.f32 %v2252, %v3711
        %v4072 = vmul.f32 %v1903, %v3713
        %v4073 = vmul.f32 %v1905, %v3715
        %v4074 = vmul.f32 %v2256, %v3717
        %v4075 = vmul.f32 %v2258, %v3719
        %v4076 = vmul.f32 %v1907, %v3721
        %v4077 = vmul.f32 %v1909, %v3723
        %v4078 = vmul.f32 %v2260, %v3725
        %v4079 = vmul.f32 %v2262, %v3727
        %v4080 = vmul.f32 %v1913, %v3729
        %v4081 = vmul.f32 %v1915, %v3731
        %v4082 = vmul.f32 %v2266, %v3733
        %v4083 = vmul.f32 %v2268, %v3735
        %v4084 = vmul.f32 %v1917, %v3737
        %v4085 = vmul.f32 %v1919, %v3739
        %v4086 = vmul.f32 %v2270, %v3741
        %v4087 = vmul.f32 %v2272, %v3743
        %v4088 = vmul.f32 %v1923, %v3745
        %v4089 = vmul.f32 %v1925, %v3747
        %v4090 = vmul.f32 %v2276, %v3749
        %v4091 = vmul.f32 %v2278, %v3751
        %v4092 = vmul.f32 %v1927, %v3753
        %v4093 = vmul.f32 %v1929, %v3755
        %v4094 = vmul.f32 %v2280, %v3757
        %v4095 = vmul.f32 %v2282, %v3759
        %v4096 = vmul.f32 %v1933, %v3761
        %v4097 = vmul.f32 %v1935, %v3763
        %v4098 = vmul.f32 %v2286, %v3765
        %v4099 = vmul.f32 %v2288, %v3767
        %v4100 = vmul.f32 %v1937, %v3769
        %v4101 = vmul.f32 %v1939, %v3771
        %v4102 = vmul.f32 %v2290, %v3773
        %v4103 = vmul.f32 %v2292, %v3775
        %v4104 = vmul.f32 %v1943, %v3777
        %v4105 = vmul.f32 %v1945, %v3779
        %v4106 = vmul.f32 %v2296, %v3781
        %v4107 = vmul.f32 %v2298, %v3783
        %v4108 = vmul.f32 %v1947, %v3785
        %v4109 = vmul.f32 %v1949, %v3787
        %v4110 = vmul.f32 %v2300, %v3789
        %v4111 = vmul.f32 %v2302, %v3791
        %v4112 = vmul.f32 %v1953, %v3793
        %v4113 = vmul.f32 %v1955, %v3795
        %v4114 = vmul.f32 %v2306, %v3797
        %v4115 = vmul.f32 %v2308, %v3799
        %v4116 = vmul.f32 %v1957, %v3801
        %v4117 = vmul.f32 %v1959, %v3803
        %v4118 = vmul.f32 %v2310, %v3805
        %v4119 = vmul.f32 %v2312, %v3807
        %v4120 = vmul.f32 %v1963, %v3809
        %v4121 = vmul.f32 %v1965, %v3811
        %v4122 = vmul.f32 %v2316, %v3813
        %v4123 = vmul.f32 %v2318, %v3815
        %v4124 = vmul.f32 %v1967, %v3817
        %v4125 = vmul.f32 %v1969, %v3819
        %v4126 = vmul.f32 %v2320, %v3821
        %v4127 = vmul.f32 %v2322, %v3823
        %v4128 = vmul.f32 %v1973, %v3825
        %v4129 = vmul.f32 %v1975, %v3827
        %v4130 = vmul.f32 %v2326, %v3829
        %v4131 = vmul.f32 %v2328, %v3831
        %v4132 = vmul.f32 %v1977, %v3833
        %v4133 = vmul.f32 %v1979, %v3835
        %v4134 = vmul.f32 %v2330, %v3837
        %v4135 = vmul.f32 %v2332, %v3839
        %v4136 = vmul.f32 %v1983, %v3841
        %v4137 = vmul.f32 %v1985, %v3843
        %v4138 = vmul.f32 %v2336, %v3845
        %v4139 = vmul.f32 %v2338, %v3847
        %v4140 = vmul.f32 %v1987, %v3849
        %v4141 = vmul.f32 %v1989, %v3851
        %v4142 = vmul.f32 %v2340, %v3853
        %v4143 = vmul.f32 %v2342, %v3855
        %v4144 = vmul.f32 %v1993, %v3857
        %v4145 = vmul.f32 %v1995, %v3859
        %v4146 = vmul.f32 %v2346, %v3861
        %v4147 = vmul.f32 %v2348, %v3863
        %v4148 = vmul.f32 %v1997, %v3865
        %v4149 = vmul.f32 %v1999, %v3867
        %v4150 = vmul.f32 %v2350, %v3869
        %v4151 = vmul.f32 %v2352, %v3871
        %v4152 = vmul.f32 %v2003, %v3873
        %v4153 = vmul.f32 %v2005, %v3875
        %v4154 = vmul.f32 %v2356, %v3877
        %v4155 = vmul.f32 %v2358, %v3879
        %v4156 = vmul.f32 %v2007, %v3881
        %v4157 = vmul.f32 %v2009, %v3883
        %v4158 = vmul.f32 %v2360, %v3885
        %v4159 = vmul.f32 %v2362, %v3887
        %v4160 = vmul.f32 %v2013, %v3889
        %v4161 = vmul.f32 %v2015, %v3891
        %v4162 = vmul.f32 %v2366, %v3893
        %v4163 = vmul.f32 %v2368, %v3895
        %v4164 = vmul.f32 %v2017, %v3897
        %v4165 = vmul.f32 %v2019, %v3899
        %v4166 = vmul.f32 %v2370, %v3901
        %v4167 = vmul.f32 %v2372, %v3903
        %v4168 = vmul.f32 %v2023, %v3905
        %v4169 = vmul.f32 %v2025, %v3907
        %v4170 = vmul.f32 %v2376, %v3909
        %v4171 = vmul.f32 %v2378, %v3911
        %v4172 = vmul.f32 %v2027, %v3913
        %v4173 = vmul.f32 %v2029, %v3915
        %v4174 = vmul.f32 %v2380, %v3917
        %v4175 = vmul.f32 %v2382, %v3919
        %v4176 = vpack.c.bf16 %v3924, %v3920
        %v4177 = vpack.c.bf16 %v3925, %v3921
        %v4178 = vpack.c.bf16 %v3926, %v3922
        %v4179 = vpack.c.bf16 %v3927, %v3923
        %v4180 = vpack.c.bf16 %v3932, %v3928
        %v4181 = vpack.c.bf16 %v3933, %v3929
        %v4182 = vpack.c.bf16 %v3934, %v3930
        %v4183 = vpack.c.bf16 %v3935, %v3931
        %v4184 = vpack.c.bf16 %v3940, %v3936
        %v4185 = vpack.c.bf16 %v3941, %v3937
        %v4186 = vpack.c.bf16 %v3942, %v3938
        %v4187 = vpack.c.bf16 %v3943, %v3939
        %v4188 = vpack.c.bf16 %v3948, %v3944
        %v4189 = vpack.c.bf16 %v3949, %v3945
        %v4190 = vpack.c.bf16 %v3950, %v3946
        %v4191 = vpack.c.bf16 %v3951, %v3947
        %v4192 = vpack.c.bf16 %v3956, %v3952
        %v4193 = vpack.c.bf16 %v3957, %v3953
        %v4194 = vpack.c.bf16 %v3958, %v3954
        %v4195 = vpack.c.bf16 %v3959, %v3955
        %v4196 = vpack.c.bf16 %v3964, %v3960
        %v4197 = vpack.c.bf16 %v3965, %v3961
        %v4198 = vpack.c.bf16 %v3966, %v3962
        %v4199 = vpack.c.bf16 %v3967, %v3963
        %v4200 = vpack.c.bf16 %v3972, %v3968
        %v4201 = vpack.c.bf16 %v3973, %v3969
        %v4202 = vpack.c.bf16 %v3974, %v3970
        %v4203 = vpack.c.bf16 %v3975, %v3971
        %v4204 = vpack.c.bf16 %v3980, %v3976
        %v4205 = vpack.c.bf16 %v3981, %v3977
        %v4206 = vpack.c.bf16 %v3982, %v3978
        %v4207 = vpack.c.bf16 %v3983, %v3979
        %v4208 = vpack.c.bf16 %v3988, %v3984
        %v4209 = vpack.c.bf16 %v3989, %v3985
        %v4210 = vpack.c.bf16 %v3990, %v3986
        %v4211 = vpack.c.bf16 %v3991, %v3987
        %v4212 = vpack.c.bf16 %v3996, %v3992
        %v4213 = vpack.c.bf16 %v3997, %v3993
        %v4214 = vpack.c.bf16 %v3998, %v3994
        %v4215 = vpack.c.bf16 %v3999, %v3995
        %v4216 = vpack.c.bf16 %v4004, %v4000
        %v4217 = vpack.c.bf16 %v4005, %v4001
        %v4218 = vpack.c.bf16 %v4006, %v4002
        %v4219 = vpack.c.bf16 %v4007, %v4003
        %v4220 = vpack.c.bf16 %v4012, %v4008
        %v4221 = vpack.c.bf16 %v4013, %v4009
        %v4222 = vpack.c.bf16 %v4014, %v4010
        %v4223 = vpack.c.bf16 %v4015, %v4011
        %v4224 = vpack.c.bf16 %v4020, %v4016
        %v4225 = vpack.c.bf16 %v4021, %v4017
        %v4226 = vpack.c.bf16 %v4022, %v4018
        %v4227 = vpack.c.bf16 %v4023, %v4019
        %v4228 = vpack.c.bf16 %v4028, %v4024
        %v4229 = vpack.c.bf16 %v4029, %v4025
        %v4230 = vpack.c.bf16 %v4030, %v4026
        %v4231 = vpack.c.bf16 %v4031, %v4027
        %v4232 = vpack.c.bf16 %v4036, %v4032
        %v4233 = vpack.c.bf16 %v4037, %v4033
        %v4234 = vpack.c.bf16 %v4038, %v4034
        %v4235 = vpack.c.bf16 %v4039, %v4035
        %v4236 = vpack.c.bf16 %v4044, %v4040
        %v4237 = vpack.c.bf16 %v4045, %v4041
        %v4238 = vpack.c.bf16 %v4046, %v4042
        %v4239 = vpack.c.bf16 %v4047, %v4043
        %v4240 = vpack.c.bf16 %v4052, %v4048
        %v4241 = vpack.c.bf16 %v4053, %v4049
        %v4242 = vpack.c.bf16 %v4054, %v4050
        %v4243 = vpack.c.bf16 %v4055, %v4051
        %v4244 = vpack.c.bf16 %v4060, %v4056
        %v4245 = vpack.c.bf16 %v4061, %v4057
        %v4246 = vpack.c.bf16 %v4062, %v4058
        %v4247 = vpack.c.bf16 %v4063, %v4059
        %v4248 = vpack.c.bf16 %v4068, %v4064
        %v4249 = vpack.c.bf16 %v4069, %v4065
        %v4250 = vpack.c.bf16 %v4070, %v4066
        %v4251 = vpack.c.bf16 %v4071, %v4067
        %v4252 = vpack.c.bf16 %v4076, %v4072
        %v4253 = vpack.c.bf16 %v4077, %v4073
        %v4254 = vpack.c.bf16 %v4078, %v4074
        %v4255 = vpack.c.bf16 %v4079, %v4075
        %v4256 = vpack.c.bf16 %v4084, %v4080
        %v4257 = vpack.c.bf16 %v4085, %v4081
        %v4258 = vpack.c.bf16 %v4086, %v4082
        %v4259 = vpack.c.bf16 %v4087, %v4083
        %v4260 = vpack.c.bf16 %v4092, %v4088
        %v4261 = vpack.c.bf16 %v4093, %v4089
        %v4262 = vpack.c.bf16 %v4094, %v4090
        %v4263 = vpack.c.bf16 %v4095, %v4091
        %v4264 = vpack.c.bf16 %v4100, %v4096
        %v4265 = vpack.c.bf16 %v4101, %v4097
        %v4266 = vpack.c.bf16 %v4102, %v4098
        %v4267 = vpack.c.bf16 %v4103, %v4099
        %v4268 = vpack.c.bf16 %v4108, %v4104
        %v4269 = vpack.c.bf16 %v4109, %v4105
        %v4270 = vpack.c.bf16 %v4110, %v4106
        %v4271 = vpack.c.bf16 %v4111, %v4107
        %v4272 = vpack.c.bf16 %v4116, %v4112
        %v4273 = vpack.c.bf16 %v4117, %v4113
        %v4274 = vpack.c.bf16 %v4118, %v4114
        %v4275 = vpack.c.bf16 %v4119, %v4115
        %v4276 = vpack.c.bf16 %v4124, %v4120
        %v4277 = vpack.c.bf16 %v4125, %v4121
        %v4278 = vpack.c.bf16 %v4126, %v4122
        %v4279 = vpack.c.bf16 %v4127, %v4123
        %v4280 = vpack.c.bf16 %v4132, %v4128
        %v4281 = vpack.c.bf16 %v4133, %v4129
        %v4282 = vpack.c.bf16 %v4134, %v4130
        %v4283 = vpack.c.bf16 %v4135, %v4131
        %v4284 = vpack.c.bf16 %v4140, %v4136
        %v4285 = vpack.c.bf16 %v4141, %v4137
        %v4286 = vpack.c.bf16 %v4142, %v4138
        %v4287 = vpack.c.bf16 %v4143, %v4139
        %v4288 = vpack.c.bf16 %v4148, %v4144
        %v4289 = vpack.c.bf16 %v4149, %v4145
        %v4290 = vpack.c.bf16 %v4150, %v4146
        %v4291 = vpack.c.bf16 %v4151, %v4147
        %v4292 = vpack.c.bf16 %v4156, %v4152
        %v4293 = vpack.c.bf16 %v4157, %v4153
        %v4294 = vpack.c.bf16 %v4158, %v4154
        %v4295 = vpack.c.bf16 %v4159, %v4155
        %v4296 = vpack.c.bf16 %v4164, %v4160
        %v4297 = vpack.c.bf16 %v4165, %v4161
        %v4298 = vpack.c.bf16 %v4166, %v4162
        %v4299 = vpack.c.bf16 %v4167, %v4163
        %v4300 = vpack.c.bf16 %v4172, %v4168
        %v4301 = vpack.c.bf16 %v4173, %v4169
        %v4302 = vpack.c.bf16 %v4174, %v4170
        %v4303 = vpack.c.bf16 %v4175, %v4171
        %v4304 = vld [vmem:[#allocation7] sm:$0xf]
        %v4305 = vld [vmem:[#allocation7 + $0x4] sm:$0xf]
        %v4306 = vld [vmem:[#allocation7 + $0x8] sm:$0xf]
        %v4307 = vld [vmem:[#allocation7 + $0xc] sm:$0xf]
        %v4308 = vld [vmem:[#allocation7 + $0x10] sm:$0xf]
        %v4309 = vld [vmem:[#allocation7 + $0x14] sm:$0xf]
        %v4310 = vld [vmem:[#allocation7 + $0x18] sm:$0xf]
        %v4311 = vld [vmem:[#allocation7 + $0x1c] sm:$0xf]
        %v4312 = vld [vmem:[#allocation7 + $0x20] sm:$0xf]
        %v4313 = vld [vmem:[#allocation7 + $0x24] sm:$0xf]
        %v4314 = vld [vmem:[#allocation7 + $0x28] sm:$0xf]
        %v4315 = vld [vmem:[#allocation7 + $0x2c] sm:$0xf]
        %v4316 = vld [vmem:[#allocation7 + $0x30] sm:$0xf]
        %v4317 = vld [vmem:[#allocation7 + $0x34] sm:$0xf]
        %v4318 = vld [vmem:[#allocation7 + $0x38] sm:$0xf]
        %v4319 = vld [vmem:[#allocation7 + $0x3c] sm:$0xf]
        %v4320 = vld [vmem:[#allocation7 + $0x40] sm:$0xf]
        %v4321 = vld [vmem:[#allocation7 + $0x44] sm:$0xf]
        %v4322 = vld [vmem:[#allocation7 + $0x48] sm:$0xf]
        %v4323 = vld [vmem:[#allocation7 + $0x4c] sm:$0xf]
        %v4324 = vld [vmem:[#allocation7 + $0x50] sm:$0xf]
        %v4325 = vld [vmem:[#allocation7 + $0x54] sm:$0xf]
        %v4326 = vld [vmem:[#allocation7 + $0x58] sm:$0xf]
        %v4327 = vld [vmem:[#allocation7 + $0x5c] sm:$0xf]
        %v4328 = vld [vmem:[#allocation7 + $0x60] sm:$0xf]
        %v4329 = vld [vmem:[#allocation7 + $0x64] sm:$0xf]
        %v4330 = vld [vmem:[#allocation7 + $0x68] sm:$0xf]
        %v4331 = vld [vmem:[#allocation7 + $0x6c] sm:$0xf]
        %v4332 = vld [vmem:[#allocation7 + $0x70] sm:$0xf]
        %v4333 = vld [vmem:[#allocation7 + $0x74] sm:$0xf]
        %v4334 = vld [vmem:[#allocation7 + $0x78] sm:$0xf]
        %v4335 = vld [vmem:[#allocation7 + $0x7c] sm:$0xf]
        %v4336 = vld [vmem:[#allocation7 + $0x80] sm:$0xf]
        %v4337 = vld [vmem:[#allocation7 + $0x84] sm:$0xf]
        %v4338 = vld [vmem:[#allocation7 + $0x88] sm:$0xf]
        %v4339 = vld [vmem:[#allocation7 + $0x8c] sm:$0xf]
        %v4340 = vld [vmem:[#allocation7 + $0x90] sm:$0xf]
        %v4341 = vld [vmem:[#allocation7 + $0x94] sm:$0xf]
        %v4342 = vld [vmem:[#allocation7 + $0x98] sm:$0xf]
        %v4343 = vld [vmem:[#allocation7 + $0x9c] sm:$0xf]
        %v4344 = vld [vmem:[#allocation7 + $0xa0] sm:$0xf]
        %v4345 = vld [vmem:[#allocation7 + $0xa4] sm:$0xf]
        %v4346 = vld [vmem:[#allocation7 + $0xa8] sm:$0xf]
        %v4347 = vld [vmem:[#allocation7 + $0xac] sm:$0xf]
        %v4348 = vld [vmem:[#allocation7 + $0xb0] sm:$0xf]
        %v4349 = vld [vmem:[#allocation7 + $0xb4] sm:$0xf]
        %v4350 = vld [vmem:[#allocation7 + $0xb8] sm:$0xf]
        %v4351 = vld [vmem:[#allocation7 + $0xbc] sm:$0xf]
        %v4352 = vld [vmem:[#allocation7 + $0xc0] sm:$0xf]
        %v4353 = vld [vmem:[#allocation7 + $0xc4] sm:$0xf]
        %v4354 = vld [vmem:[#allocation7 + $0xc8] sm:$0xf]
        %v4355 = vld [vmem:[#allocation7 + $0xcc] sm:$0xf]
        %v4356 = vld [vmem:[#allocation7 + $0xd0] sm:$0xf]
        %v4357 = vld [vmem:[#allocation7 + $0xd4] sm:$0xf]
        %v4358 = vld [vmem:[#allocation7 + $0xd8] sm:$0xf]
        %v4359 = vld [vmem:[#allocation7 + $0xdc] sm:$0xf]
        %v4360 = vld [vmem:[#allocation7 + $0xe0] sm:$0xf]
        %v4361 = vld [vmem:[#allocation7 + $0xe4] sm:$0xf]
        %v4362 = vld [vmem:[#allocation7 + $0xe8] sm:$0xf]
        %v4363 = vld [vmem:[#allocation7 + $0xec] sm:$0xf]
        %v4364 = vld [vmem:[#allocation7 + $0xf0] sm:$0xf]
        %v4365 = vld [vmem:[#allocation7 + $0xf4] sm:$0xf]
        %v4366 = vld [vmem:[#allocation7 + $0xf8] sm:$0xf]
        %v4367 = vld [vmem:[#allocation7 + $0xfc] sm:$0xf]
        %v4368 = vld [vmem:[%s6] sm:$0x1]
        %v4370 = vlaneseq
        %v4371 = vshrl.u32 %v4370, 7
        %v4372 = vsub.s32 0, %v4371
        %v4373 = vrot.slane %v4368, %v4372
        %v4439 = vunpack.c.l.b16 %v4304
        %v4440 = vunpack.c.l.b16 %v4305
        %v4441 = vunpack.c.l.b16 %v4306
        %v4442 = vunpack.c.l.b16 %v4307
        %v4443 = vunpack.c.l.b16 %v4308
        %v4444 = vunpack.c.l.b16 %v4309
        %v4445 = vunpack.c.l.b16 %v4310
        %v4446 = vunpack.c.l.b16 %v4311
        %v4447 = vunpack.c.l.b16 %v4312
        %v4448 = vunpack.c.l.b16 %v4313
        %v4449 = vunpack.c.l.b16 %v4314
        %v4450 = vunpack.c.l.b16 %v4315
        %v4451 = vunpack.c.l.b16 %v4316
        %v4452 = vunpack.c.l.b16 %v4317
        %v4453 = vunpack.c.l.b16 %v4318
        %v4454 = vunpack.c.l.b16 %v4319
        %v4455 = vunpack.c.l.b16 %v4320
        %v4456 = vunpack.c.l.b16 %v4321
        %v4457 = vunpack.c.l.b16 %v4322
        %v4458 = vunpack.c.l.b16 %v4323
        %v4459 = vunpack.c.l.b16 %v4324
        %v4460 = vunpack.c.l.b16 %v4325
        %v4461 = vunpack.c.l.b16 %v4326
        %v4462 = vunpack.c.l.b16 %v4327
        %v4463 = vunpack.c.l.b16 %v4328
        %v4464 = vunpack.c.l.b16 %v4329
        %v4465 = vunpack.c.l.b16 %v4330
        %v4466 = vunpack.c.l.b16 %v4331
        %v4467 = vunpack.c.l.b16 %v4332
        %v4468 = vunpack.c.l.b16 %v4333
        %v4469 = vunpack.c.l.b16 %v4334
        %v4470 = vunpack.c.l.b16 %v4335
        %v4471 = vunpack.c.l.b16 %v4336
        %v4472 = vunpack.c.l.b16 %v4337
        %v4473 = vunpack.c.l.b16 %v4338
        %v4474 = vunpack.c.l.b16 %v4339
        %v4475 = vunpack.c.l.b16 %v4340
        %v4476 = vunpack.c.l.b16 %v4341
        %v4477 = vunpack.c.l.b16 %v4342
        %v4478 = vunpack.c.l.b16 %v4343
        %v4479 = vunpack.c.l.b16 %v4344
        %v4480 = vunpack.c.l.b16 %v4345
        %v4481 = vunpack.c.l.b16 %v4346
        %v4482 = vunpack.c.l.b16 %v4347
        %v4483 = vunpack.c.l.b16 %v4348
        %v4484 = vunpack.c.l.b16 %v4349
        %v4485 = vunpack.c.l.b16 %v4350
        %v4486 = vunpack.c.l.b16 %v4351
        %v4487 = vunpack.c.l.b16 %v4352
        %v4488 = vunpack.c.l.b16 %v4353
        %v4489 = vunpack.c.l.b16 %v4354
        %v4490 = vunpack.c.l.b16 %v4355
        %v4491 = vunpack.c.l.b16 %v4356
        %v4492 = vunpack.c.l.b16 %v4357
        %v4493 = vunpack.c.l.b16 %v4358
        %v4494 = vunpack.c.l.b16 %v4359
        %v4495 = vunpack.c.l.b16 %v4360
        %v4496 = vunpack.c.l.b16 %v4361
        %v4497 = vunpack.c.l.b16 %v4362
        %v4498 = vunpack.c.l.b16 %v4363
        %v4499 = vunpack.c.l.b16 %v4364
        %v4500 = vunpack.c.l.b16 %v4365
        %v4501 = vunpack.c.l.b16 %v4366
        %v4502 = vunpack.c.l.b16 %v4367
        %v4503 = vpack.c.b16 %v4440, %v4439
        %v4504 = vpack.c.b16 %v4442, %v4441
        %v4505 = vpack.c.b16 %v4444, %v4443
        %v4506 = vpack.c.b16 %v4446, %v4445
        %v4507 = vpack.c.b16 %v4448, %v4447
        %v4508 = vpack.c.b16 %v4450, %v4449
        %v4509 = vpack.c.b16 %v4452, %v4451
        %v4510 = vpack.c.b16 %v4454, %v4453
        %v4511 = vpack.c.b16 %v4456, %v4455
        %v4512 = vpack.c.b16 %v4458, %v4457
        %v4513 = vpack.c.b16 %v4460, %v4459
        %v4514 = vpack.c.b16 %v4462, %v4461
        %v4515 = vpack.c.b16 %v4464, %v4463
        %v4516 = vpack.c.b16 %v4466, %v4465
        %v4517 = vpack.c.b16 %v4468, %v4467
        %v4518 = vpack.c.b16 %v4470, %v4469
        %v4519 = vpack.c.b16 %v4472, %v4471
        %v4520 = vpack.c.b16 %v4474, %v4473
        %v4521 = vpack.c.b16 %v4476, %v4475
        %v4522 = vpack.c.b16 %v4478, %v4477
        %v4523 = vpack.c.b16 %v4480, %v4479
        %v4524 = vpack.c.b16 %v4482, %v4481
        %v4525 = vpack.c.b16 %v4484, %v4483
        %v4526 = vpack.c.b16 %v4486, %v4485
        %v4527 = vpack.c.b16 %v4488, %v4487
        %v4528 = vpack.c.b16 %v4490, %v4489
        %v4529 = vpack.c.b16 %v4492, %v4491
        %v4530 = vpack.c.b16 %v4494, %v4493
        %v4531 = vpack.c.b16 %v4496, %v4495
        %v4532 = vpack.c.b16 %v4498, %v4497
        %v4533 = vpack.c.b16 %v4500, %v4499
        %v4534 = vpack.c.b16 %v4502, %v4501
        %4567 = vmatprep.subr.bf16.mxu0 0
        %4568 = vmatpush1.bf16.msra.mxu0 %v4510
        %4569 = vmatprep.subr.bf16.mxu0 0
        %4570 = vmatpush1.bf16.msra.mxu0 %v4509
        %4571 = vmatprep.subr.bf16.mxu0 0
        %4572 = vmatpush1.bf16.msra.mxu0 %v4508
        %4573 = vmatprep.subr.bf16.mxu0 0
        %4574 = vmatpush1.bf16.msra.mxu0 %v4507
        %4575 = vmatprep.subr.bf16.mxu0 0
        %4576 = vmatpush1.bf16.msra.mxu0 %v4506
        %4577 = vmatprep.subr.bf16.mxu0 0
        %4578 = vmatpush1.bf16.msra.mxu0 %v4505
        %4579 = vmatprep.subr.bf16.mxu0 0
        %4580 = vmatpush1.bf16.msra.mxu0 %v4504
        %4581 = vmatprep.subr.bf16.mxu0 0
        %4582 = vmatpush1.bf16.msra.mxu0 %v4503
        %4583 = vmatprep.subr.bf16.mxu0 0
        %4584 = vmatpush2.bf16.msra.mxu0 %v4518
        %4585 = vmatprep.subr.bf16.mxu0 0
        %4586 = vmatpush2.bf16.msra.mxu0 %v4517
        %4587 = vmatprep.subr.bf16.mxu0 0
        %4588 = vmatpush2.bf16.msra.mxu0 %v4516
        %4589 = vmatprep.subr.bf16.mxu0 0
        %4590 = vmatpush2.bf16.msra.mxu0 %v4515
        %4591 = vmatprep.subr.bf16.mxu0 0
        %4592 = vmatpush2.bf16.msra.mxu0 %v4514
        %4593 = vmatprep.subr.bf16.mxu0 0
        %4594 = vmatpush2.bf16.msra.mxu0 %v4513
        %4595 = vmatprep.subr.bf16.mxu0 0
        %4596 = vmatpush2.bf16.msra.mxu0 %v4512
        %4597 = vmatprep.subr.bf16.mxu0 0
        %4598 = vmatpush2.bf16.msra.mxu0 %v4511
        %4599 = vmatprep.mubr.bf16.mxu0 %v4177
        %4600 = vmatmul.mubr.bf16.gmra.mxu0 %v4176
        %v4601 = vpop.f32.mrf.mxu0
        %v4602 = vadd.f32 %v4373, %v4601
        %v4603 = vpop.f32.mrf.mxu0
        %v4604 = vpop.f32.mrf.mxu0
        %v4605 = vadd.f32 %v4373, %v4604
        %v4606 = vpop.f32.mrf.mxu0
        %4607 = vmatprep.mubr.bf16.mxu0 %v4181
        %4608 = vmatmul.mubr.bf16.gmra.mxu0 %v4180
        %v4609 = vpop.f32.mrf.mxu0
        %v4610 = vadd.f32 %v4373, %v4609
        %v4611 = vpop.f32.mrf.mxu0
        %v4612 = vpop.f32.mrf.mxu0
        %v4613 = vadd.f32 %v4373, %v4612
        %v4614 = vpop.f32.mrf.mxu0
        %4615 = vmatprep.mubr.bf16.mxu0 %v4185
        %4616 = vmatmul.mubr.bf16.gmra.mxu0 %v4184
        %v4617 = vpop.f32.mrf.mxu0
        %v4618 = vadd.f32 %v4373, %v4617
        %v4619 = vpop.f32.mrf.mxu0
        %v4620 = vpop.f32.mrf.mxu0
        %v4621 = vadd.f32 %v4373, %v4620
        %v4622 = vpop.f32.mrf.mxu0
        %4623 = vmatprep.mubr.bf16.mxu0 %v4189
        %4624 = vmatmul.mubr.bf16.gmra.mxu0 %v4188
        %v4625 = vpop.f32.mrf.mxu0
        %v4626 = vadd.f32 %v4373, %v4625
        %v4627 = vpop.f32.mrf.mxu0
        %v4628 = vpop.f32.mrf.mxu0
        %v4629 = vadd.f32 %v4373, %v4628
        %v4630 = vpop.f32.mrf.mxu0
        %4631 = vmatprep.mubr.bf16.mxu0 %v4193
        %4632 = vmatmul.mubr.bf16.gmra.mxu0 %v4192
        %v4633 = vpop.f32.mrf.mxu0
        %v4634 = vadd.f32 %v4373, %v4633
        %v4635 = vpop.f32.mrf.mxu0
        %v4636 = vpop.f32.mrf.mxu0
        %v4637 = vadd.f32 %v4373, %v4636
        %v4638 = vpop.f32.mrf.mxu0
        %4639 = vmatprep.mubr.bf16.mxu0 %v4197
        %4640 = vmatmul.mubr.bf16.gmra.mxu0 %v4196
        %v4641 = vpop.f32.mrf.mxu0
        %v4642 = vadd.f32 %v4373, %v4641
        %v4643 = vpop.f32.mrf.mxu0
        %v4644 = vpop.f32.mrf.mxu0
        %v4645 = vadd.f32 %v4373, %v4644
        %v4646 = vpop.f32.mrf.mxu0
        %4647 = vmatprep.mubr.bf16.mxu0 %v4201
        %4648 = vmatmul.mubr.bf16.gmra.mxu0 %v4200
        %v4649 = vpop.f32.mrf.mxu0
        %v4650 = vadd.f32 %v4373, %v4649
        %v4651 = vpop.f32.mrf.mxu0
        %v4652 = vpop.f32.mrf.mxu0
        %v4653 = vadd.f32 %v4373, %v4652
        %v4654 = vpop.f32.mrf.mxu0
        %4655 = vmatprep.mubr.bf16.mxu0 %v4205
        %4656 = vmatmul.mubr.bf16.gmra.mxu0 %v4204
        %v4657 = vpop.f32.mrf.mxu0
        %v4658 = vadd.f32 %v4373, %v4657
        %v4659 = vpop.f32.mrf.mxu0
        %v4660 = vpop.f32.mrf.mxu0
        %v4661 = vadd.f32 %v4373, %v4660
        %v4662 = vpop.f32.mrf.mxu0
        %4663 = vmatprep.mubr.bf16.mxu0 %v4209
        %4664 = vmatmul.mubr.bf16.gmra.mxu0 %v4208
        %v4665 = vpop.f32.mrf.mxu0
        %v4666 = vadd.f32 %v4373, %v4665
        %v4667 = vpop.f32.mrf.mxu0
        %v4668 = vpop.f32.mrf.mxu0
        %v4669 = vadd.f32 %v4373, %v4668
        %v4670 = vpop.f32.mrf.mxu0
        %4671 = vmatprep.mubr.bf16.mxu0 %v4213
        %4672 = vmatmul.mubr.bf16.gmra.mxu0 %v4212
        %v4673 = vpop.f32.mrf.mxu0
        %v4674 = vadd.f32 %v4373, %v4673
        %v4675 = vpop.f32.mrf.mxu0
        %v4676 = vpop.f32.mrf.mxu0
        %v4677 = vadd.f32 %v4373, %v4676
        %v4678 = vpop.f32.mrf.mxu0
        %4679 = vmatprep.mubr.bf16.mxu0 %v4217
        %4680 = vmatmul.mubr.bf16.gmra.mxu0 %v4216
        %v4681 = vpop.f32.mrf.mxu0
        %v4682 = vadd.f32 %v4373, %v4681
        %v4683 = vpop.f32.mrf.mxu0
        %v4684 = vpop.f32.mrf.mxu0
        %v4685 = vadd.f32 %v4373, %v4684
        %v4686 = vpop.f32.mrf.mxu0
        %4687 = vmatprep.mubr.bf16.mxu0 %v4221
        %4688 = vmatmul.mubr.bf16.gmra.mxu0 %v4220
        %v4689 = vpop.f32.mrf.mxu0
        %v4690 = vadd.f32 %v4373, %v4689
        %v4691 = vpop.f32.mrf.mxu0
        %v4692 = vpop.f32.mrf.mxu0
        %v4693 = vadd.f32 %v4373, %v4692
        %v4694 = vpop.f32.mrf.mxu0
        %4695 = vmatprep.mubr.bf16.mxu0 %v4225
        %4696 = vmatmul.mubr.bf16.gmra.mxu0 %v4224
        %v4697 = vpop.f32.mrf.mxu0
        %v4698 = vadd.f32 %v4373, %v4697
        %v4699 = vpop.f32.mrf.mxu0
        %v4700 = vpop.f32.mrf.mxu0
        %v4701 = vadd.f32 %v4373, %v4700
        %v4702 = vpop.f32.mrf.mxu0
        %4703 = vmatprep.mubr.bf16.mxu0 %v4229
        %4704 = vmatmul.mubr.bf16.gmra.mxu0 %v4228
        %v4705 = vpop.f32.mrf.mxu0
        %v4706 = vadd.f32 %v4373, %v4705
        %v4707 = vpop.f32.mrf.mxu0
        %v4708 = vpop.f32.mrf.mxu0
        %v4709 = vadd.f32 %v4373, %v4708
        %v4710 = vpop.f32.mrf.mxu0
        %4711 = vmatprep.mubr.bf16.mxu0 %v4233
        %4712 = vmatmul.mubr.bf16.gmra.mxu0 %v4232
        %v4713 = vpop.f32.mrf.mxu0
        %v4714 = vadd.f32 %v4373, %v4713
        %v4715 = vpop.f32.mrf.mxu0
        %v4716 = vpop.f32.mrf.mxu0
        %v4717 = vadd.f32 %v4373, %v4716
        %v4718 = vpop.f32.mrf.mxu0
        %4719 = vmatprep.mubr.bf16.mxu0 %v4237
        %4720 = vmatmul.mubr.bf16.gmra.mxu0 %v4236
        %v4721 = vpop.f32.mrf.mxu0
        %v4722 = vadd.f32 %v4373, %v4721
        %v4723 = vpop.f32.mrf.mxu0
        %v4724 = vpop.f32.mrf.mxu0
        %v4725 = vadd.f32 %v4373, %v4724
        %v4726 = vpop.f32.mrf.mxu0
        %4727 = vmatprep.mubr.bf16.mxu0 %v4241
        %4728 = vmatmul.mubr.bf16.gmra.mxu0 %v4240
        %v4729 = vpop.f32.mrf.mxu0
        %v4730 = vadd.f32 %v4373, %v4729
        %v4731 = vpop.f32.mrf.mxu0
        %v4732 = vpop.f32.mrf.mxu0
        %v4733 = vadd.f32 %v4373, %v4732
        %v4734 = vpop.f32.mrf.mxu0
        %4735 = vmatprep.mubr.bf16.mxu0 %v4245
        %4736 = vmatmul.mubr.bf16.gmra.mxu0 %v4244
        %v4737 = vpop.f32.mrf.mxu0
        %v4738 = vadd.f32 %v4373, %v4737
        %v4739 = vpop.f32.mrf.mxu0
        %v4740 = vpop.f32.mrf.mxu0
        %v4741 = vadd.f32 %v4373, %v4740
        %v4742 = vpop.f32.mrf.mxu0
        %4743 = vmatprep.mubr.bf16.mxu0 %v4249
        %4744 = vmatmul.mubr.bf16.gmra.mxu0 %v4248
        %v4745 = vpop.f32.mrf.mxu0
        %v4746 = vadd.f32 %v4373, %v4745
        %v4747 = vpop.f32.mrf.mxu0
        %v4748 = vpop.f32.mrf.mxu0
        %v4749 = vadd.f32 %v4373, %v4748
        %v4750 = vpop.f32.mrf.mxu0
        %4751 = vmatprep.mubr.bf16.mxu0 %v4253
        %4752 = vmatmul.mubr.bf16.gmra.mxu0 %v4252
        %v4753 = vpop.f32.mrf.mxu0
        %v4754 = vadd.f32 %v4373, %v4753
        %v4755 = vpop.f32.mrf.mxu0
        %v4756 = vpop.f32.mrf.mxu0
        %v4757 = vadd.f32 %v4373, %v4756
        %v4758 = vpop.f32.mrf.mxu0
        %4759 = vmatprep.mubr.bf16.mxu0 %v4257
        %4760 = vmatmul.mubr.bf16.gmra.mxu0 %v4256
        %v4761 = vpop.f32.mrf.mxu0
        %v4762 = vadd.f32 %v4373, %v4761
        %v4763 = vpop.f32.mrf.mxu0
        %v4764 = vpop.f32.mrf.mxu0
        %v4765 = vadd.f32 %v4373, %v4764
        %v4766 = vpop.f32.mrf.mxu0
        %4767 = vmatprep.mubr.bf16.mxu0 %v4261
        %4768 = vmatmul.mubr.bf16.gmra.mxu0 %v4260
        %v4769 = vpop.f32.mrf.mxu0
        %v4770 = vadd.f32 %v4373, %v4769
        %v4771 = vpop.f32.mrf.mxu0
        %v4772 = vpop.f32.mrf.mxu0
        %v4773 = vadd.f32 %v4373, %v4772
        %v4774 = vpop.f32.mrf.mxu0
        %4775 = vmatprep.mubr.bf16.mxu0 %v4265
        %4776 = vmatmul.mubr.bf16.gmra.mxu0 %v4264
        %v4777 = vpop.f32.mrf.mxu0
        %v4778 = vadd.f32 %v4373, %v4777
        %v4779 = vpop.f32.mrf.mxu0
        %v4780 = vpop.f32.mrf.mxu0
        %v4781 = vadd.f32 %v4373, %v4780
        %v4782 = vpop.f32.mrf.mxu0
        %4783 = vmatprep.mubr.bf16.mxu0 %v4269
        %4784 = vmatmul.mubr.bf16.gmra.mxu0 %v4268
        %v4785 = vpop.f32.mrf.mxu0
        %v4786 = vadd.f32 %v4373, %v4785
        %v4787 = vpop.f32.mrf.mxu0
        %v4788 = vpop.f32.mrf.mxu0
        %v4789 = vadd.f32 %v4373, %v4788
        %v4790 = vpop.f32.mrf.mxu0
        %4791 = vmatprep.mubr.bf16.mxu0 %v4273
        %4792 = vmatmul.mubr.bf16.gmra.mxu0 %v4272
        %v4793 = vpop.f32.mrf.mxu0
        %v4794 = vadd.f32 %v4373, %v4793
        %v4795 = vpop.f32.mrf.mxu0
        %v4796 = vpop.f32.mrf.mxu0
        %v4797 = vadd.f32 %v4373, %v4796
        %v4798 = vpop.f32.mrf.mxu0
        %4799 = vmatprep.mubr.bf16.mxu0 %v4277
        %4800 = vmatmul.mubr.bf16.gmra.mxu0 %v4276
        %v4801 = vpop.f32.mrf.mxu0
        %v4802 = vadd.f32 %v4373, %v4801
        %v4803 = vpop.f32.mrf.mxu0
        %v4804 = vpop.f32.mrf.mxu0
        %v4805 = vadd.f32 %v4373, %v4804
        %v4806 = vpop.f32.mrf.mxu0
        %4807 = vmatprep.mubr.bf16.mxu0 %v4281
        %4808 = vmatmul.mubr.bf16.gmra.mxu0 %v4280
        %v4809 = vpop.f32.mrf.mxu0
        %v4810 = vadd.f32 %v4373, %v4809
        %v4811 = vpop.f32.mrf.mxu0
        %v4812 = vpop.f32.mrf.mxu0
        %v4813 = vadd.f32 %v4373, %v4812
        %v4814 = vpop.f32.mrf.mxu0
        %4815 = vmatprep.mubr.bf16.mxu0 %v4285
        %4816 = vmatmul.mubr.bf16.gmra.mxu0 %v4284
        %v4817 = vpop.f32.mrf.mxu0
        %v4818 = vadd.f32 %v4373, %v4817
        %v4819 = vpop.f32.mrf.mxu0
        %v4820 = vpop.f32.mrf.mxu0
        %v4821 = vadd.f32 %v4373, %v4820
        %v4822 = vpop.f32.mrf.mxu0
        %4823 = vmatprep.mubr.bf16.mxu0 %v4289
        %4824 = vmatmul.mubr.bf16.gmra.mxu0 %v4288
        %v4825 = vpop.f32.mrf.mxu0
        %v4826 = vadd.f32 %v4373, %v4825
        %v4827 = vpop.f32.mrf.mxu0
        %v4828 = vpop.f32.mrf.mxu0
        %v4829 = vadd.f32 %v4373, %v4828
        %v4830 = vpop.f32.mrf.mxu0
        %4831 = vmatprep.mubr.bf16.mxu0 %v4293
        %4832 = vmatmul.mubr.bf16.gmra.mxu0 %v4292
        %v4833 = vpop.f32.mrf.mxu0
        %v4834 = vadd.f32 %v4373, %v4833
        %v4835 = vpop.f32.mrf.mxu0
        %v4836 = vpop.f32.mrf.mxu0
        %v4837 = vadd.f32 %v4373, %v4836
        %v4838 = vpop.f32.mrf.mxu0
        %4839 = vmatprep.mubr.bf16.mxu0 %v4297
        %4840 = vmatmul.mubr.bf16.gmra.mxu0 %v4296
        %v4841 = vpop.f32.mrf.mxu0
        %v4842 = vadd.f32 %v4373, %v4841
        %v4843 = vpop.f32.mrf.mxu0
        %v4844 = vpop.f32.mrf.mxu0
        %v4845 = vadd.f32 %v4373, %v4844
        %v4846 = vpop.f32.mrf.mxu0
        %4847 = vmatprep.mubr.bf16.mxu0 %v4301
        %4848 = vmatmul.mubr.bf16.gmra.mxu0 %v4300
        %v4849 = vpop.f32.mrf.mxu0
        %v4850 = vadd.f32 %v4373, %v4849
        %v4851 = vpop.f32.mrf.mxu0
        %v4852 = vpop.f32.mrf.mxu0
        %v4853 = vadd.f32 %v4373, %v4852
        %v4854 = vpop.f32.mrf.mxu0
        %4855 = vdwg.mxu0
        %4856 = vmatprep.subr.bf16.mxu0 0
        %4857 = vmatpush1.bf16.msra.mxu0 %v4526
        %4858 = vmatprep.subr.bf16.mxu0 0
        %4859 = vmatpush1.bf16.msra.mxu0 %v4525
        %4860 = vmatprep.subr.bf16.mxu0 0
        %4861 = vmatpush1.bf16.msra.mxu0 %v4524
        %4862 = vmatprep.subr.bf16.mxu0 0
        %4863 = vmatpush1.bf16.msra.mxu0 %v4523
        %4864 = vmatprep.subr.bf16.mxu0 0
        %4865 = vmatpush1.bf16.msra.mxu0 %v4522
        %4866 = vmatprep.subr.bf16.mxu0 0
        %4867 = vmatpush1.bf16.msra.mxu0 %v4521
        %4868 = vmatprep.subr.bf16.mxu0 0
        %4869 = vmatpush1.bf16.msra.mxu0 %v4520
        %4870 = vmatprep.subr.bf16.mxu0 0
        %4871 = vmatpush1.bf16.msra.mxu0 %v4519
        %4872 = vmatprep.subr.bf16.mxu0 0
        %4873 = vmatpush2.bf16.msra.mxu0 %v4534
        %4874 = vmatprep.subr.bf16.mxu0 0
        %4875 = vmatpush2.bf16.msra.mxu0 %v4533
        %4876 = vmatprep.subr.bf16.mxu0 0
        %4877 = vmatpush2.bf16.msra.mxu0 %v4532
        %4878 = vmatprep.subr.bf16.mxu0 0
        %4879 = vmatpush2.bf16.msra.mxu0 %v4531
        %4880 = vmatprep.subr.bf16.mxu0 0
        %4881 = vmatpush2.bf16.msra.mxu0 %v4530
        %4882 = vmatprep.subr.bf16.mxu0 0
        %4883 = vmatpush2.bf16.msra.mxu0 %v4529
        %4884 = vmatprep.subr.bf16.mxu0 0
        %4885 = vmatpush2.bf16.msra.mxu0 %v4528
        %4886 = vmatprep.subr.bf16.mxu0 0
        %4887 = vmatpush2.bf16.msra.mxu0 %v4527
        %4888 = vmatprep.mubr.bf16.mxu0 %v4179
        %4889 = vmatmul.mubr.bf16.gmra.mxu0 %v4178
        %v4890 = vpop.f32.mrf.mxu0
        %v4891 = vadd.f32 %v4602, %v4890
        %v4892 = vpop.f32.mrf.mxu0
        %v4893 = vpop.f32.mrf.mxu0
        %v4894 = vadd.f32 %v4605, %v4893
        %v4895 = vpop.f32.mrf.mxu0
        %4896 = vmatprep.mubr.bf16.mxu0 %v4183
        %4897 = vmatmul.mubr.bf16.gmra.mxu0 %v4182
        %v4898 = vpop.f32.mrf.mxu0
        %v4899 = vadd.f32 %v4610, %v4898
        %v4900 = vpop.f32.mrf.mxu0
        %v4901 = vpop.f32.mrf.mxu0
        %v4902 = vadd.f32 %v4613, %v4901
        %v4903 = vpop.f32.mrf.mxu0
        %4904 = vmatprep.mubr.bf16.mxu0 %v4187
        %4905 = vmatmul.mubr.bf16.gmra.mxu0 %v4186
        %v4906 = vpop.f32.mrf.mxu0
        %v4907 = vadd.f32 %v4618, %v4906
        %v4908 = vpop.f32.mrf.mxu0
        %v4909 = vpop.f32.mrf.mxu0
        %v4910 = vadd.f32 %v4621, %v4909
        %v4911 = vpop.f32.mrf.mxu0
        %4912 = vmatprep.mubr.bf16.mxu0 %v4191
        %4913 = vmatmul.mubr.bf16.gmra.mxu0 %v4190
        %v4914 = vpop.f32.mrf.mxu0
        %v4915 = vadd.f32 %v4626, %v4914
        %v4916 = vpop.f32.mrf.mxu0
        %v4917 = vpop.f32.mrf.mxu0
        %v4918 = vadd.f32 %v4629, %v4917
        %v4919 = vpop.f32.mrf.mxu0
        %4920 = vmatprep.mubr.bf16.mxu0 %v4195
        %4921 = vmatmul.mubr.bf16.gmra.mxu0 %v4194
        %v4922 = vpop.f32.mrf.mxu0
        %v4923 = vadd.f32 %v4634, %v4922
        %v4924 = vpop.f32.mrf.mxu0
        %v4925 = vpop.f32.mrf.mxu0
        %v4926 = vadd.f32 %v4637, %v4925
        %v4927 = vpop.f32.mrf.mxu0
        %4928 = vmatprep.mubr.bf16.mxu0 %v4199
        %4929 = vmatmul.mubr.bf16.gmra.mxu0 %v4198
        %v4930 = vpop.f32.mrf.mxu0
        %v4931 = vadd.f32 %v4642, %v4930
        %v4932 = vpop.f32.mrf.mxu0
        %v4933 = vpop.f32.mrf.mxu0
        %v4934 = vadd.f32 %v4645, %v4933
        %v4935 = vpop.f32.mrf.mxu0
        %4936 = vmatprep.mubr.bf16.mxu0 %v4203
        %4937 = vmatmul.mubr.bf16.gmra.mxu0 %v4202
        %v4938 = vpop.f32.mrf.mxu0
        %v4939 = vadd.f32 %v4650, %v4938
        %v4940 = vpop.f32.mrf.mxu0
        %v4941 = vpop.f32.mrf.mxu0
        %v4942 = vadd.f32 %v4653, %v4941
        %v4943 = vpop.f32.mrf.mxu0
        %4944 = vmatprep.mubr.bf16.mxu0 %v4207
        %4945 = vmatmul.mubr.bf16.gmra.mxu0 %v4206
        %v4946 = vpop.f32.mrf.mxu0
        %v4947 = vadd.f32 %v4658, %v4946
        %v4948 = vpop.f32.mrf.mxu0
        %v4949 = vpop.f32.mrf.mxu0
        %v4950 = vadd.f32 %v4661, %v4949
        %v4951 = vpop.f32.mrf.mxu0
        %4952 = vmatprep.mubr.bf16.mxu0 %v4211
        %4953 = vmatmul.mubr.bf16.gmra.mxu0 %v4210
        %v4954 = vpop.f32.mrf.mxu0
        %v4955 = vadd.f32 %v4666, %v4954
        %v4956 = vpop.f32.mrf.mxu0
        %v4957 = vpop.f32.mrf.mxu0
        %v4958 = vadd.f32 %v4669, %v4957
        %v4959 = vpop.f32.mrf.mxu0
        %4960 = vmatprep.mubr.bf16.mxu0 %v4215
        %4961 = vmatmul.mubr.bf16.gmra.mxu0 %v4214
        %v4962 = vpop.f32.mrf.mxu0
        %v4963 = vadd.f32 %v4674, %v4962
        %v4964 = vpop.f32.mrf.mxu0
        %v4965 = vpop.f32.mrf.mxu0
        %v4966 = vadd.f32 %v4677, %v4965
        %v4967 = vpop.f32.mrf.mxu0
        %4968 = vmatprep.mubr.bf16.mxu0 %v4219
        %4969 = vmatmul.mubr.bf16.gmra.mxu0 %v4218
        %v4970 = vpop.f32.mrf.mxu0
        %v4971 = vadd.f32 %v4682, %v4970
        %v4972 = vpop.f32.mrf.mxu0
        %v4973 = vpop.f32.mrf.mxu0
        %v4974 = vadd.f32 %v4685, %v4973
        %v4975 = vpop.f32.mrf.mxu0
        %4976 = vmatprep.mubr.bf16.mxu0 %v4223
        %4977 = vmatmul.mubr.bf16.gmra.mxu0 %v4222
        %v4978 = vpop.f32.mrf.mxu0
        %v4979 = vadd.f32 %v4690, %v4978
        %v4980 = vpop.f32.mrf.mxu0
        %v4981 = vpop.f32.mrf.mxu0
        %v4982 = vadd.f32 %v4693, %v4981
        %v4983 = vpop.f32.mrf.mxu0
        %4984 = vmatprep.mubr.bf16.mxu0 %v4227
        %4985 = vmatmul.mubr.bf16.gmra.mxu0 %v4226
        %v4986 = vpop.f32.mrf.mxu0
        %v4987 = vadd.f32 %v4698, %v4986
        %v4988 = vpop.f32.mrf.mxu0
        %v4989 = vpop.f32.mrf.mxu0
        %v4990 = vadd.f32 %v4701, %v4989
        %v4991 = vpop.f32.mrf.mxu0
        %4992 = vmatprep.mubr.bf16.mxu0 %v4231
        %4993 = vmatmul.mubr.bf16.gmra.mxu0 %v4230
        %v4994 = vpop.f32.mrf.mxu0
        %v4995 = vadd.f32 %v4706, %v4994
        %v4996 = vpop.f32.mrf.mxu0
        %v4997 = vpop.f32.mrf.mxu0
        %v4998 = vadd.f32 %v4709, %v4997
        %v4999 = vpop.f32.mrf.mxu0
        %5000 = vmatprep.mubr.bf16.mxu0 %v4235
        %5001 = vmatmul.mubr.bf16.gmra.mxu0 %v4234
        %v5002 = vpop.f32.mrf.mxu0
        %v5003 = vadd.f32 %v4714, %v5002
        %v5004 = vpop.f32.mrf.mxu0
        %v5005 = vpop.f32.mrf.mxu0
        %v5006 = vadd.f32 %v4717, %v5005
        %v5007 = vpop.f32.mrf.mxu0
        %5008 = vmatprep.mubr.bf16.mxu0 %v4239
        %5009 = vmatmul.mubr.bf16.gmra.mxu0 %v4238
        %v5010 = vpop.f32.mrf.mxu0
        %v5011 = vadd.f32 %v4722, %v5010
        %v5012 = vpop.f32.mrf.mxu0
        %v5013 = vpop.f32.mrf.mxu0
        %v5014 = vadd.f32 %v4725, %v5013
        %v5015 = vpop.f32.mrf.mxu0
        %5016 = vmatprep.mubr.bf16.mxu0 %v4243
        %5017 = vmatmul.mubr.bf16.gmra.mxu0 %v4242
        %v5018 = vpop.f32.mrf.mxu0
        %v5019 = vadd.f32 %v4730, %v5018
        %v5020 = vpop.f32.mrf.mxu0
        %v5021 = vpop.f32.mrf.mxu0
        %v5022 = vadd.f32 %v4733, %v5021
        %v5023 = vpop.f32.mrf.mxu0
        %5024 = vmatprep.mubr.bf16.mxu0 %v4247
        %5025 = vmatmul.mubr.bf16.gmra.mxu0 %v4246
        %v5026 = vpop.f32.mrf.mxu0
        %v5027 = vadd.f32 %v4738, %v5026
        %v5028 = vpop.f32.mrf.mxu0
        %v5029 = vpop.f32.mrf.mxu0
        %v5030 = vadd.f32 %v4741, %v5029
        %v5031 = vpop.f32.mrf.mxu0
        %5032 = vmatprep.mubr.bf16.mxu0 %v4251
        %5033 = vmatmul.mubr.bf16.gmra.mxu0 %v4250
        %v5034 = vpop.f32.mrf.mxu0
        %v5035 = vadd.f32 %v4746, %v5034
        %v5036 = vpop.f32.mrf.mxu0
        %v5037 = vpop.f32.mrf.mxu0
        %v5038 = vadd.f32 %v4749, %v5037
        %v5039 = vpop.f32.mrf.mxu0
        %5040 = vmatprep.mubr.bf16.mxu0 %v4255
        %5041 = vmatmul.mubr.bf16.gmra.mxu0 %v4254
        %v5042 = vpop.f32.mrf.mxu0
        %v5043 = vadd.f32 %v4754, %v5042
        %v5044 = vpop.f32.mrf.mxu0
        %v5045 = vpop.f32.mrf.mxu0
        %v5046 = vadd.f32 %v4757, %v5045
        %v5047 = vpop.f32.mrf.mxu0
        %5048 = vmatprep.mubr.bf16.mxu0 %v4259
        %5049 = vmatmul.mubr.bf16.gmra.mxu0 %v4258
        %v5050 = vpop.f32.mrf.mxu0
        %v5051 = vadd.f32 %v4762, %v5050
        %v5052 = vpop.f32.mrf.mxu0
        %v5053 = vpop.f32.mrf.mxu0
        %v5054 = vadd.f32 %v4765, %v5053
        %v5055 = vpop.f32.mrf.mxu0
        %5056 = vmatprep.mubr.bf16.mxu0 %v4263
        %5057 = vmatmul.mubr.bf16.gmra.mxu0 %v4262
        %v5058 = vpop.f32.mrf.mxu0
        %v5059 = vadd.f32 %v4770, %v5058
        %v5060 = vpop.f32.mrf.mxu0
        %v5061 = vpop.f32.mrf.mxu0
        %v5062 = vadd.f32 %v4773, %v5061
        %v5063 = vpop.f32.mrf.mxu0
        %5064 = vmatprep.mubr.bf16.mxu0 %v4267
        %5065 = vmatmul.mubr.bf16.gmra.mxu0 %v4266
        %v5066 = vpop.f32.mrf.mxu0
        %v5067 = vadd.f32 %v4778, %v5066
        %v5068 = vpop.f32.mrf.mxu0
        %v5069 = vpop.f32.mrf.mxu0
        %v5070 = vadd.f32 %v4781, %v5069
        %v5071 = vpop.f32.mrf.mxu0
        %5072 = vmatprep.mubr.bf16.mxu0 %v4271
        %5073 = vmatmul.mubr.bf16.gmra.mxu0 %v4270
        %v5074 = vpop.f32.mrf.mxu0
        %v5075 = vadd.f32 %v4786, %v5074
        %v5076 = vpop.f32.mrf.mxu0
        %v5077 = vpop.f32.mrf.mxu0
        %v5078 = vadd.f32 %v4789, %v5077
        %v5079 = vpop.f32.mrf.mxu0
        %5080 = vmatprep.mubr.bf16.mxu0 %v4275
        %5081 = vmatmul.mubr.bf16.gmra.mxu0 %v4274
        %v5082 = vpop.f32.mrf.mxu0
        %v5083 = vadd.f32 %v4794, %v5082
        %v5084 = vpop.f32.mrf.mxu0
        %v5085 = vpop.f32.mrf.mxu0
        %v5086 = vadd.f32 %v4797, %v5085
        %v5087 = vpop.f32.mrf.mxu0
        %5088 = vmatprep.mubr.bf16.mxu0 %v4279
        %5089 = vmatmul.mubr.bf16.gmra.mxu0 %v4278
        %v5090 = vpop.f32.mrf.mxu0
        %v5091 = vadd.f32 %v4802, %v5090
        %v5092 = vpop.f32.mrf.mxu0
        %v5093 = vpop.f32.mrf.mxu0
        %v5094 = vadd.f32 %v4805, %v5093
        %v5095 = vpop.f32.mrf.mxu0
        %5096 = vmatprep.mubr.bf16.mxu0 %v4283
        %5097 = vmatmul.mubr.bf16.gmra.mxu0 %v4282
        %v5098 = vpop.f32.mrf.mxu0
        %v5099 = vadd.f32 %v4810, %v5098
        %v5100 = vpop.f32.mrf.mxu0
        %v5101 = vpop.f32.mrf.mxu0
        %v5102 = vadd.f32 %v4813, %v5101
        %v5103 = vpop.f32.mrf.mxu0
        %5104 = vmatprep.mubr.bf16.mxu0 %v4287
        %5105 = vmatmul.mubr.bf16.gmra.mxu0 %v4286
        %v5106 = vpop.f32.mrf.mxu0
        %v5107 = vadd.f32 %v4818, %v5106
        %v5108 = vpop.f32.mrf.mxu0
        %v5109 = vpop.f32.mrf.mxu0
        %v5110 = vadd.f32 %v4821, %v5109
        %v5111 = vpop.f32.mrf.mxu0
        %5112 = vmatprep.mubr.bf16.mxu0 %v4291
        %5113 = vmatmul.mubr.bf16.gmra.mxu0 %v4290
        %v5114 = vpop.f32.mrf.mxu0
        %v5115 = vadd.f32 %v4826, %v5114
        %v5116 = vpop.f32.mrf.mxu0
        %v5117 = vpop.f32.mrf.mxu0
        %v5118 = vadd.f32 %v4829, %v5117
        %v5119 = vpop.f32.mrf.mxu0
        %5120 = vmatprep.mubr.bf16.mxu0 %v4295
        %5121 = vmatmul.mubr.bf16.gmra.mxu0 %v4294
        %v5122 = vpop.f32.mrf.mxu0
        %v5123 = vadd.f32 %v4834, %v5122
        %v5124 = vpop.f32.mrf.mxu0
        %v5125 = vpop.f32.mrf.mxu0
        %v5126 = vadd.f32 %v4837, %v5125
        %v5127 = vpop.f32.mrf.mxu0
        %5128 = vmatprep.mubr.bf16.mxu0 %v4299
        %5129 = vmatmul.mubr.bf16.gmra.mxu0 %v4298
        %v5130 = vpop.f32.mrf.mxu0
        %v5131 = vadd.f32 %v4842, %v5130
        %v5132 = vpop.f32.mrf.mxu0
        %v5133 = vpop.f32.mrf.mxu0
        %v5134 = vadd.f32 %v4845, %v5133
        %v5135 = vpop.f32.mrf.mxu0
        %5136 = vmatprep.mubr.bf16.mxu0 %v4303
        %5137 = vmatmul.mubr.bf16.gmra.mxu0 %v4302
        %v5138 = vpop.f32.mrf.mxu0
        %v5139 = vadd.f32 %v4850, %v5138
        %v5140 = vpop.f32.mrf.mxu0
        %v5141 = vpop.f32.mrf.mxu0
        %v5142 = vadd.f32 %v4853, %v5141
        %v5143 = vpop.f32.mrf.mxu0
        %5144 = vdwg.mxu0
        %v5145 = vadd.f32 %v393, %v4891
        %v5146 = vadd.f32 %v394, %v4894
        %v5147 = vadd.f32 %v395, %v4899
        %v5148 = vadd.f32 %v396, %v4902
        %v5149 = vadd.f32 %v397, %v4907
        %v5150 = vadd.f32 %v398, %v4910
        %v5151 = vadd.f32 %v399, %v4915
        %v5152 = vadd.f32 %v400, %v4918
        %v5153 = vadd.f32 %v401, %v4923
        %v5154 = vadd.f32 %v402, %v4926
        %v5155 = vadd.f32 %v403, %v4931
        %v5156 = vadd.f32 %v404, %v4934
        %v5157 = vadd.f32 %v405, %v4939
        %v5158 = vadd.f32 %v406, %v4942
        %v5159 = vadd.f32 %v407, %v4947
        %v5160 = vadd.f32 %v408, %v4950
        %v5161 = vadd.f32 %v409, %v4955
        %v5162 = vadd.f32 %v410, %v4958
        %v5163 = vadd.f32 %v411, %v4963
        %v5164 = vadd.f32 %v412, %v4966
        %v5165 = vadd.f32 %v413, %v4971
        %v5166 = vadd.f32 %v414, %v4974
        %v5167 = vadd.f32 %v415, %v4979
        %v5168 = vadd.f32 %v416, %v4982
        %v5169 = vadd.f32 %v417, %v4987
        %v5170 = vadd.f32 %v418, %v4990
        %v5171 = vadd.f32 %v419, %v4995
        %v5172 = vadd.f32 %v420, %v4998
        %v5173 = vadd.f32 %v421, %v5003
        %v5174 = vadd.f32 %v422, %v5006
        %v5175 = vadd.f32 %v423, %v5011
        %v5176 = vadd.f32 %v424, %v5014
        %v5177 = vadd.f32 %v425, %v5019
        %v5178 = vadd.f32 %v426, %v5022
        %v5179 = vadd.f32 %v427, %v5027
        %v5180 = vadd.f32 %v428, %v5030
        %v5181 = vadd.f32 %v429, %v5035
        %v5182 = vadd.f32 %v430, %v5038
        %v5183 = vadd.f32 %v431, %v5043
        %v5184 = vadd.f32 %v432, %v5046
        %v5185 = vadd.f32 %v433, %v5051
        %v5186 = vadd.f32 %v434, %v5054
        %v5187 = vadd.f32 %v435, %v5059
        %v5188 = vadd.f32 %v436, %v5062
        %v5189 = vadd.f32 %v437, %v5067
        %v5190 = vadd.f32 %v438, %v5070
        %v5191 = vadd.f32 %v439, %v5075
        %v5192 = vadd.f32 %v440, %v5078
        %v5193 = vadd.f32 %v441, %v5083
        %v5194 = vadd.f32 %v442, %v5086
        %v5195 = vadd.f32 %v443, %v5091
        %v5196 = vadd.f32 %v444, %v5094
        %v5197 = vadd.f32 %v445, %v5099
        %v5198 = vadd.f32 %v446, %v5102
        %v5199 = vadd.f32 %v447, %v5107
        %v5200 = vadd.f32 %v448, %v5110
        %v5201 = vadd.f32 %v449, %v5115
        %v5202 = vadd.f32 %v450, %v5118
        %v5203 = vadd.f32 %v451, %v5123
        %v5204 = vadd.f32 %v452, %v5126
        %v5205 = vadd.f32 %v453, %v5131
        %v5206 = vadd.f32 %v454, %v5134
        %v5207 = vadd.f32 %v455, %v5139
        %v5208 = vadd.f32 %v456, %v5142
        %v5209 = vpack.c.bf16 %v5146, %v5145
        %v5210 = vpack.c.bf16 %v5148, %v5147
        %v5211 = vpack.c.bf16 %v5150, %v5149
        %v5212 = vpack.c.bf16 %v5152, %v5151
        %v5213 = vpack.c.bf16 %v5154, %v5153
        %v5214 = vpack.c.bf16 %v5156, %v5155
        %v5215 = vpack.c.bf16 %v5158, %v5157
        %v5216 = vpack.c.bf16 %v5160, %v5159
        %v5217 = vpack.c.bf16 %v5162, %v5161
        %v5218 = vpack.c.bf16 %v5164, %v5163
        %v5219 = vpack.c.bf16 %v5166, %v5165
        %v5220 = vpack.c.bf16 %v5168, %v5167
        %v5221 = vpack.c.bf16 %v5170, %v5169
        %v5222 = vpack.c.bf16 %v5172, %v5171
        %v5223 = vpack.c.bf16 %v5174, %v5173
        %v5224 = vpack.c.bf16 %v5176, %v5175
        %v5225 = vpack.c.bf16 %v5178, %v5177
        %v5226 = vpack.c.bf16 %v5180, %v5179
        %v5227 = vpack.c.bf16 %v5182, %v5181
        %v5228 = vpack.c.bf16 %v5184, %v5183
        %v5229 = vpack.c.bf16 %v5186, %v5185
        %v5230 = vpack.c.bf16 %v5188, %v5187
        %v5231 = vpack.c.bf16 %v5190, %v5189
        %v5232 = vpack.c.bf16 %v5192, %v5191
        %v5233 = vpack.c.bf16 %v5194, %v5193
        %v5234 = vpack.c.bf16 %v5196, %v5195
        %v5235 = vpack.c.bf16 %v5198, %v5197
        %v5236 = vpack.c.bf16 %v5200, %v5199
        %v5237 = vpack.c.bf16 %v5202, %v5201
        %v5238 = vpack.c.bf16 %v5204, %v5203
        %v5239 = vpack.c.bf16 %v5206, %v5205
        %v5240 = vpack.c.bf16 %v5208, %v5207
        %v5273 = vunpack.c.l.b16 %v5209
        %v5274 = vunpack.c.h.b16 %v5209
        %v5275 = vunpack.c.l.b16 %v5210
        %v5276 = vunpack.c.h.b16 %v5210
        %v5277 = vunpack.c.l.b16 %v5211
        %v5278 = vunpack.c.h.b16 %v5211
        %v5279 = vunpack.c.l.b16 %v5212
        %v5280 = vunpack.c.h.b16 %v5212
        %v5281 = vunpack.c.l.b16 %v5213
        %v5282 = vunpack.c.h.b16 %v5213
        %v5283 = vunpack.c.l.b16 %v5214
        %v5284 = vunpack.c.h.b16 %v5214
        %v5285 = vunpack.c.l.b16 %v5215
        %v5286 = vunpack.c.h.b16 %v5215
        %v5287 = vunpack.c.l.b16 %v5216
        %v5288 = vunpack.c.h.b16 %v5216
        %v5289 = vunpack.c.l.b16 %v5217
        %v5290 = vunpack.c.h.b16 %v5217
        %v5291 = vunpack.c.l.b16 %v5218
        %v5292 = vunpack.c.h.b16 %v5218
        %v5293 = vunpack.c.l.b16 %v5219
        %v5294 = vunpack.c.h.b16 %v5219
        %v5295 = vunpack.c.l.b16 %v5220
        %v5296 = vunpack.c.h.b16 %v5220
        %v5297 = vunpack.c.l.b16 %v5221
        %v5298 = vunpack.c.h.b16 %v5221
        %v5299 = vunpack.c.l.b16 %v5222
        %v5300 = vunpack.c.h.b16 %v5222
        %v5301 = vunpack.c.l.b16 %v5223
        %v5302 = vunpack.c.h.b16 %v5223
        %v5303 = vunpack.c.l.b16 %v5224
        %v5304 = vunpack.c.h.b16 %v5224
        %v5305 = vunpack.c.l.b16 %v5225
        %v5306 = vunpack.c.h.b16 %v5225
        %v5307 = vunpack.c.l.b16 %v5226
        %v5308 = vunpack.c.h.b16 %v5226
        %v5309 = vunpack.c.l.b16 %v5227
        %v5310 = vunpack.c.h.b16 %v5227
        %v5311 = vunpack.c.l.b16 %v5228
        %v5312 = vunpack.c.h.b16 %v5228
        %v5313 = vunpack.c.l.b16 %v5229
        %v5314 = vunpack.c.h.b16 %v5229
        %v5315 = vunpack.c.l.b16 %v5230
        %v5316 = vunpack.c.h.b16 %v5230
        %v5317 = vunpack.c.l.b16 %v5231
        %v5318 = vunpack.c.h.b16 %v5231
        %v5319 = vunpack.c.l.b16 %v5232
        %v5320 = vunpack.c.h.b16 %v5232
        %v5321 = vunpack.c.l.b16 %v5233
        %v5322 = vunpack.c.h.b16 %v5233
        %v5323 = vunpack.c.l.b16 %v5234
        %v5324 = vunpack.c.h.b16 %v5234
        %v5325 = vunpack.c.l.b16 %v5235
        %v5326 = vunpack.c.h.b16 %v5235
        %v5327 = vunpack.c.l.b16 %v5236
        %v5328 = vunpack.c.h.b16 %v5236
        %v5329 = vunpack.c.l.b16 %v5237
        %v5330 = vunpack.c.h.b16 %v5237
        %v5331 = vunpack.c.l.b16 %v5238
        %v5332 = vunpack.c.h.b16 %v5238
        %v5333 = vunpack.c.l.b16 %v5239
        %v5334 = vunpack.c.h.b16 %v5239
        %v5335 = vunpack.c.l.b16 %v5240
        %v5336 = vunpack.c.h.b16 %v5240
        %v5337 = vpack.c.b16 %v5273, %v5273
        %v5338 = vpack.c.b16 %v5274, %v5274
        %v5339 = vpack.c.b16 %v5275, %v5275
        %v5340 = vpack.c.b16 %v5276, %v5276
        %v5341 = vpack.c.b16 %v5277, %v5277
        %v5342 = vpack.c.b16 %v5278, %v5278
        %v5343 = vpack.c.b16 %v5279, %v5279
        %v5344 = vpack.c.b16 %v5280, %v5280
        %v5345 = vpack.c.b16 %v5281, %v5281
        %v5346 = vpack.c.b16 %v5282, %v5282
        %v5347 = vpack.c.b16 %v5283, %v5283
        %v5348 = vpack.c.b16 %v5284, %v5284
        %v5349 = vpack.c.b16 %v5285, %v5285
        %v5350 = vpack.c.b16 %v5286, %v5286
        %v5351 = vpack.c.b16 %v5287, %v5287
        %v5352 = vpack.c.b16 %v5288, %v5288
        %v5353 = vpack.c.b16 %v5289, %v5289
        %v5354 = vpack.c.b16 %v5290, %v5290
        %v5355 = vpack.c.b16 %v5291, %v5291
        %v5356 = vpack.c.b16 %v5292, %v5292
        %v5357 = vpack.c.b16 %v5293, %v5293
        %v5358 = vpack.c.b16 %v5294, %v5294
        %v5359 = vpack.c.b16 %v5295, %v5295
        %v5360 = vpack.c.b16 %v5296, %v5296
        %v5361 = vpack.c.b16 %v5297, %v5297
        %v5362 = vpack.c.b16 %v5298, %v5298
        %v5363 = vpack.c.b16 %v5299, %v5299
        %v5364 = vpack.c.b16 %v5300, %v5300
        %v5365 = vpack.c.b16 %v5301, %v5301
        %v5366 = vpack.c.b16 %v5302, %v5302
        %v5367 = vpack.c.b16 %v5303, %v5303
        %v5368 = vpack.c.b16 %v5304, %v5304
        %v5369 = vpack.c.b16 %v5305, %v5305
        %v5370 = vpack.c.b16 %v5306, %v5306
        %v5371 = vpack.c.b16 %v5307, %v5307
        %v5372 = vpack.c.b16 %v5308, %v5308
        %v5373 = vpack.c.b16 %v5309, %v5309
        %v5374 = vpack.c.b16 %v5310, %v5310
        %v5375 = vpack.c.b16 %v5311, %v5311
        %v5376 = vpack.c.b16 %v5312, %v5312
        %v5377 = vpack.c.b16 %v5313, %v5313
        %v5378 = vpack.c.b16 %v5314, %v5314
        %v5379 = vpack.c.b16 %v5315, %v5315
        %v5380 = vpack.c.b16 %v5316, %v5316
        %v5381 = vpack.c.b16 %v5317, %v5317
        %v5382 = vpack.c.b16 %v5318, %v5318
        %v5383 = vpack.c.b16 %v5319, %v5319
        %v5384 = vpack.c.b16 %v5320, %v5320
        %v5385 = vpack.c.b16 %v5321, %v5321
        %v5386 = vpack.c.b16 %v5322, %v5322
        %v5387 = vpack.c.b16 %v5323, %v5323
        %v5388 = vpack.c.b16 %v5324, %v5324
        %v5389 = vpack.c.b16 %v5325, %v5325
        %v5390 = vpack.c.b16 %v5326, %v5326
        %v5391 = vpack.c.b16 %v5327, %v5327
        %v5392 = vpack.c.b16 %v5328, %v5328
        %v5393 = vpack.c.b16 %v5329, %v5329
        %v5394 = vpack.c.b16 %v5330, %v5330
        %v5395 = vpack.c.b16 %v5331, %v5331
        %v5396 = vpack.c.b16 %v5332, %v5332
        %v5397 = vpack.c.b16 %v5333, %v5333
        %v5398 = vpack.c.b16 %v5334, %v5334
        %v5399 = vpack.c.b16 %v5335, %v5335
        %v5400 = vpack.c.b16 %v5336, %v5336
        %5465 = vst [vmem:[%s325] sm:$0xf] %v5337
        %5466 = vst [vmem:[%s325 + $0x4] sm:$0xf] %v5338
        %5467 = vst [vmem:[%s325 + $0x8] sm:$0xf] %v5339
        %5468 = vst [vmem:[%s325 + $0xc] sm:$0xf] %v5340
        %5469 = vst [vmem:[%s325 + $0x10] sm:$0xf] %v5341
        %5470 = vst [vmem:[%s325 + $0x14] sm:$0xf] %v5342
        %5471 = vst [vmem:[%s325 + $0x18] sm:$0xf] %v5343
        %5472 = vst [vmem:[%s325 + $0x1c] sm:$0xf] %v5344
        %5473 = vst [vmem:[%s325 + $0x20] sm:$0xf] %v5345
        %5474 = vst [vmem:[%s325 + $0x24] sm:$0xf] %v5346
        %5475 = vst [vmem:[%s325 + $0x28] sm:$0xf] %v5347
        %5476 = vst [vmem:[%s325 + $0x2c] sm:$0xf] %v5348
        %5477 = vst [vmem:[%s325 + $0x30] sm:$0xf] %v5349
        %5478 = vst [vmem:[%s325 + $0x34] sm:$0xf] %v5350
        %5479 = vst [vmem:[%s325 + $0x38] sm:$0xf] %v5351
        %5480 = vst [vmem:[%s325 + $0x3c] sm:$0xf] %v5352
        %5481 = vst [vmem:[%s325 + $0x40] sm:$0xf] %v5353
        %5482 = vst [vmem:[%s325 + $0x44] sm:$0xf] %v5354
        %5483 = vst [vmem:[%s325 + $0x48] sm:$0xf] %v5355
        %5484 = vst [vmem:[%s325 + $0x4c] sm:$0xf] %v5356
        %5485 = vst [vmem:[%s325 + $0x50] sm:$0xf] %v5357
        %5486 = vst [vmem:[%s325 + $0x54] sm:$0xf] %v5358
        %5487 = vst [vmem:[%s325 + $0x58] sm:$0xf] %v5359
        %5488 = vst [vmem:[%s325 + $0x5c] sm:$0xf] %v5360
        %5489 = vst [vmem:[%s325 + $0x60] sm:$0xf] %v5361
        %5490 = vst [vmem:[%s325 + $0x64] sm:$0xf] %v5362
        %5491 = vst [vmem:[%s325 + $0x68] sm:$0xf] %v5363
        %5492 = vst [vmem:[%s325 + $0x6c] sm:$0xf] %v5364
        %5493 = vst [vmem:[%s325 + $0x70] sm:$0xf] %v5365
        %5494 = vst [vmem:[%s325 + $0x74] sm:$0xf] %v5366
        %5495 = vst [vmem:[%s325 + $0x78] sm:$0xf] %v5367
        %5496 = vst [vmem:[%s325 + $0x7c] sm:$0xf] %v5368
        %5497 = vst [vmem:[%s325 + $0x80] sm:$0xf] %v5369
        %5498 = vst [vmem:[%s325 + $0x84] sm:$0xf] %v5370
        %5499 = vst [vmem:[%s325 + $0x88] sm:$0xf] %v5371
        %5500 = vst [vmem:[%s325 + $0x8c] sm:$0xf] %v5372
        %5501 = vst [vmem:[%s325 + $0x90] sm:$0xf] %v5373
        %5502 = vst [vmem:[%s325 + $0x94] sm:$0xf] %v5374
        %5503 = vst [vmem:[%s325 + $0x98] sm:$0xf] %v5375
        %5504 = vst [vmem:[%s325 + $0x9c] sm:$0xf] %v5376
        %5505 = vst [vmem:[%s325 + $0xa0] sm:$0xf] %v5377
        %5506 = vst [vmem:[%s325 + $0xa4] sm:$0xf] %v5378
        %5507 = vst [vmem:[%s325 + $0xa8] sm:$0xf] %v5379
        %5508 = vst [vmem:[%s325 + $0xac] sm:$0xf] %v5380
        %5509 = vst [vmem:[%s325 + $0xb0] sm:$0xf] %v5381
        %5510 = vst [vmem:[%s325 + $0xb4] sm:$0xf] %v5382
        %5511 = vst [vmem:[%s325 + $0xb8] sm:$0xf] %v5383
        %5512 = vst [vmem:[%s325 + $0xbc] sm:$0xf] %v5384
        %5513 = vst [vmem:[%s325 + $0xc0] sm:$0xf] %v5385
        %5514 = vst [vmem:[%s325 + $0xc4] sm:$0xf] %v5386
        %5515 = vst [vmem:[%s325 + $0xc8] sm:$0xf] %v5387
        %5516 = vst [vmem:[%s325 + $0xcc] sm:$0xf] %v5388
        %5517 = vst [vmem:[%s325 + $0xd0] sm:$0xf] %v5389
        %5518 = vst [vmem:[%s325 + $0xd4] sm:$0xf] %v5390
        %5519 = vst [vmem:[%s325 + $0xd8] sm:$0xf] %v5391
        %5520 = vst [vmem:[%s325 + $0xdc] sm:$0xf] %v5392
        %5521 = vst [vmem:[%s325 + $0xe0] sm:$0xf] %v5393
        %5522 = vst [vmem:[%s325 + $0xe4] sm:$0xf] %v5394
        %5523 = vst [vmem:[%s325 + $0xe8] sm:$0xf] %v5395
        %5524 = vst [vmem:[%s325 + $0xec] sm:$0xf] %v5396
        %5525 = vst [vmem:[%s325 + $0xf0] sm:$0xf] %v5397
        %5526 = vst [vmem:[%s325 + $0xf4] sm:$0xf] %v5398
        %5527 = vst [vmem:[%s325 + $0xf8] sm:$0xf] %v5399
        %5528 = vst [vmem:[%s325 + $0xfc] sm:$0xf] %v5400
        %s5529 = sand.u32 %s185, 1
        %s5530 = scalar_lea.sflag [#allocation4], %s5529
        %s5531 = sand.u32 %s185, 1
        %s5532 = smul.addr %s5531, 256
        %s5533 = scalar_lea.vmem [#allocation8], %s5532
        // Predicated region
        $region61: #{tpu_custom_call.1} parent=47 // pred_check
          %p5534 = pneg %p195
        $region62: #{tpu_custom_call.1} parent=47 // pred_check_branch
          %5536 = sbr.rel (%p5534) target = $region64
        $region63: #{tpu_custom_call.1} parent=47 // pred_region
          %s5537 = smul.u32 64, %s25
          %s5539 = ssub.s32 4096, 4096
          %5540 = vsyncadd %s5530, %s5539
          %s5541 = smul.addr %s5537, 64
          %s5542 = scalar_lea.hbm %s7, %s5541
          %s5543 = sshll.u32 %s5533, 4
          %s5544 = int_to_ptr.vmem [resolvable:$true] %s5543
          %5549 = dma.vmem_to_hbm [thread:$0]  %s5544, 4096, %s5542, %s5530, 64, 64, 4
        $region64: #{tpu_custom_call.1} parent=47 // pred_fallthru
          _
      $region48: #{tpu_custom_call.1} parent=5 // pred_fallthru
        _
      %p5550 = scmp.le.s32.totalorder 2, %s20
      // Predicated region
      $region65: #{tpu_custom_call.1} parent=5 // pred_check
        %p5551 = pneg %p5550
      $region66: #{tpu_custom_call.1} parent=5 // pred_check_branch
        %5553 = sbr.rel (%p5551) target = $region68
      $region67: #{tpu_custom_call.1} parent=5 // pred_region
        %s5554 = ssub.s32 %s20, 2
        // Predicated region
        $region69: #{tpu_custom_call.1} parent=67 // pred_check
          %p5555 = pneg %p201
        $region70: #{tpu_custom_call.1} parent=67 // pred_check_branch
          %5557 = sbr.rel (%p5555) target = $region72
        $region71: #{tpu_custom_call.1} parent=67 // pred_region
          %s5558 = sand.u32 %s186, 1
          %s5559 = scalar_lea.sflag [#allocation4], %s5558
          %s5560 = sand.u32 %s186, 1
          %s5561 = smul.addr %s5560, 256
          %s5562 = scalar_lea.vmem [#allocation8], %s5561
          %5563 = dma.done %s5559, 4096
        $region72: #{tpu_custom_call.1} parent=67 // pred_fallthru
          _
      $region68: #{tpu_custom_call.1} parent=5 // pred_fallthru
        _
    $region6: #{tpu_custom_call.1} parent=1 // loop_footer
      %s24 = sadd.s32 1, %s20
    $region7: #{tpu_custom_call.1} parent=1 // loop_footer_branch
      %19 = sbr.rel target = $region3
    $region8: #{tpu_custom_call.1} parent=1 // loop_exit
      _
    %5564 = vsyncpa [#allocation3], 1
    %s5565 = scalar_lea.sflag [#allocation3], 1
    %5566 = vsyncpa %s5565, 1
    %5567 = vsyncpa [#allocation6], 1
    %5568 = vsyncpa [#allocation4], 1
    %s5569 = scalar_lea.sflag [#allocation4], 1
    %5570 = vsyncpa %s5569, 1

</llo_original>
